<compile_context>
chip_gen: v6e
topology: v6e:2x2x1
jax: 0.10.0
libtpu: 0.0.40
codegen_flags: <defaults>
</compile_context>

<pallas_src>
import functools

import jax
import jax.numpy as jnp
from jax import lax
from jax.experimental import pallas as pl
from jax.experimental.pallas import tpu as pltpu


def _round_up(n, m):
    return ((n + m - 1) // m) * m


# ----------------------------------------------------------------------------
# Pallas kernel:  O = LHS @ RHS + bias (+GELU); bf16 MXU inputs, f32 epilogue
# ----------------------------------------------------------------------------
def _gemm_bias_act_kernel(lhs_ref, rhs_ref, b_ref, o_ref, *, apply_gelu):
    acc = jnp.dot(lhs_ref[...].astype(jnp.bfloat16),
                  rhs_ref[...].astype(jnp.bfloat16),
                  preferred_element_type=jnp.float32)
    acc = acc + b_ref[...].astype(jnp.float32)
    if apply_gelu:
        # TODO(synk): PyTorch nn.GELU() defaults to the exact erf form; the
        # tanh approximation is used for guaranteed Mosaic (EUP) lowering.
        acc = jax.nn.gelu(acc, approximate=True)
    o_ref[...] = acc.astype(o_ref.dtype)


def gemm_bias_act(lhs, rhs, bias, apply_gelu):
    """Pallas GEMM: lhs(R,K) @ rhs(K,N) + bias (+GELU) -> f32 (R,N).

    N (pixels / features) is the large, lane-dense axis and is tiled over the
    grid; R and K stay whole (weights VMEM-resident across the grid).
    bias is (R, 1) (per-row / conv channel) or (1, N) (per-column / linear).
    """
    R, K = lhs.shape
    K2, N = rhs.shape
    assert K == K2, (lhs.shape, rhs.shape)

    # Lane tile: large (amortize ~0.35us per grid step) but keep >= 2 grid
    # steps when the problem allows so both v7x TensorCores get work.
    npad = _round_up(N, 128)
    if npad > 128:
        tn = max(128, min(512, (npad // 2 // 128) * 128))
    else:
        tn = 128
    npad = _round_up(N, tn)
    if npad != N:
        rhs = jnp.pad(rhs, ((0, 0), (0, npad - N)))

    row_bias = (bias.shape[0] == R and bias.shape[1] == 1)
    if row_bias:
        bias_spec = pl.BlockSpec((R, 1), lambda j: (0, 0))
    else:
        assert bias.shape == (1, N), bias.shape
        if npad != N:
            bias = jnp.pad(bias, ((0, 0), (0, npad - N)))
        bias_spec = pl.BlockSpec((1, tn), lambda j: (0, j))

    out = pl.pallas_call(
        functools.partial(_gemm_bias_act_kernel, apply_gelu=apply_gelu),
        out_shape=jax.ShapeDtypeStruct((R, npad), jnp.float32),
        grid=(npad // tn,),
        in_specs=[
            pl.BlockSpec((R, K), lambda j: (0, 0)),    # weights, VMEM-resident
            pl.BlockSpec((K, tn), lambda j: (0, j)),   # lane-tiled activations
            bias_spec,
        ],
        out_specs=pl.BlockSpec((R, tn), lambda j: (0, j)),
        compiler_params=pltpu.CompilerParams(
            dimension_semantics=("parallel",),
            vmem_limit_bytes=32 * 1024 * 1024,   # explicit budget; <2 MiB used
        ),
    )(lhs, rhs, bias)
    if npad != N:
        out = out[:, :N]
    return out


# ----------------------------------------------------------------------------
# Layer wrappers (channel-first activations: x is (C, B, H, W))
# ----------------------------------------------------------------------------
def conv3x3_same_cf(x_cf, w_mat, b_col, apply_gelu):
    """nn.Conv2d(Cin, Cout, 3, padding=1).  w_mat: (Cout, 9*Cin) pre-packed."""
    C, B, H, W = x_cf.shape
    Cout = w_mat.shape[0]
    assert w_mat.shape[1] == 9 * C
    xp = jnp.pad(x_cf.astype(jnp.bfloat16), ((0, 0), (0, 0), (1, 1), (1, 1)))
    # TODO(synk): patch gather is built host-side in bf16 rather than fused
    # into the kernel via halo BlockSpecs; cols stay tiny at these widths.
    cols = jnp.concatenate(
        [xp[:, :, ky:ky + H, kx:kx + W].reshape(C, B * H * W)
         for ky in range(3) for kx in range(3)], axis=0)        # (9C, B*H*W)
    y = gemm_bias_act(w_mat, cols, b_col, apply_gelu)           # (Cout, B*H*W)
    return y.reshape(Cout, B, H, W)


def conv_transpose3x3_s2_cf(x_cf, w_big, b_big, apply_gelu):
    """nn.ConvTranspose2d(k=3, stride=2, padding=1, output_padding=1).

    Fused 4-phase (sub-pixel) decomposition: one GEMM over 4 shifted input
    slabs produces all four output parities at once; the structural zeros of
    the zero-dilated formulation are never touched.
    """
    C, B, H, W = x_cf.shape
    Cout = w_big.shape[0] // 4
    assert w_big.shape[1] == 4 * C
    xp = jnp.pad(x_cf.astype(jnp.bfloat16), ((0, 0), (0, 0), (0, 1), (0, 1)))
    cols = jnp.concatenate(
        [xp[:, :, dy:dy + H, dx:dx + W].reshape(C, B * H * W)
         for dy in (0, 1) for dx in (0, 1)], axis=0)            # (4C, B*H*W)
    y = gemm_bias_act(w_big, cols, b_big, apply_gelu)           # (4*Cout, BHW)
    # Interleave the four parities: out[co, b, 2i+py, 2j+px].
    y = y.reshape(2, 2, Cout, B, H, W)          # (py, px, co, b, i, j)
    y = y.transpose(2, 3, 4, 0, 5, 1)           # (co, b, i, py, j, px)
    return y.reshape(Cout, B, 2 * H, 2 * W)


# ----------------------------------------------------------------------------
# Parameter init (PyTorch layout) + one-time pre-packing for the kernels
# ----------------------------------------------------------------------------
def init_decoder_params(key, n_z, c_hid, n_channel, p, t):
    p8, t8 = p // 8, t // 8
    lin_out = 2 * p8 * t8 * c_hid
    ks = jax.random.split(key, 12)

    def w(k, shape, fan_in):
        return jax.random.normal(k, shape, jnp.float32) / jnp.sqrt(float(fan_in))

    return {
        "lin_w": w(ks[0], (lin_out, n_z), n_z),                   # Linear (out,in)
        "lin_b": w(ks[1], (lin_out,), n_z),
        "tc1_w": w(ks[2], (2 * c_hid, 2 * c_hid, 3, 3), 2 * c_hid * 9),  # (Cin,Cout,3,3)
        "tc1_b": w(ks[3], (2 * c_hid,), 2 * c_hid * 9),
        "c1_w": w(ks[4], (2 * c_hid, 2 * c_hid, 3, 3), 2 * c_hid * 9),   # (Cout,Cin,3,3)
        "c1_b": w(ks[5], (2 * c_hid,), 2 * c_hid * 9),
        "tc2_w": w(ks[6], (2 * c_hid, c_hid, 3, 3), 2 * c_hid * 9),
        "tc2_b": w(ks[7], (c_hid,), 2 * c_hid * 9),
        "c2_w": w(ks[8], (c_hid, c_hid, 3, 3), c_hid * 9),
        "c2_b": w(ks[9], (c_hid,), c_hid * 9),
        "tc3_w": w(ks[10], (c_hid, n_channel, 3, 3), c_hid * 9),
        "tc3_b": w(ks[11], (n_channel,), c_hid * 9),
    }


def _pack_conv_weight(w_oihw):
    """(Cout, Cin, 3, 3) -> (Cout, 9*Cin), K ordered (ky, kx, cin)."""
    cout, cin = w_oihw.shape[0], w_oihw.shape[1]
    return jnp.transpose(w_oihw, (0, 2, 3, 1)).reshape(cout, 9 * cin)


def _pack_conv_transpose_weight(w_iohw):
    """torch ConvTranspose2d weight (Cin, Cout, 3, 3) -> (4*Cout, 4*Cin)
    block matrix for the fused 4-phase GEMM.

    Row blocks = output parities [(ey,ex), (ey,ox), (oy,ex), (oy,ox)],
    column blocks = input slabs  [x(i,j), x(i,j+1), x(i+1,j), x(i+1,j+1)].
    Derived from out[oy] += x[(oy+1-ky)/2] * W[ci, co, ky, kx] (s=2, p=1, op=1).
    """
    cin, cout = w_iohw.shape[0], w_iohw.shape[1]

    def m(a, b):                                   # (Cout, Cin)
        return w_iohw[:, :, a, b].T

    z = jnp.zeros((cout, cin), w_iohw.dtype)
    rows = [
        [m(1, 1), z,       z,       z      ],     # (even y, even x)
        [m(1, 2), m(1, 0), z,       z      ],     # (even y, odd  x)
        [m(2, 1), z,       m(0, 1), z      ],     # (odd  y, even x)
        [m(2, 2), m(2, 0), m(0, 2), m(0, 0)],     # (odd  y, odd  x)
    ]
    return jnp.concatenate([jnp.concatenate(r, axis=1) for r in rows], axis=0)


def pack_decoder_params(raw):
    """One-time repack of PyTorch-layout params into kernel-ready bf16 matrices."""
    bf = jnp.bfloat16
    f32 = jnp.float32
    return {
        "lin_wT": raw["lin_w"].T.astype(bf),                         # (n_z, lin_out)
        "lin_b": raw["lin_b"].reshape(1, -1).astype(f32),
        "tc1_w": _pack_conv_transpose_weight(raw["tc1_w"]).astype(bf),
        "tc1_b": jnp.tile(raw["tc1_b"], 4).reshape(-1, 1).astype(f32),
        "c1_w": _pack_conv_weight(raw["c1_w"]).astype(bf),
        "c1_b": raw["c1_b"].reshape(-1, 1).astype(f32),
        "tc2_w": _pack_conv_transpose_weight(raw["tc2_w"]).astype(bf),
        "tc2_b": jnp.tile(raw["tc2_b"], 4).reshape(-1, 1).astype(f32),
        "c2_w": _pack_conv_weight(raw["c2_w"]).astype(bf),
        "c2_b": raw["c2_b"].reshape(-1, 1).astype(f32),
        "tc3_w": _pack_conv_transpose_weight(raw["tc3_w"]).astype(bf),
        "tc3_b": jnp.tile(raw["tc3_b"], 4).reshape(-1, 1).astype(f32),
    }


# ----------------------------------------------------------------------------
# Decoder forward (Pallas) and an independent lax.conv reference
# ----------------------------------------------------------------------------
def decoder_forward(packed, x, *, c_hid, p, t):
    B = x.shape[0]
    p8, t8 = p // 8, t // 8
    # Linear + GELU: lanes = lin_out features (lane-dense orientation).
    h = gemm_bias_act(x, packed["lin_wT"], packed["lin_b"], True)   # (B, lin_out)
    # torch: reshape(B, 2*c_hid, p/8, t/8) NCHW; carry channel-first (C,B,H,W)
    # through the conv stack so no per-layer layout transposes are needed.
    h = h.reshape(B, 2 * c_hid, p8, t8).transpose(1, 0, 2, 3)
    h = conv_transpose3x3_s2_cf(h, packed["tc1_w"], packed["tc1_b"], True)
    h = conv3x3_same_cf(h, packed["c1_w"], packed["c1_b"], True)
    h = conv_transpose3x3_s2_cf(h, packed["tc2_w"], packed["tc2_b"], True)
    h = conv3x3_same_cf(h, packed["c2_w"], packed["c2_b"], True)
    h = conv_transpose3x3_s2_cf(h, packed["tc3_w"], packed["tc3_b"], False)
    return h.transpose(1, 0, 2, 3)                                  # (B, C, p, t)


def decoder_forward_ref(raw, x, *, c_hid, p, t):
    """Independent reference via lax.conv_general_dilated (same bf16 operand
    quantization, f32 accumulation) - validates the 4-phase / im2col packing."""
    bf = jnp.bfloat16
    gelu = functools.partial(jax.nn.gelu, approximate=True)

    h = jnp.dot(x.astype(bf), raw["lin_w"].T.astype(bf),
                preferred_element_type=jnp.float32) + raw["lin_b"]
    h = gelu(h)
    B = x.shape[0]
    h = h.reshape(B, 2 * c_hid, p // 8, t // 8)                     # NCHW

    def conv(z, w_oihw, b):
        y = lax.conv_general_dilated(
            z.astype(bf), w_oihw.astype(bf), window_strides=(1, 1),
            padding=((1, 1), (1, 1)),
            dimension_numbers=("NCHW", "OIHW", "NCHW"),
            preferred_element_type=jnp.float32)
        return y + b.reshape(1, -1, 1, 1)

    def convT(z, w_iohw, b):
        w = jnp.transpose(w_iohw, (1, 0, 2, 3))[:, :, ::-1, ::-1]
        y = lax.conv_general_dilated(
            z.astype(bf), w.astype(bf), window_strides=(1, 1),
            padding=((1, 2), (1, 2)), lhs_dilation=(2, 2),
            dimension_numbers=("NCHW", "OIHW", "NCHW"),
            preferred_element_type=jnp.float32)
        return y + b.reshape(1, -1, 1, 1)

    h = gelu(convT(h, raw["tc1_w"], raw["tc1_b"]))
    h = gelu(conv(h, raw["c1_w"], raw["c1_b"]))
    h = gelu(convT(h, raw["tc2_w"], raw["tc2_b"]))
    h = gelu(conv(h, raw["c2_w"], raw["c2_b"]))
    return convT(h, raw["tc3_w"], raw["tc3_b"])


if __name__ == "__main__":
    # hp.dim_h = c_hid, hp.n_z, hp.n_channel; (p, t) target spatial size.
    # Small but lane-friendly: every B*H*W in the stack is a multiple of 128,
    # so no padding/slicing happens anywhere in the forward pass.
    B, n_z, c_hid, n_channel, p, t = 8, 16, 8, 3, 32, 32

    key = jax.random.PRNGKey(0)
    kx, kp = jax.random.split(key)
    x = jax.random.normal(kx, (B, n_z), jnp.float32)
    raw = init_decoder_params(kp, n_z, c_hid, n_channel, p, t)
    packed = pack_decoder_params(raw)          # one-time weight repack (bf16)

    fwd = jax.jit(functools.partial(decoder_forward, c_hid=c_hid, p=p, t=t))
    out = jax.block_until_ready(fwd(packed, x))

    assert out.shape == (B, n_channel, p, t), out.shape
    assert out.dtype == jnp.float32

    ref_fn = jax.jit(functools.partial(decoder_forward_ref, c_hid=c_hid, p=p, t=t))
    ref = jax.block_until_ready(ref_fn(raw, x))
    err = float(jnp.max(jnp.abs(out - ref)))
    assert jnp.allclose(out, ref, atol=5e-3, rtol=5e-3), f"mismatch vs reference: {err}"

    print("KERNEL_OK")
</pallas_src>

<mosaic_0001>
module attributes {stable_mosaic.version = 11 : i64} {
  func.func @_gemm_bias_act_kernel(%arg0: i32, %arg1: memref<8x16xf32, #tpu.memory_space<vmem>>, %arg2: memref<16x128xbf16, #tpu.memory_space<vmem>>, %arg3: memref<1x128xf32, #tpu.memory_space<vmem>>, %arg4: memref<8x128xf32, #tpu.memory_space<vmem>>) attributes {dimension_semantics = [#tpu.dimension_semantics<parallel>], iteration_bounds = array<i64: 2>, scalar_prefetch = 0 : i64, scratch_operands = 0 : i64, tpu.core_type = #tpu.core_type<tc>, window_params = [{pipeline_mode = #tpu.pipeline_mode<synchronous>, transform_indices = @transform_0, window_bounds = array<i64: 8, 16>}, {transform_indices = @transform_1, window_bounds = array<i64: 16, 128>}, {transform_indices = @transform_2, window_bounds = array<i64: 1, 128>}, {transform_indices = @transform_3, window_bounds = array<i64: 8, 128>}]} {
    %c0 = arith.constant 0 : index
    %c0_0 = arith.constant 0 : index
    %0 = vector.load %arg1[%c0, %c0_0] : memref<8x16xf32, #tpu.memory_space<vmem>>, vector<8x16xf32>
    %1 = arith.truncf %0 : vector<8x16xf32> to vector<8x16xbf16>
    %c0_1 = arith.constant 0 : index
    %c0_2 = arith.constant 0 : index
    %2 = vector.load %arg2[%c0_1, %c0_2] : memref<16x128xbf16, #tpu.memory_space<vmem>>, vector<16x128xbf16>
    %cst = arith.constant dense<0.000000e+00> : vector<8x128xf32>
    %3 = tpu.matmul %1, %2, %cst {dimension_numbers = #tpu.dot_dimension_numbers<[1], [0], [0], [1], [0, 0, 1, 1], [], []>} : vector<8x16xbf16>, vector<16x128xbf16>, vector<8x128xf32> -> vector<8x128xf32>
    %c0_3 = arith.constant 0 : index
    %c0_4 = arith.constant 0 : index
    %4 = vector.load %arg3[%c0_3, %c0_4] : memref<1x128xf32, #tpu.memory_space<vmem>>, vector<1x128xf32>
    %5 = vector.broadcast %4 : vector<1x128xf32> to vector<8x128xf32>
    %6 = arith.addf %3, %5 : vector<8x128xf32>
    %7 = arith.mulf %6, %6 : vector<8x128xf32>
    %8 = arith.mulf %6, %7 : vector<8x128xf32>
    %cst_5 = arith.constant 4.471500e-02 : f32
    %9 = vector.broadcast %cst_5 : f32 to vector<8x128xf32>
    %10 = arith.mulf %9, %8 : vector<8x128xf32>
    %11 = arith.addf %6, %10 : vector<8x128xf32>
    %cst_6 = arith.constant 0.797884583 : f32
    %12 = vector.broadcast %cst_6 : f32 to vector<8x128xf32>
    %13 = arith.mulf %12, %11 : vector<8x128xf32>
    %14 = math.tanh %13 : vector<8x128xf32>
    %cst_7 = arith.constant 1.000000e+00 : f32
    %15 = vector.broadcast %cst_7 : f32 to vector<8x128xf32>
    %16 = arith.addf %15, %14 : vector<8x128xf32>
    %cst_8 = arith.constant 5.000000e-01 : f32
    %17 = vector.broadcast %cst_8 : f32 to vector<8x128xf32>
    %18 = arith.mulf %17, %16 : vector<8x128xf32>
    %19 = arith.mulf %6, %18 : vector<8x128xf32>
    %c0_9 = arith.constant 0 : index
    %c0_10 = arith.constant 0 : index
    %20 = vector.load %arg4[%c0_9, %c0_10] : memref<8x128xf32, #tpu.memory_space<vmem>>, vector<8x128xf32>
    tpu.vector_store %arg4[%c0_9, %c0_10], %19 {strides = array<i32>} : memref<8x128xf32, #tpu.memory_space<vmem>>, vector<8x128xf32>,
    return
  }
  func.func @transform_0(%arg0: i32) -> (i32, i32) {
    %c0_i32 = arith.constant 0 : i32
    %c0_i32_0 = arith.constant 0 : i32
    %c0_i32_1 = arith.constant 0 : i32
    return %c0_i32, %c0_i32_0 : i32, i32
  }
  func.func @transform_1(%arg0: i32) -> (i32, i32) {
    %c0_i32 = arith.constant 0 : i32
    %c0_i32_0 = arith.constant 0 : i32
    return %c0_i32, %arg0 : i32, i32
  }
  func.func @transform_2(%arg0: i32) -> (i32, i32) {
    %c0_i32 = arith.constant 0 : i32
    %c0_i32_0 = arith.constant 0 : i32
    return %c0_i32, %arg0 : i32, i32
  }
  func.func @transform_3(%arg0: i32) -> (i32, i32) {
    %c0_i32 = arith.constant 0 : i32
    %c0_i32_0 = arith.constant 0 : i32
    return %c0_i32, %arg0 : i32, i32
  }
}

module attributes {stable_mosaic.version = 11 : i64} {
  func.func @_gemm_bias_act_kernel(%arg0: i32, %arg1: memref<64x64xbf16, #tpu.memory_space<vmem>>, %arg2: memref<64x128xbf16, #tpu.memory_space<vmem>>, %arg3: memref<64x1xf32, #tpu.memory_space<vmem>>, %arg4: memref<64x128xf32, #tpu.memory_space<vmem>>) attributes {dimension_semantics = [#tpu.dimension_semantics<parallel>], iteration_bounds = array<i64: 1>, scalar_prefetch = 0 : i64, scratch_operands = 0 : i64, tpu.core_type = #tpu.core_type<tc>, window_params = [{pipeline_mode = #tpu.pipeline_mode<synchronous>, transform_indices = @transform_0, window_bounds = array<i64: 64, 64>}, {transform_indices = @transform_1, window_bounds = array<i64: 64, 128>}, {pipeline_mode = #tpu.pipeline_mode<synchronous>, transform_indices = @transform_2, window_bounds = array<i64: 64, 1>}, {transform_indices = @transform_3, window_bounds = array<i64: 64, 128>}]} {
    %c0 = arith.constant 0 : index
    %c0_0 = arith.constant 0 : index
    %0 = vector.load %arg1[%c0, %c0_0] : memref<64x64xbf16, #tpu.memory_space<vmem>>, vector<64x64xbf16>
    %c0_1 = arith.constant 0 : index
    %c0_2 = arith.constant 0 : index
    %1 = vector.load %arg2[%c0_1, %c0_2] : memref<64x128xbf16, #tpu.memory_space<vmem>>, vector<64x128xbf16>
    %cst = arith.constant dense<0.000000e+00> : vector<64x128xf32>
    %2 = tpu.matmul %0, %1, %cst {dimension_numbers = #tpu.dot_dimension_numbers<[1], [0], [0], [1], [0, 0, 1, 1], [], []>} : vector<64x64xbf16>, vector<64x128xbf16>, vector<64x128xf32> -> vector<64x128xf32>
    %c0_3 = arith.constant 0 : index
    %c0_4 = arith.constant 0 : index
    %3 = vector.load %arg3[%c0_3, %c0_4] : memref<64x1xf32, #tpu.memory_space<vmem>>, vector<64x1xf32>
    %4 = vector.broadcast %3 : vector<64x1xf32> to vector<64x128xf32>
    %5 = arith.addf %2, %4 : vector<64x128xf32>
    %6 = arith.mulf %5, %5 : vector<64x128xf32>
    %7 = arith.mulf %5, %6 : vector<64x128xf32>
    %cst_5 = arith.constant 4.471500e-02 : f32
    %8 = vector.broadcast %cst_5 : f32 to vector<64x128xf32>
    %9 = arith.mulf %8, %7 : vector<64x128xf32>
    %10 = arith.addf %5, %9 : vector<64x128xf32>
    %cst_6 = arith.constant 0.797884583 : f32
    %11 = vector.broadcast %cst_6 : f32 to vector<64x128xf32>
    %12 = arith.mulf %11, %10 : vector<64x128xf32>
    %13 = math.tanh %12 : vector<64x128xf32>
    %cst_7 = arith.constant 1.000000e+00 : f32
    %14 = vector.broadcast %cst_7 : f32 to vector<64x128xf32>
    %15 = arith.addf %14, %13 : vector<64x128xf32>
    %cst_8 = arith.constant 5.000000e-01 : f32
    %16 = vector.broadcast %cst_8 : f32 to vector<64x128xf32>
    %17 = arith.mulf %16, %15 : vector<64x128xf32>
    %18 = arith.mulf %5, %17 : vector<64x128xf32>
    %c0_9 = arith.constant 0 : index
    %c0_10 = arith.constant 0 : index
    %19 = vector.load %arg4[%c0_9, %c0_10] : memref<64x128xf32, #tpu.memory_space<vmem>>, vector<64x128xf32>
    tpu.vector_store %arg4[%c0_9, %c0_10], %18 {strides = array<i32>} : memref<64x128xf32, #tpu.memory_space<vmem>>, vector<64x128xf32>,
    return
  }
  func.func @transform_0(%arg0: i32) -> (i32, i32) {
    %c0_i32 = arith.constant 0 : i32
    %c0_i32_0 = arith.constant 0 : i32
    %c0_i32_1 = arith.constant 0 : i32
    return %c0_i32, %c0_i32_0 : i32, i32
  }
  func.func @transform_1(%arg0: i32) -> (i32, i32) {
    %c0_i32 = arith.constant 0 : i32
    %c0_i32_0 = arith.constant 0 : i32
    return %c0_i32, %arg0 : i32, i32
  }
  func.func @transform_2(%arg0: i32) -> (i32, i32) {
    %c0_i32 = arith.constant 0 : i32
    %c0_i32_0 = arith.constant 0 : i32
    %c0_i32_1 = arith.constant 0 : i32
    return %c0_i32, %c0_i32_0 : i32, i32
  }
  func.func @transform_3(%arg0: i32) -> (i32, i32) {
    %c0_i32 = arith.constant 0 : i32
    %c0_i32_0 = arith.constant 0 : i32
    return %c0_i32, %arg0 : i32, i32
  }
}

module attributes {stable_mosaic.version = 11 : i64} {
  func.func @_gemm_bias_act_kernel(%arg0: i32, %arg1: memref<16x144xbf16, #tpu.memory_space<vmem>>, %arg2: memref<144x256xbf16, #tpu.memory_space<vmem>>, %arg3: memref<16x1xf32, #tpu.memory_space<vmem>>, %arg4: memref<16x256xf32, #tpu.memory_space<vmem>>) attributes {dimension_semantics = [#tpu.dimension_semantics<parallel>], iteration_bounds = array<i64: 2>, scalar_prefetch = 0 : i64, scratch_operands = 0 : i64, tpu.core_type = #tpu.core_type<tc>, window_params = [{pipeline_mode = #tpu.pipeline_mode<synchronous>, transform_indices = @transform_0, window_bounds = array<i64: 16, 144>}, {transform_indices = @transform_1, window_bounds = array<i64: 144, 256>}, {pipeline_mode = #tpu.pipeline_mode<synchronous>, transform_indices = @transform_2, window_bounds = array<i64: 16, 1>}, {transform_indices = @transform_3, window_bounds = array<i64: 16, 256>}]} {
    %c0 = arith.constant 0 : index
    %c0_0 = arith.constant 0 : index
    %0 = vector.load %arg1[%c0, %c0_0] : memref<16x144xbf16, #tpu.memory_space<vmem>>, vector<16x144xbf16>
    %c0_1 = arith.constant 0 : index
    %c0_2 = arith.constant 0 : index
    %1 = vector.load %arg2[%c0_1, %c0_2] : memref<144x256xbf16, #tpu.memory_space<vmem>>, vector<144x256xbf16>
    %cst = arith.constant dense<0.000000e+00> : vector<16x256xf32>
    %2 = tpu.matmul %0, %1, %cst {dimension_numbers = #tpu.dot_dimension_numbers<[1], [0], [0], [1], [0, 0, 1, 1], [], []>} : vector<16x144xbf16>, vector<144x256xbf16>, vector<16x256xf32> -> vector<16x256xf32>
    %c0_3 = arith.constant 0 : index
    %c0_4 = arith.constant 0 : index
    %3 = vector.load %arg3[%c0_3, %c0_4] : memref<16x1xf32, #tpu.memory_space<vmem>>, vector<16x1xf32>
    %4 = vector.broadcast %3 : vector<16x1xf32> to vector<16x256xf32>
    %5 = arith.addf %2, %4 : vector<16x256xf32>
    %6 = arith.mulf %5, %5 : vector<16x256xf32>
    %7 = arith.mulf %5, %6 : vector<16x256xf32>
    %cst_5 = arith.constant 4.471500e-02 : f32
    %8 = vector.broadcast %cst_5 : f32 to vector<16x256xf32>
    %9 = arith.mulf %8, %7 : vector<16x256xf32>
    %10 = arith.addf %5, %9 : vector<16x256xf32>
    %cst_6 = arith.constant 0.797884583 : f32
    %11 = vector.broadcast %cst_6 : f32 to vector<16x256xf32>
    %12 = arith.mulf %11, %10 : vector<16x256xf32>
    %13 = math.tanh %12 : vector<16x256xf32>
    %cst_7 = arith.constant 1.000000e+00 : f32
    %14 = vector.broadcast %cst_7 : f32 to vector<16x256xf32>
    %15 = arith.addf %14, %13 : vector<16x256xf32>
    %cst_8 = arith.constant 5.000000e-01 : f32
    %16 = vector.broadcast %cst_8 : f32 to vector<16x256xf32>
    %17 = arith.mulf %16, %15 : vector<16x256xf32>
    %18 = arith.mulf %5, %17 : vector<16x256xf32>
    %c0_9 = arith.constant 0 : index
    %c0_10 = arith.constant 0 : index
    %19 = vector.load %arg4[%c0_9, %c0_10] : memref<16x256xf32, #tpu.memory_space<vmem>>, vector<16x256xf32>
    tpu.vector_store %arg4[%c0_9, %c0_10], %18 {strides = array<i32>} : memref<16x256xf32, #tpu.memory_space<vmem>>, vector<16x256xf32>,
    return
  }
  func.func @transform_0(%arg0: i32) -> (i32, i32) {
    %c0_i32 = arith.constant 0 : i32
    %c0_i32_0 = arith.constant 0 : i32
    %c0_i32_1 = arith.constant 0 : i32
    return %c0_i32, %c0_i32_0 : i32, i32
  }
  func.func @transform_1(%arg0: i32) -> (i32, i32) {
    %c0_i32 = arith.constant 0 : i32
    %c0_i32_0 = arith.constant 0 : i32
    return %c0_i32, %arg0 : i32, i32
  }
  func.func @transform_2(%arg0: i32) -> (i32, i32) {
    %c0_i32 = arith.constant 0 : i32
    %c0_i32_0 = arith.constant 0 : i32
    %c0_i32_1 = arith.constant 0 : i32
    return %c0_i32, %c0_i32_0 : i32, i32
  }
  func.func @transform_3(%arg0: i32) -> (i32, i32) {
    %c0_i32 = arith.constant 0 : i32
    %c0_i32_0 = arith.constant 0 : i32
    return %c0_i32, %arg0 : i32, i32
  }
}

module attributes {stable_mosaic.version = 11 : i64} {
  func.func @_gemm_bias_act_kernel(%arg0: i32, %arg1: memref<32x64xbf16, #tpu.memory_space<vmem>>, %arg2: memref<64x256xbf16, #tpu.memory_space<vmem>>, %arg3: memref<32x1xf32, #tpu.memory_space<vmem>>, %arg4: memref<32x256xf32, #tpu.memory_space<vmem>>) attributes {dimension_semantics = [#tpu.dimension_semantics<parallel>], iteration_bounds = array<i64: 2>, scalar_prefetch = 0 : i64, scratch_operands = 0 : i64, tpu.core_type = #tpu.core_type<tc>, window_params = [{pipeline_mode = #tpu.pipeline_mode<synchronous>, transform_indices = @transform_0, window_bounds = array<i64: 32, 64>}, {transform_indices = @transform_1, window_bounds = array<i64: 64, 256>}, {pipeline_mode = #tpu.pipeline_mode<synchronous>, transform_indices = @transform_2, window_bounds = array<i64: 32, 1>}, {transform_indices = @transform_3, window_bounds = array<i64: 32, 256>}]} {
    %c0 = arith.constant 0 : index
    %c0_0 = arith.constant 0 : index
    %0 = vector.load %arg1[%c0, %c0_0] : memref<32x64xbf16, #tpu.memory_space<vmem>>, vector<32x64xbf16>
    %c0_1 = arith.constant 0 : index
    %c0_2 = arith.constant 0 : index
    %1 = vector.load %arg2[%c0_1, %c0_2] : memref<64x256xbf16, #tpu.memory_space<vmem>>, vector<64x256xbf16>
    %cst = arith.constant dense<0.000000e+00> : vector<32x256xf32>
    %2 = tpu.matmul %0, %1, %cst {dimension_numbers = #tpu.dot_dimension_numbers<[1], [0], [0], [1], [0, 0, 1, 1], [], []>} : vector<32x64xbf16>, vector<64x256xbf16>, vector<32x256xf32> -> vector<32x256xf32>
    %c0_3 = arith.constant 0 : index
    %c0_4 = arith.constant 0 : index
    %3 = vector.load %arg3[%c0_3, %c0_4] : memref<32x1xf32, #tpu.memory_space<vmem>>, vector<32x1xf32>
    %4 = vector.broadcast %3 : vector<32x1xf32> to vector<32x256xf32>
    %5 = arith.addf %2, %4 : vector<32x256xf32>
    %6 = arith.mulf %5, %5 : vector<32x256xf32>
    %7 = arith.mulf %5, %6 : vector<32x256xf32>
    %cst_5 = arith.constant 4.471500e-02 : f32
    %8 = vector.broadcast %cst_5 : f32 to vector<32x256xf32>
    %9 = arith.mulf %8, %7 : vector<32x256xf32>
    %10 = arith.addf %5, %9 : vector<32x256xf32>
    %cst_6 = arith.constant 0.797884583 : f32
    %11 = vector.broadcast %cst_6 : f32 to vector<32x256xf32>
    %12 = arith.mulf %11, %10 : vector<32x256xf32>
    %13 = math.tanh %12 : vector<32x256xf32>
    %cst_7 = arith.constant 1.000000e+00 : f32
    %14 = vector.broadcast %cst_7 : f32 to vector<32x256xf32>
    %15 = arith.addf %14, %13 : vector<32x256xf32>
    %cst_8 = arith.constant 5.000000e-01 : f32
    %16 = vector.broadcast %cst_8 : f32 to vector<32x256xf32>
    %17 = arith.mulf %16, %15 : vector<32x256xf32>
    %18 = arith.mulf %5, %17 : vector<32x256xf32>
    %c0_9 = arith.constant 0 : index
    %c0_10 = arith.constant 0 : index
    %19 = vector.load %arg4[%c0_9, %c0_10] : memref<32x256xf32, #tpu.memory_space<vmem>>, vector<32x256xf32>
    tpu.vector_store %arg4[%c0_9, %c0_10], %18 {strides = array<i32>} : memref<32x256xf32, #tpu.memory_space<vmem>>, vector<32x256xf32>,
    return
  }
  func.func @transform_0(%arg0: i32) -> (i32, i32) {
    %c0_i32 = arith.constant 0 : i32
    %c0_i32_0 = arith.constant 0 : i32
    %c0_i32_1 = arith.constant 0 : i32
    return %c0_i32, %c0_i32_0 : i32, i32
  }
  func.func @transform_1(%arg0: i32) -> (i32, i32) {
    %c0_i32 = arith.constant 0 : i32
    %c0_i32_0 = arith.constant 0 : i32
    return %c0_i32, %arg0 : i32, i32
  }
  func.func @transform_2(%arg0: i32) -> (i32, i32) {
    %c0_i32 = arith.constant 0 : i32
    %c0_i32_0 = arith.constant 0 : i32
    %c0_i32_1 = arith.constant 0 : i32
    return %c0_i32, %c0_i32_0 : i32, i32
  }
  func.func @transform_3(%arg0: i32) -> (i32, i32) {
    %c0_i32 = arith.constant 0 : i32
    %c0_i32_0 = arith.constant 0 : i32
    return %c0_i32, %arg0 : i32, i32
  }
}

module attributes {stable_mosaic.version = 11 : i64} {
  func.func @_gemm_bias_act_kernel(%arg0: i32, %arg1: memref<8x72xbf16, #tpu.memory_space<vmem>>, %arg2: memref<72x512xbf16, #tpu.memory_space<vmem>>, %arg3: memref<8x1xf32, #tpu.memory_space<vmem>>, %arg4: memref<8x512xf32, #tpu.memory_space<vmem>>) attributes {dimension_semantics = [#tpu.dimension_semantics<parallel>], iteration_bounds = array<i64: 4>, scalar_prefetch = 0 : i64, scratch_operands = 0 : i64, tpu.core_type = #tpu.core_type<tc>, window_params = [{pipeline_mode = #tpu.pipeline_mode<synchronous>, transform_indices = @transform_0, window_bounds = array<i64: 8, 72>}, {transform_indices = @transform_1, window_bounds = array<i64: 72, 512>}, {pipeline_mode = #tpu.pipeline_mode<synchronous>, transform_indices = @transform_2, window_bounds = array<i64: 8, 1>}, {transform_indices = @transform_3, window_bounds = array<i64: 8, 512>}]} {
    %c0 = arith.constant 0 : index
    %c0_0 = arith.constant 0 : index
    %0 = vector.load %arg1[%c0, %c0_0] : memref<8x72xbf16, #tpu.memory_space<vmem>>, vector<8x72xbf16>
    %c0_1 = arith.constant 0 : index
    %c0_2 = arith.constant 0 : index
    %1 = vector.load %arg2[%c0_1, %c0_2] : memref<72x512xbf16, #tpu.memory_space<vmem>>, vector<72x512xbf16>
    %cst = arith.constant dense<0.000000e+00> : vector<8x512xf32>
    %2 = tpu.matmul %0, %1, %cst {dimension_numbers = #tpu.dot_dimension_numbers<[1], [0], [0], [1], [0, 0, 1, 1], [], []>} : vector<8x72xbf16>, vector<72x512xbf16>, vector<8x512xf32> -> vector<8x512xf32>
    %c0_3 = arith.constant 0 : index
    %c0_4 = arith.constant 0 : index
    %3 = vector.load %arg3[%c0_3, %c0_4] : memref<8x1xf32, #tpu.memory_space<vmem>>, vector<8x1xf32>
    %4 = vector.broadcast %3 : vector<8x1xf32> to vector<8x512xf32>
    %5 = arith.addf %2, %4 : vector<8x512xf32>
    %6 = arith.mulf %5, %5 : vector<8x512xf32>
    %7 = arith.mulf %5, %6 : vector<8x512xf32>
    %cst_5 = arith.constant 4.471500e-02 : f32
    %8 = vector.broadcast %cst_5 : f32 to vector<8x512xf32>
    %9 = arith.mulf %8, %7 : vector<8x512xf32>
    %10 = arith.addf %5, %9 : vector<8x512xf32>
    %cst_6 = arith.constant 0.797884583 : f32
    %11 = vector.broadcast %cst_6 : f32 to vector<8x512xf32>
    %12 = arith.mulf %11, %10 : vector<8x512xf32>
    %13 = math.tanh %12 : vector<8x512xf32>
    %cst_7 = arith.constant 1.000000e+00 : f32
    %14 = vector.broadcast %cst_7 : f32 to vector<8x512xf32>
    %15 = arith.addf %14, %13 : vector<8x512xf32>
    %cst_8 = arith.constant 5.000000e-01 : f32
    %16 = vector.broadcast %cst_8 : f32 to vector<8x512xf32>
    %17 = arith.mulf %16, %15 : vector<8x512xf32>
    %18 = arith.mulf %5, %17 : vector<8x512xf32>
    %c0_9 = arith.constant 0 : index
    %c0_10 = arith.constant 0 : index
    %19 = vector.load %arg4[%c0_9, %c0_10] : memref<8x512xf32, #tpu.memory_space<vmem>>, vector<8x512xf32>
    tpu.vector_store %arg4[%c0_9, %c0_10], %18 {strides = array<i32>} : memref<8x512xf32, #tpu.memory_space<vmem>>, vector<8x512xf32>,
    return
  }
  func.func @transform_0(%arg0: i32) -> (i32, i32) {
    %c0_i32 = arith.constant 0 : i32
    %c0_i32_0 = arith.constant 0 : i32
    %c0_i32_1 = arith.constant 0 : i32
    return %c0_i32, %c0_i32_0 : i32, i32
  }
  func.func @transform_1(%arg0: i32) -> (i32, i32) {
    %c0_i32 = arith.constant 0 : i32
    %c0_i32_0 = arith.constant 0 : i32
    return %c0_i32, %arg0 : i32, i32
  }
  func.func @transform_2(%arg0: i32) -> (i32, i32) {
    %c0_i32 = arith.constant 0 : i32
    %c0_i32_0 = arith.constant 0 : i32
    %c0_i32_1 = arith.constant 0 : i32
    return %c0_i32, %c0_i32_0 : i32, i32
  }
  func.func @transform_3(%arg0: i32) -> (i32, i32) {
    %c0_i32 = arith.constant 0 : i32
    %c0_i32_0 = arith.constant 0 : i32
    return %c0_i32, %arg0 : i32, i32
  }
}

module attributes {stable_mosaic.version = 11 : i64} {
  func.func @_gemm_bias_act_kernel(%arg0: i32, %arg1: memref<12x32xbf16, #tpu.memory_space<vmem>>, %arg2: memref<32x512xbf16, #tpu.memory_space<vmem>>, %arg3: memref<12x1xf32, #tpu.memory_space<vmem>>, %arg4: memref<12x512xf32, #tpu.memory_space<vmem>>) attributes {dimension_semantics = [#tpu.dimension_semantics<parallel>], iteration_bounds = array<i64: 4>, scalar_prefetch = 0 : i64, scratch_operands = 0 : i64, tpu.core_type = #tpu.core_type<tc>, window_params = [{pipeline_mode = #tpu.pipeline_mode<synchronous>, transform_indices = @transform_0, window_bounds = array<i64: 12, 32>}, {transform_indices = @transform_1, window_bounds = array<i64: 32, 512>}, {pipeline_mode = #tpu.pipeline_mode<synchronous>, transform_indices = @transform_2, window_bounds = array<i64: 12, 1>}, {transform_indices = @transform_3, window_bounds = array<i64: 12, 512>}]} {
    %c0 = arith.constant 0 : index
    %c0_0 = arith.constant 0 : index
    %0 = vector.load %arg1[%c0, %c0_0] : memref<12x32xbf16, #tpu.memory_space<vmem>>, vector<12x32xbf16>
    %c0_1 = arith.constant 0 : index
    %c0_2 = arith.constant 0 : index
    %1 = vector.load %arg2[%c0_1, %c0_2] : memref<32x512xbf16, #tpu.memory_space<vmem>>, vector<32x512xbf16>
    %cst = arith.constant dense<0.000000e+00> : vector<12x512xf32>
    %2 = tpu.matmul %0, %1, %cst {dimension_numbers = #tpu.dot_dimension_numbers<[1], [0], [0], [1], [0, 0, 1, 1], [], []>} : vector<12x32xbf16>, vector<32x512xbf16>, vector<12x512xf32> -> vector<12x512xf32>
    %c0_3 = arith.constant 0 : index
    %c0_4 = arith.constant 0 : index
    %3 = vector.load %arg3[%c0_3, %c0_4] : memref<12x1xf32, #tpu.memory_space<vmem>>, vector<12x1xf32>
    %4 = vector.broadcast %3 : vector<12x1xf32> to vector<12x512xf32>
    %5 = arith.addf %2, %4 : vector<12x512xf32>
    %c0_5 = arith.constant 0 : index
    %c0_6 = arith.constant 0 : index
    %6 = vector.load %arg4[%c0_5, %c0_6] : memref<12x512xf32, #tpu.memory_space<vmem>>, vector<12x512xf32>
    tpu.vector_store %arg4[%c0_5, %c0_6], %5 {strides = array<i32>} : memref<12x512xf32, #tpu.memory_space<vmem>>, vector<12x512xf32>,
    return
  }
  func.func @transform_0(%arg0: i32) -> (i32, i32) {
    %c0_i32 = arith.constant 0 : i32
    %c0_i32_0 = arith.constant 0 : i32
    %c0_i32_1 = arith.constant 0 : i32
    return %c0_i32, %c0_i32_0 : i32, i32
  }
  func.func @transform_1(%arg0: i32) -> (i32, i32) {
    %c0_i32 = arith.constant 0 : i32
    %c0_i32_0 = arith.constant 0 : i32
    return %c0_i32, %arg0 : i32, i32
  }
  func.func @transform_2(%arg0: i32) -> (i32, i32) {
    %c0_i32 = arith.constant 0 : i32
    %c0_i32_0 = arith.constant 0 : i32
    %c0_i32_1 = arith.constant 0 : i32
    return %c0_i32, %c0_i32_0 : i32, i32
  }
  func.func @transform_3(%arg0: i32) -> (i32, i32) {
    %c0_i32 = arith.constant 0 : i32
    %c0_i32_0 = arith.constant 0 : i32
    return %c0_i32, %arg0 : i32, i32
  }
}

</mosaic_0001>

<llo_original>
// kernel: decoder_forward.6
$region0: #{decoder_forward.6}
  #allocation0 [shape = 'u32[]', space=smem, size = 0x4, offset = 0x4, fixed_abs, tag = 'smem constant byte address 0x4 - core index']
  #allocation1 [shape = 'u32[144,128]{1,0:T(1,128)}', space=vmem, size = 0x12000, scoped, tag = 'internal scratch']
  %s0 = inlined_call_operand.hbm [shape: f32[8,16], index: 0, kind: input, shape index: {}]
  %s1 = inlined_call_operand.hbm [shape: bf16[16,256], index: 1, kind: input, shape index: {}]
  %s2 = inlined_call_operand.hbm [shape: f32[1,256], index: 2, kind: input, shape index: {}]
  %s3 = inlined_call_operand.vmem [shape: f32[8,256], index: 3, kind: output, shape index: {}]
  %s4 = sld [smem:[#allocation0]]
  $region57: #{decoder_forward.6} parent=0
    _
  %s6 = ssub.s32 1, %s4
  %s7 = scalar_select 0, %s6, %s4
  $region1: #{decoder_forward.6} parent=0
    #allocation2 [shape = 'u8[4096]{0}', space=vmem, size = 0x1000, scoped, tag = 'input window, operand 0, single buffered']
    #allocation3 [shape = 's32[2]{0}', space=sflag, size = 0x8, scoped, tag = 'scoped memory for decoder_forward.6']
    #allocation4 [shape = 'u8[8192]{0}', space=vmem, size = 0x2000, scoped, tag = 'input window, operand 1']
    #allocation5 [shape = 's32[2]{0}', space=sflag, size = 0x8, scoped, tag = 'scoped memory for decoder_forward.6']
    #allocation6 [shape = 'u8[1024]{0}', space=vmem, size = 0x400, scoped, tag = 'input window, operand 2']
    %8 = vsyncpa [#allocation3], 0
    %9 = vsyncpa [#allocation5], 0
    %s10 = scalar_lea.sflag [#allocation5], 1
    %11 = vsyncpa %s10, 0
    loop: start=0, step=1, limit=4
    $region2: #{decoder_forward.6} parent=1 // loop_pre_header
      _
    $region3: #{decoder_forward.6} parent=1 // loop_header
      %s13 = sphi 0, %s17
      %p14 = scmp.ge.s32.totalorder %s13, 4
      %s21 = sphi 0, %s21
      %s23 = sphi 0, %s21
      %s24 = sphi 0, %s23
      %s38 = sphi 0, %s24
      %s44 = sphi 0, %s46
      %s47 = sphi 0, %s44
      %s48 = sphi 0, %s47
      %s64 = sphi 0, %s48
      %s70 = sphi 0, %s72
      %s73 = sphi 0, %s70
      %s74 = sphi 0, %s73
      %s90 = sphi 0, %s74
      %s96 = sphi 0, %s98
      %s99 = sphi 0, %s96
      %s100 = sphi 0, %s99
      %s116 = sphi 0, %s100
    $region4: #{decoder_forward.6} parent=1 // loop_header_branch
      %16 = sbr.rel (%p14) target = $region8
    $region5: #{decoder_forward.6} parent=1 // loop_body
      %s18 = ssub.s32 %s13, 1
      %s19 = ssub.s32 %s13, 2
      %s20 = sadd.s32 %s13, 1
      %s22 = sadd.s32 %s21, 1
      %p25 = scmp.eq.s32.totalorder %s13, 1
      %p26 = scmp.ne.s32.totalorder %s21, %s23
      %p27 = scmp.eq.s32.totalorder %s13, 0
      %p28 = por %p26, %p27
      %p29 = scmp.ne.s32.totalorder %s21, %s23
      %p30 = scmp.eq.s32.totalorder %s18, 1
      %p31 = por %p29, %p30
      %p32 = scmp.ne.s32.totalorder %s23, %s24
      %p33 = scmp.eq.s32.totalorder %s18, 0
      %p34 = por %p32, %p33
      %p35 = scmp.ne.s32.totalorder %s23, %s24
      %p36 = scmp.eq.s32.totalorder %s19, 1
      %p37 = por %p35, %p36
      %p39 = scmp.ne.s32.totalorder %s24, %s38
      %p40 = scmp.eq.s32.totalorder %s19, 0
      %p41 = por %p39, %p40
      %s42 = ssub.s32 %s13, %s20
      %p43 = scmp.eq.s32.totalorder %s42, 0
      %s45 = sadd.s32 %s44, 1
      %s46 = scalar_select %p43, %s44, %s45
      %p49 = pneg %p43
      %p50 = scmp.eq.s32.totalorder %s13, 1
      %p51 = por %p49, %p50
      %p52 = scmp.ne.s32.totalorder %s44, %s47
      %p53 = scmp.eq.s32.totalorder %s13, 0
      %p54 = por %p52, %p53
      %p55 = scmp.ne.s32.totalorder %s44, %s47
      %p56 = scmp.eq.s32.totalorder %s18, 1
      %p57 = por %p55, %p56
      %p58 = scmp.ne.s32.totalorder %s47, %s48
      %p59 = scmp.eq.s32.totalorder %s18, 0
      %p60 = por %p58, %p59
      %p61 = scmp.ne.s32.totalorder %s47, %s48
      %p62 = scmp.eq.s32.totalorder %s19, 1
      %p63 = por %p61, %p62
      %p65 = scmp.ne.s32.totalorder %s48, %s64
      %p66 = scmp.eq.s32.totalorder %s19, 0
      %p67 = por %p65, %p66
      %s68 = ssub.s32 %s13, %s20
      %p69 = scmp.eq.s32.totalorder %s68, 0
      %s71 = sadd.s32 %s70, 1
      %s72 = scalar_select %p69, %s70, %s71
      %p75 = pneg %p69
      %p76 = scmp.eq.s32.totalorder %s13, 1
      %p77 = por %p75, %p76
      %p78 = scmp.ne.s32.totalorder %s70, %s73
      %p79 = scmp.eq.s32.totalorder %s13, 0
      %p80 = por %p78, %p79
      %p81 = scmp.ne.s32.totalorder %s70, %s73
      %p82 = scmp.eq.s32.totalorder %s18, 1
      %p83 = por %p81, %p82
      %p84 = scmp.ne.s32.totalorder %s73, %s74
      %p85 = scmp.eq.s32.totalorder %s18, 0
      %p86 = por %p84, %p85
      %p87 = scmp.ne.s32.totalorder %s73, %s74
      %p88 = scmp.eq.s32.totalorder %s19, 1
      %p89 = por %p87, %p88
      %p91 = scmp.ne.s32.totalorder %s74, %s90
      %p92 = scmp.eq.s32.totalorder %s19, 0
      %p93 = por %p91, %p92
      %s94 = ssub.s32 %s13, %s20
      %p95 = scmp.eq.s32.totalorder %s94, 0
      %s97 = sadd.s32 %s96, 1
      %s98 = scalar_select %p95, %s96, %s97
      %p101 = pneg %p95
      %p102 = scmp.eq.s32.totalorder %s13, 1
      %p103 = por %p101, %p102
      %p104 = scmp.ne.s32.totalorder %s96, %s99
      %p105 = scmp.eq.s32.totalorder %s13, 0
      %p106 = por %p104, %p105
      %p107 = scmp.ne.s32.totalorder %s96, %s99
      %p108 = scmp.eq.s32.totalorder %s18, 1
      %p109 = por %p107, %p108
      %p110 = scmp.ne.s32.totalorder %s99, %s100
      %p111 = scmp.eq.s32.totalorder %s18, 0
      %p112 = por %p110, %p111
      %p113 = scmp.ne.s32.totalorder %s99, %s100
      %p114 = scmp.eq.s32.totalorder %s19, 1
      %p115 = por %p113, %p114
      %p117 = scmp.ne.s32.totalorder %s100, %s116
      %p118 = scmp.eq.s32.totalorder %s19, 0
      %p119 = por %p117, %p118
      %p120 = scmp.le.s32.totalorder 1, %s13
      %p121 = scmp.lt.s32.totalorder %s13, 3
      %p122 = pnand %p120, %p121
      %p123 = pneg %p122
      // Predicated region
      $region9: #{decoder_forward.6} parent=5 // pred_check
        _
      $region10: #{decoder_forward.6} parent=5 // pred_check_branch
        %125 = sbr.rel (%p122) target = $region12
      $region11: #{decoder_forward.6} parent=5 // pred_region
        %s126 = ssub.s32 %s13, 1
        // Predicated region
        $region13: #{decoder_forward.6} parent=11 // pred_check
          %p127 = pneg %p34
        $region14: #{decoder_forward.6} parent=11 // pred_check_branch
          %129 = sbr.rel (%p127) target = $region16
        $region15: #{decoder_forward.6} parent=11 // pred_region
          %s131 = ssub.s32 128, 128
          %132 = vsyncadd [#allocation3], %s131
          %s134 = sshll.u32 [#allocation2], 4
          %s135 = int_to_ptr.vmem [resolvable:$true] %s134
          %137 = dma.hbm_to_vmem [thread:$0]  %s0, 128, %s135, [#allocation3]
        $region16: #{decoder_forward.6} parent=11 // pred_fallthru
          _
      $region12: #{decoder_forward.6} parent=5 // pred_fallthru
        _
      %p138 = scmp.lt.s32.totalorder %s13, 2
      // Predicated region
      $region17: #{decoder_forward.6} parent=5 // pred_check
        %p139 = pneg %p138
      $region18: #{decoder_forward.6} parent=5 // pred_check_branch
        %141 = sbr.rel (%p139) target = $region20
      $region19: #{decoder_forward.6} parent=5 // pred_region
        // Predicated region
        $region21: #{decoder_forward.6} parent=19 // pred_check
          %p142 = pneg %p54
        $region22: #{decoder_forward.6} parent=19 // pred_check_branch
          %144 = sbr.rel (%p142) target = $region24
        $region23: #{decoder_forward.6} parent=19 // pred_region
          %s145 = sand.u32 %s13, 1
          %s146 = scalar_lea.sflag [#allocation5], %s145
          %s147 = sand.u32 %s44, 1
          %s148 = smul.addr %s147, 8
          %s149 = scalar_lea.vmem [#allocation4], %s148
          %s151 = ssub.s32 128, 128
          %152 = vsyncadd %s146, %s151
          %s153 = smul.addr %s13, 64
          %s154 = scalar_lea.hbm %s1, %s153
          %s155 = sshll.u32 %s149, 4
          %s156 = int_to_ptr.vmem [resolvable:$true] %s155
          %161 = dma.hbm_to_vmem [thread:$0]  %s154, 128, %s156, %s146, 128, 64, 4
        $region24: #{decoder_forward.6} parent=19 // pred_fallthru
          _
        // Predicated region
        $region25: #{decoder_forward.6} parent=19 // pred_check
          %p162 = pneg %p80
        $region26: #{decoder_forward.6} parent=19 // pred_check_branch
          %164 = sbr.rel (%p162) target = $region28
        $region27: #{decoder_forward.6} parent=19 // pred_region
          %s165 = sand.u32 %s13, 1
          %s166 = scalar_lea.sflag [#allocation5], %s165
          %s167 = sand.u32 %s70, 1
          %s168 = scalar_lea.vmem [#allocation6], %s167
          %s170 = ssub.s32 16, 16
          %171 = vsyncadd %s166, %s170
          %s172 = smul.addr %s13, 16
          %s173 = scalar_lea.hbm %s2, %s172
          %s175 = sshll.u32 %s168, 4
          %s176 = int_to_ptr.vmem [resolvable:$true] %s175
          %178 = dma.hbm_to_vmem [thread:$0]  %s173, 16, %s176, %s166
        $region28: #{decoder_forward.6} parent=19 // pred_fallthru
          _
      $region20: #{decoder_forward.6} parent=5 // pred_fallthru
        _
      %p179 = scmp.le.s32.totalorder 1, %s13
      %p180 = scmp.lt.s32.totalorder %s13, 3
      %p181 = pnand %p179, %p180
      %p182 = pneg %p181
      // Predicated region
      $region29: #{decoder_forward.6} parent=5 // pred_check
        _
      $region30: #{decoder_forward.6} parent=5 // pred_check_branch
        %184 = sbr.rel (%p181) target = $region32
      $region31: #{decoder_forward.6} parent=5 // pred_region
        %s185 = ssub.s32 %s13, 1
        // Predicated region
        $region33: #{decoder_forward.6} parent=31 // pred_check
          %p186 = pneg %p34
        $region34: #{decoder_forward.6} parent=31 // pred_check_branch
          %188 = sbr.rel (%p186) target = $region36
        $region35: #{decoder_forward.6} parent=31 // pred_region
          %189 = dma.done [#allocation3], 128
        $region36: #{decoder_forward.6} parent=31 // pred_fallthru
          _
        %s190 = sand.u32 %s18, 1
        %s191 = scalar_lea.sflag [#allocation5], %s190
        %s192 = sand.u32 %s47, 1
        %s193 = smul.addr %s192, 8
        %s194 = scalar_lea.vmem [#allocation4], %s193
        // Predicated region
        $region37: #{decoder_forward.6} parent=31 // pred_check
          %p195 = pneg %p60
        $region38: #{decoder_forward.6} parent=31 // pred_check_branch
          %197 = sbr.rel (%p195) target = $region40
        $region39: #{decoder_forward.6} parent=31 // pred_region
          %198 = dma.done %s191, 128
        $region40: #{decoder_forward.6} parent=31 // pred_fallthru
          _
        %s199 = sand.u32 %s18, 1
        %s200 = scalar_lea.sflag [#allocation5], %s199
        %s201 = sand.u32 %s73, 1
        %s202 = scalar_lea.vmem [#allocation6], %s201
        // Predicated region
        $region41: #{decoder_forward.6} parent=31 // pred_check
          %p203 = pneg %p86
        $region42: #{decoder_forward.6} parent=31 // pred_check_branch
          %205 = sbr.rel (%p203) target = $region44
        $region43: #{decoder_forward.6} parent=31 // pred_region
          %206 = dma.done %s200, 16
        $region44: #{decoder_forward.6} parent=31 // pred_fallthru
          _
        %p207 = pneg %p34
        %p208 = pneg %p31
        %s209 = sand.u32 %s18, 1
        %s210 = scalar_lea.sflag [#allocation5], %s209
        %s211 = sand.u32 %s47, 1
        %s212 = smul.addr %s211, 8
        %s213 = scalar_lea.vmem [#allocation4], %s212
        %p214 = pneg %p60
        %p215 = pneg %p57
        %s216 = sand.u32 %s18, 1
        %s217 = scalar_lea.sflag [#allocation5], %s216
        %s218 = sand.u32 %s73, 1
        %s219 = scalar_lea.vmem [#allocation6], %s218
        %p220 = pneg %p86
        %p221 = pneg %p83
        %p222 = pneg %p112
        %p223 = pneg %p109
        %p224 = scmp.lt.s32.totalorder %s18, 1
        %s225 = scalar_select %p224, %s18, 1
        %s226 = smul.addr %s225, 8
        %s227 = scalar_lea.vmem %s3, %s226
        %p228 = scmp.lt.s32.totalorder %s18, 1
        %s229 = scalar_select %p228, %s18, 1
        %s230 = smul.addr %s229, 8
        %s231 = scalar_lea.vmem %s3, %s230
        %v233 = vld [vmem:[#allocation2] sm:$0xff]
        %v234 = vpack.c.bf16 %v233, %v233
        %v235 = vld [vmem:[%s194] sm:$0xf]
        %v236 = vld [vmem:[%s194 + $0x4] sm:$0xf]
        %v237 = vld [vmem:[%s202] sm:$0x1]
        %v239 = vlaneseq
        %v240 = vshrl.u32 %v239, 7
        %v241 = vsub.s32 0, %v240
        %v242 = vrot.slane %v237, %v241
        %v246 = vunpack.c.l.b16 %v235
        %v247 = vunpack.c.l.b16 %v236
        %v248 = vpack.c.b16 %v247, %v246
        %vm250 = vcmask 130048
        %v252 = vsel %vm250, %v234, 0
        %254 = vmatprep.subr.bf16.mxu0 0
        %255 = vmatpush1.bf16.msra.mxu0 0
        %256 = vmatprep.subr.bf16.mxu0 0
        %257 = vmatpush1.bf16.msra.mxu0 0
        %258 = vmatprep.subr.bf16.mxu0 0
        %259 = vmatpush1.bf16.msra.mxu0 0
        %260 = vmatprep.subr.bf16.mxu0 0
        %261 = vmatpush1.bf16.msra.mxu0 0
        %262 = vmatprep.subr.bf16.mxu0 0
        %263 = vmatpush1.bf16.msra.mxu0 0
        %264 = vmatprep.subr.bf16.mxu0 0
        %265 = vmatpush1.bf16.msra.mxu0 0
        %266 = vmatprep.subr.bf16.mxu0 0
        %267 = vmatpush1.bf16.msra.mxu0 0
        %268 = vmatprep.subr.bf16.mxu0 0
        %269 = vmatpush1.bf16.msra.mxu0 %v248
        %270 = vmatprep.subr.bf16.mxu0 0
        %271 = vmatpush2.bf16.msra.mxu0 0
        %272 = vmatprep.subr.bf16.mxu0 0
        %273 = vmatpush2.bf16.msra.mxu0 0
        %274 = vmatprep.subr.bf16.mxu0 0
        %275 = vmatpush2.bf16.msra.mxu0 0
        %276 = vmatprep.subr.bf16.mxu0 0
        %277 = vmatpush2.bf16.msra.mxu0 0
        %278 = vmatprep.subr.bf16.mxu0 0
        %279 = vmatpush2.bf16.msra.mxu0 0
        %280 = vmatprep.subr.bf16.mxu0 0
        %281 = vmatpush2.bf16.msra.mxu0 0
        %282 = vmatprep.subr.bf16.mxu0 0
        %283 = vmatpush2.bf16.msra.mxu0 0
        %284 = vmatprep.subr.bf16.mxu0 0
        %285 = vmatpush2.bf16.msra.mxu0 0
        %286 = vmatprep.mubr.bf16.mxu0 0
        %287 = vmatmul.mubr.bf16.gmra.mxu0 %v252
        %v288 = vpop.f32.mrf.mxu0
        %v289 = vadd.f32 %v242, %v288
        %v290 = vpop.f32.mrf.mxu0
        %v291 = vpop.f32.mrf.mxu0
        %v292 = vpop.f32.mrf.mxu0
        %293 = vdwg.mxu0
        %v294 = vmul.f32 %v289, %v289
        %v295 = vmul.f32 %v289, %v294
        %v296 = vmul.f32 %v295, 0.044715
        %v297 = vadd.f32 %v289, %v296
        %v298 = vmul.f32 %v297, 0.7978846
        %v299 = vtanh.pop %v298
        %v300 = vadd.f32 %v299, 1.0
        %v301 = vmul.f32 %v300, 0.5
        %v302 = vmul.f32 %v289, %v301
        %303 = vst [vmem:[%s231] sm:$0xff] %v302
        %p304 = scmp.lt.s32.totalorder %s18, 1
        %s305 = scalar_select %p304, %s18, 1
        %s306 = smul.addr %s305, 8
        %s307 = scalar_lea.vmem %s3, %s306
        // Predicated region
        $region45: #{decoder_forward.6} parent=31 // pred_check
          %p308 = pneg %p109
        $region46: #{decoder_forward.6} parent=31 // pred_check_branch
          %310 = sbr.rel (%p308) target = $region48
        $region47: #{decoder_forward.6} parent=31 // pred_region
          _
        $region48: #{decoder_forward.6} parent=31 // pred_fallthru
          _
      $region32: #{decoder_forward.6} parent=5 // pred_fallthru
        _
      %p311 = scmp.le.s32.totalorder 2, %s13
      // Predicated region
      $region49: #{decoder_forward.6} parent=5 // pred_check
        %p312 = pneg %p311
      $region50: #{decoder_forward.6} parent=5 // pred_check_branch
        %314 = sbr.rel (%p312) target = $region52
      $region51: #{decoder_forward.6} parent=5 // pred_region
        %s315 = ssub.s32 %s13, 2
        // Predicated region
        $region53: #{decoder_forward.6} parent=51 // pred_check
          %p316 = pneg %p115
        $region54: #{decoder_forward.6} parent=51 // pred_check_branch
          %318 = sbr.rel (%p316) target = $region56
        $region55: #{decoder_forward.6} parent=51 // pred_region
          %p319 = scmp.lt.s32.totalorder %s19, 1
          %s320 = scalar_select %p319, %s19, 1
          %s321 = smul.addr %s320, 8
          %s322 = scalar_lea.vmem %s3, %s321
        $region56: #{decoder_forward.6} parent=51 // pred_fallthru
          _
      $region52: #{decoder_forward.6} parent=5 // pred_fallthru
        _
    $region6: #{decoder_forward.6} parent=1 // loop_footer
      %s17 = sadd.s32 1, %s13
    $region7: #{decoder_forward.6} parent=1 // loop_footer_branch
      %12 = sbr.rel target = $region3
    $region8: #{decoder_forward.6} parent=1 // loop_exit
      _
    %323 = vsyncpa [#allocation3], 1
    %s324 = scalar_lea.sflag [#allocation3], 1
    %325 = vsyncpa %s324, 1
    %326 = vsyncpa [#allocation5], 1
    %s327 = scalar_lea.sflag [#allocation5], 1
    %328 = vsyncpa %s327, 1

// kernel: decoder_forward.7
$region0: #{decoder_forward.7}
  #allocation0 [shape = 'u32[]', space=smem, size = 0x4, offset = 0x4, fixed_abs, tag = 'smem constant byte address 0x4 - core index']
  #allocation1 [shape = 'u32[144,128]{1,0:T(1,128)}', space=vmem, size = 0x12000, scoped, tag = 'internal scratch']
  %s0 = inlined_call_operand.hbm [shape: bf16[64,64], index: 0, kind: input, shape index: {}]
  %s1 = inlined_call_operand.vmem [shape: bf16[64,128], index: 1, kind: input, shape index: {}]
  %s2 = inlined_call_operand.vmem [shape: f32[64,1], index: 2, kind: input, shape index: {}]
  %s3 = inlined_call_operand.vmem [shape: f32[64,128], index: 3, kind: output, shape index: {}]
  %s4 = sld [smem:[#allocation0]]
  $region26: #{decoder_forward.7} parent=0
    _
  %s6 = ssub.s32 1, %s4
  %s7 = scalar_select 0, %s6, %s4
  $region1: #{decoder_forward.7} parent=0
    #allocation2 [shape = 'u8[16384]{0}', space=vmem, size = 0x4000, scoped, tag = 'input window, operand 0, single buffered']
    #allocation3 [shape = 's32[1]{0}', space=sflag, size = 0x4, scoped, tag = 'scoped memory for decoder_forward.7']
    %8 = vsyncpa [#allocation3], 0
    // Predicated region
    $region2: #{decoder_forward.7} parent=1 // pred_check
      _
    $region3: #{decoder_forward.7} parent=1 // pred_check_branch
      %10 = sbr.rel (0) target = $region5
    $region4: #{decoder_forward.7} parent=1 // pred_region
      %s12 = ssub.s32 512, 512
      %13 = vsyncadd [#allocation3], %s12
      %s14 = sshll.u32 [#allocation2], 4
      %s15 = int_to_ptr.vmem [resolvable:$true] %s14
      %20 = dma.hbm_to_vmem [thread:$0]  %s0, 512, %s15, [#allocation3], 64, 64, 4
    $region5: #{decoder_forward.7} parent=1 // pred_fallthru
      _
    // Predicated region
    $region6: #{decoder_forward.7} parent=1 // pred_check
      _
    $region7: #{decoder_forward.7} parent=1 // pred_check_branch
      %22 = sbr.rel (0) target = $region9
    $region8: #{decoder_forward.7} parent=1 // pred_region
      _
    $region9: #{decoder_forward.7} parent=1 // pred_fallthru
      _
    // Predicated region
    $region10: #{decoder_forward.7} parent=1 // pred_check
      _
    $region11: #{decoder_forward.7} parent=1 // pred_check_branch
      %24 = sbr.rel (0) target = $region13
    $region12: #{decoder_forward.7} parent=1 // pred_region
      _
    $region13: #{decoder_forward.7} parent=1 // pred_fallthru
      _
    // Predicated region
    $region14: #{decoder_forward.7} parent=1 // pred_check
      _
    $region15: #{decoder_forward.7} parent=1 // pred_check_branch
      %26 = sbr.rel (0) target = $region17
    $region16: #{decoder_forward.7} parent=1 // pred_region
      %27 = dma.done [#allocation3], 512
    $region17: #{decoder_forward.7} parent=1 // pred_fallthru
      _
    %v29 = vld [vmem:[#allocation2] sm:$0xf]
    %v30 = vld [vmem:[#allocation2 + $0x4] sm:$0xf]
    %v31 = vld [vmem:[#allocation2 + $0x8] sm:$0xf]
    %v32 = vld [vmem:[#allocation2 + $0xc] sm:$0xf]
    %v33 = vld [vmem:[#allocation2 + $0x10] sm:$0xf]
    %v34 = vld [vmem:[#allocation2 + $0x14] sm:$0xf]
    %v35 = vld [vmem:[#allocation2 + $0x18] sm:$0xf]
    %v36 = vld [vmem:[#allocation2 + $0x1c] sm:$0xf]
    %v37 = vld [vmem:[%s1] sm:$0xf]
    %v38 = vld [vmem:[%s1 + $0x4] sm:$0xf]
    %v39 = vld [vmem:[%s1 + $0x8] sm:$0xf]
    %v40 = vld [vmem:[%s1 + $0xc] sm:$0xf]
    %v41 = vld [vmem:[%s1 + $0x10] sm:$0xf]
    %v42 = vld [vmem:[%s1 + $0x14] sm:$0xf]
    %v43 = vld [vmem:[%s1 + $0x18] sm:$0xf]
    %v44 = vld [vmem:[%s1 + $0x1c] sm:$0xf]
    %v45 = vld [vmem:[%s2] sm:$0xff]
    %v46 = vld [vmem:[%s2 + $0x8] sm:$0xff]
    %v47 = vld [vmem:[%s2 + $0x10] sm:$0xff]
    %v48 = vld [vmem:[%s2 + $0x18] sm:$0xff]
    %v49 = vld [vmem:[%s2 + $0x20] sm:$0xff]
    %v50 = vld [vmem:[%s2 + $0x28] sm:$0xff]
    %v51 = vld [vmem:[%s2 + $0x30] sm:$0xff]
    %v52 = vld [vmem:[%s2 + $0x38] sm:$0xff]
    %54 = vset.pattern.permute.xlu0 0
    %55 = vperm.xlu0 %54, %v45
    %v56 = vpop.permute.xlu0 %55
    %59 = vset.pattern.permute.xlu0 0
    %60 = vperm.xlu0 %59, %v46
    %v61 = vpop.permute.xlu0 %60
    %64 = vset.pattern.permute.xlu0 0
    %65 = vperm.xlu0 %64, %v47
    %v66 = vpop.permute.xlu0 %65
    %69 = vset.pattern.permute.xlu0 0
    %70 = vperm.xlu0 %69, %v48
    %v71 = vpop.permute.xlu0 %70
    %74 = vset.pattern.permute.xlu0 0
    %75 = vperm.xlu0 %74, %v49
    %v76 = vpop.permute.xlu0 %75
    %79 = vset.pattern.permute.xlu0 0
    %80 = vperm.xlu0 %79, %v50
    %v81 = vpop.permute.xlu0 %80
    %84 = vset.pattern.permute.xlu0 0
    %85 = vperm.xlu0 %84, %v51
    %v86 = vpop.permute.xlu0 %85
    %89 = vset.pattern.permute.xlu0 0
    %90 = vperm.xlu0 %89, %v52
    %v91 = vpop.permute.xlu0 %90
    %v101 = vunpack.c.l.b16 %v29
    %v102 = vunpack.c.l.b16 %v30
    %v103 = vunpack.c.l.b16 %v31
    %v104 = vunpack.c.l.b16 %v32
    %v105 = vunpack.c.l.b16 %v33
    %v106 = vunpack.c.l.b16 %v34
    %v107 = vunpack.c.l.b16 %v35
    %v108 = vunpack.c.l.b16 %v36
    %v109 = vpack.c.b16 %v102, %v101
    %v110 = vpack.c.b16 %v104, %v103
    %v111 = vpack.c.b16 %v106, %v105
    %v112 = vpack.c.b16 %v108, %v107
    %v121 = vunpack.c.l.b16 %v37
    %v122 = vunpack.c.l.b16 %v38
    %v123 = vunpack.c.l.b16 %v39
    %v124 = vunpack.c.l.b16 %v40
    %v125 = vunpack.c.l.b16 %v41
    %v126 = vunpack.c.l.b16 %v42
    %v127 = vunpack.c.l.b16 %v43
    %v128 = vunpack.c.l.b16 %v44
    %v129 = vpack.c.b16 %v122, %v121
    %v130 = vpack.c.b16 %v124, %v123
    %v131 = vpack.c.b16 %v126, %v125
    %v132 = vpack.c.b16 %v128, %v127
    %vm137 = vcmask 523264
    %v139 = vsel %vm137, %v109, 0
    %v142 = vsel %vm137, %v110, 0
    %v145 = vsel %vm137, %v111, 0
    %v148 = vsel %vm137, %v112, 0
    %150 = vmatprep.subr.bf16.mxu0 0
    %151 = vmatpush1.bf16.msra.mxu0 0
    %152 = vmatprep.subr.bf16.mxu0 0
    %153 = vmatpush1.bf16.msra.mxu0 0
    %154 = vmatprep.subr.bf16.mxu0 0
    %155 = vmatpush1.bf16.msra.mxu0 0
    %156 = vmatprep.subr.bf16.mxu0 0
    %157 = vmatpush1.bf16.msra.mxu0 0
    %158 = vmatprep.subr.bf16.mxu0 0
    %159 = vmatpush1.bf16.msra.mxu0 %v132
    %160 = vmatprep.subr.bf16.mxu0 0
    %161 = vmatpush1.bf16.msra.mxu0 %v131
    %162 = vmatprep.subr.bf16.mxu0 0
    %163 = vmatpush1.bf16.msra.mxu0 %v130
    %164 = vmatprep.subr.bf16.mxu0 0
    %165 = vmatpush1.bf16.msra.mxu0 %v129
    %166 = vmatprep.subr.bf16.mxu0 0
    %167 = vmatpush2.bf16.msra.mxu0 0
    %168 = vmatprep.subr.bf16.mxu0 0
    %169 = vmatpush2.bf16.msra.mxu0 0
    %170 = vmatprep.subr.bf16.mxu0 0
    %171 = vmatpush2.bf16.msra.mxu0 0
    %172 = vmatprep.subr.bf16.mxu0 0
    %173 = vmatpush2.bf16.msra.mxu0 0
    %174 = vmatprep.subr.bf16.mxu0 0
    %175 = vmatpush2.bf16.msra.mxu0 0
    %176 = vmatprep.subr.bf16.mxu0 0
    %177 = vmatpush2.bf16.msra.mxu0 0
    %178 = vmatprep.subr.bf16.mxu0 0
    %179 = vmatpush2.bf16.msra.mxu0 0
    %180 = vmatprep.subr.bf16.mxu0 0
    %181 = vmatpush2.bf16.msra.mxu0 0
    %182 = vmatprep.mubr.bf16.mxu0 0
    %183 = vmatmul.mubr.bf16.gmra.mxu0 %v139
    %v184 = vpop.f32.mrf.mxu0
    %v185 = vadd.f32 %v56, %v184
    %v186 = vpop.f32.mrf.mxu0
    %v187 = vpop.f32.mrf.mxu0
    %v188 = vadd.f32 %v61, %v187
    %v189 = vpop.f32.mrf.mxu0
    %190 = vmatprep.mubr.bf16.mxu0 0
    %191 = vmatmul.mubr.bf16.gmra.mxu0 %v142
    %v192 = vpop.f32.mrf.mxu0
    %v193 = vadd.f32 %v66, %v192
    %v194 = vpop.f32.mrf.mxu0
    %v195 = vpop.f32.mrf.mxu0
    %v196 = vadd.f32 %v71, %v195
    %v197 = vpop.f32.mrf.mxu0
    %198 = vmatprep.mubr.bf16.mxu0 0
    %199 = vmatmul.mubr.bf16.gmra.mxu0 %v145
    %v200 = vpop.f32.mrf.mxu0
    %v201 = vadd.f32 %v76, %v200
    %v202 = vpop.f32.mrf.mxu0
    %v203 = vpop.f32.mrf.mxu0
    %v204 = vadd.f32 %v81, %v203
    %v205 = vpop.f32.mrf.mxu0
    %206 = vmatprep.mubr.bf16.mxu0 0
    %207 = vmatmul.mubr.bf16.gmra.mxu0 %v148
    %v208 = vpop.f32.mrf.mxu0
    %v209 = vadd.f32 %v86, %v208
    %v210 = vpop.f32.mrf.mxu0
    %v211 = vpop.f32.mrf.mxu0
    %v212 = vadd.f32 %v91, %v211
    %v213 = vpop.f32.mrf.mxu0
    %214 = vdwg.mxu0
    %v215 = vmul.f32 %v185, %v185
    %v216 = vmul.f32 %v188, %v188
    %v217 = vmul.f32 %v193, %v193
    %v218 = vmul.f32 %v196, %v196
    %v219 = vmul.f32 %v201, %v201
    %v220 = vmul.f32 %v204, %v204
    %v221 = vmul.f32 %v209, %v209
    %v222 = vmul.f32 %v212, %v212
    %v223 = vmul.f32 %v185, %v215
    %v224 = vmul.f32 %v188, %v216
    %v225 = vmul.f32 %v193, %v217
    %v226 = vmul.f32 %v196, %v218
    %v227 = vmul.f32 %v201, %v219
    %v228 = vmul.f32 %v204, %v220
    %v229 = vmul.f32 %v209, %v221
    %v230 = vmul.f32 %v212, %v222
    %v231 = vmul.f32 %v223, 0.044715
    %v232 = vmul.f32 %v224, 0.044715
    %v233 = vmul.f32 %v225, 0.044715
    %v234 = vmul.f32 %v226, 0.044715
    %v235 = vmul.f32 %v227, 0.044715
    %v236 = vmul.f32 %v228, 0.044715
    %v237 = vmul.f32 %v229, 0.044715
    %v238 = vmul.f32 %v230, 0.044715
    %v239 = vadd.f32 %v185, %v231
    %v240 = vadd.f32 %v188, %v232
    %v241 = vadd.f32 %v193, %v233
    %v242 = vadd.f32 %v196, %v234
    %v243 = vadd.f32 %v201, %v235
    %v244 = vadd.f32 %v204, %v236
    %v245 = vadd.f32 %v209, %v237
    %v246 = vadd.f32 %v212, %v238
    %v247 = vmul.f32 %v239, 0.7978846
    %v248 = vmul.f32 %v240, 0.7978846
    %v249 = vmul.f32 %v241, 0.7978846
    %v250 = vmul.f32 %v242, 0.7978846
    %v251 = vmul.f32 %v243, 0.7978846
    %v252 = vmul.f32 %v244, 0.7978846
    %v253 = vmul.f32 %v245, 0.7978846
    %v254 = vmul.f32 %v246, 0.7978846
    %v255 = vtanh.pop %v247
    %v256 = vtanh.pop %v248
    %v257 = vtanh.pop %v249
    %v258 = vtanh.pop %v250
    %v259 = vtanh.pop %v251
    %v260 = vtanh.pop %v252
    %v261 = vtanh.pop %v253
    %v262 = vtanh.pop %v254
    %v263 = vadd.f32 %v255, 1.0
    %v264 = vadd.f32 %v256, 1.0
    %v265 = vadd.f32 %v257, 1.0
    %v266 = vadd.f32 %v258, 1.0
    %v267 = vadd.f32 %v259, 1.0
    %v268 = vadd.f32 %v260, 1.0
    %v269 = vadd.f32 %v261, 1.0
    %v270 = vadd.f32 %v262, 1.0
    %v271 = vmul.f32 %v263, 0.5
    %v272 = vmul.f32 %v264, 0.5
    %v273 = vmul.f32 %v265, 0.5
    %v274 = vmul.f32 %v266, 0.5
    %v275 = vmul.f32 %v267, 0.5
    %v276 = vmul.f32 %v268, 0.5
    %v277 = vmul.f32 %v269, 0.5
    %v278 = vmul.f32 %v270, 0.5
    %v279 = vmul.f32 %v185, %v271
    %v280 = vmul.f32 %v188, %v272
    %v281 = vmul.f32 %v193, %v273
    %v282 = vmul.f32 %v196, %v274
    %v283 = vmul.f32 %v201, %v275
    %v284 = vmul.f32 %v204, %v276
    %v285 = vmul.f32 %v209, %v277
    %v286 = vmul.f32 %v212, %v278
    %287 = vst [vmem:[%s3] sm:$0xff] %v279
    %288 = vst [vmem:[%s3 + $0x8] sm:$0xff] %v280
    %289 = vst [vmem:[%s3 + $0x10] sm:$0xff] %v281
    %290 = vst [vmem:[%s3 + $0x18] sm:$0xff] %v282
    %291 = vst [vmem:[%s3 + $0x20] sm:$0xff] %v283
    %292 = vst [vmem:[%s3 + $0x28] sm:$0xff] %v284
    %293 = vst [vmem:[%s3 + $0x30] sm:$0xff] %v285
    %294 = vst [vmem:[%s3 + $0x38] sm:$0xff] %v286
    // Predicated region
    $region18: #{decoder_forward.7} parent=1 // pred_check
      _
    $region19: #{decoder_forward.7} parent=1 // pred_check_branch
      %296 = sbr.rel (0) target = $region21
    $region20: #{decoder_forward.7} parent=1 // pred_region
      _
    $region21: #{decoder_forward.7} parent=1 // pred_fallthru
      _
    // Predicated region
    $region22: #{decoder_forward.7} parent=1 // pred_check
      _
    $region23: #{decoder_forward.7} parent=1 // pred_check_branch
      %298 = sbr.rel (0) target = $region25
    $region24: #{decoder_forward.7} parent=1 // pred_region
      _
    $region25: #{decoder_forward.7} parent=1 // pred_fallthru
      _
    %299 = vsyncpa [#allocation3], 1

// kernel: decoder_forward.8
$region0: #{decoder_forward.8}
  #allocation0 [shape = 'u32[]', space=smem, size = 0x4, offset = 0x4, fixed_abs, tag = 'smem constant byte address 0x4 - core index']
  #allocation1 [shape = 'u32[144,128]{1,0:T(1,128)}', space=vmem, size = 0x12000, scoped, tag = 'internal scratch']
  %s0 = inlined_call_operand.vmem [shape: bf16[16,144], index: 0, kind: input, shape index: {}]
  %s1 = inlined_call_operand.vmem [shape: bf16[144,512], index: 1, kind: input, shape index: {}]
  %s2 = inlined_call_operand.vmem [shape: f32[16,1], index: 2, kind: input, shape index: {}]
  %s3 = inlined_call_operand.vmem [shape: f32[16,512], index: 3, kind: output, shape index: {}]
  %s4 = sld [smem:[#allocation0]]
  $region102: #{decoder_forward.8} parent=0
    _
  %s6 = ssub.s32 1, %s4
  %s7 = scalar_select 0, %s6, %s4
  $region1: #{decoder_forward.8} parent=0
    #allocation2 [shape = 'u8[147456]{0}', space=vmem, size = 0x24000, scoped, tag = 'input window, operand 1']
    #allocation3 [shape = 'u8[32768]{0}', space=vmem, size = 0x8000, scoped, tag = 'output window, operand 0']
    loop: start=0, step=1, limit=4
    $region2: #{decoder_forward.8} parent=1 // loop_pre_header
      _
    $region3: #{decoder_forward.8} parent=1 // loop_header
      %s9 = sphi 0, %s13
      %p10 = scmp.ge.s32.totalorder %s9, 4
      %s17 = sphi 0, %s17
      %s19 = sphi 0, %s17
      %s20 = sphi 0, %s19
      %s34 = sphi 0, %s20
      %s40 = sphi 0, %s42
      %s43 = sphi 0, %s40
      %s44 = sphi 0, %s43
      %s60 = sphi 0, %s44
      %s64 = sphi 0, %s64
      %s66 = sphi 0, %s64
      %s67 = sphi 0, %s66
      %s81 = sphi 0, %s67
      %s87 = sphi 0, %s89
      %s90 = sphi 0, %s87
      %s91 = sphi 0, %s90
      %s107 = sphi 0, %s91
    $region4: #{decoder_forward.8} parent=1 // loop_header_branch
      %12 = sbr.rel (%p10) target = $region8
    $region5: #{decoder_forward.8} parent=1 // loop_body
      %s14 = ssub.s32 %s9, 1
      %s15 = ssub.s32 %s9, 2
      %s16 = sadd.s32 %s9, 1
      %s18 = sadd.s32 %s17, 1
      %p21 = scmp.eq.s32.totalorder %s9, 1
      %p22 = scmp.ne.s32.totalorder %s17, %s19
      %p23 = scmp.eq.s32.totalorder %s9, 0
      %p24 = por %p22, %p23
      %p25 = scmp.ne.s32.totalorder %s17, %s19
      %p26 = scmp.eq.s32.totalorder %s14, 1
      %p27 = por %p25, %p26
      %p28 = scmp.ne.s32.totalorder %s19, %s20
      %p29 = scmp.eq.s32.totalorder %s14, 0
      %p30 = por %p28, %p29
      %p31 = scmp.ne.s32.totalorder %s19, %s20
      %p32 = scmp.eq.s32.totalorder %s15, 1
      %p33 = por %p31, %p32
      %p35 = scmp.ne.s32.totalorder %s20, %s34
      %p36 = scmp.eq.s32.totalorder %s15, 0
      %p37 = por %p35, %p36
      %s38 = ssub.s32 %s9, %s16
      %p39 = scmp.eq.s32.totalorder %s38, 0
      %s41 = sadd.s32 %s40, 1
      %s42 = scalar_select %p39, %s40, %s41
      %p45 = pneg %p39
      %p46 = scmp.eq.s32.totalorder %s9, 1
      %p47 = por %p45, %p46
      %p48 = scmp.ne.s32.totalorder %s40, %s43
      %p49 = scmp.eq.s32.totalorder %s9, 0
      %p50 = por %p48, %p49
      %p51 = scmp.ne.s32.totalorder %s40, %s43
      %p52 = scmp.eq.s32.totalorder %s14, 1
      %p53 = por %p51, %p52
      %p54 = scmp.ne.s32.totalorder %s43, %s44
      %p55 = scmp.eq.s32.totalorder %s14, 0
      %p56 = por %p54, %p55
      %p57 = scmp.ne.s32.totalorder %s43, %s44
      %p58 = scmp.eq.s32.totalorder %s15, 1
      %p59 = por %p57, %p58
      %p61 = scmp.ne.s32.totalorder %s44, %s60
      %p62 = scmp.eq.s32.totalorder %s15, 0
      %p63 = por %p61, %p62
      %s65 = sadd.s32 %s64, 1
      %p68 = scmp.eq.s32.totalorder %s9, 1
      %p69 = scmp.ne.s32.totalorder %s64, %s66
      %p70 = scmp.eq.s32.totalorder %s9, 0
      %p71 = por %p69, %p70
      %p72 = scmp.ne.s32.totalorder %s64, %s66
      %p73 = scmp.eq.s32.totalorder %s14, 1
      %p74 = por %p72, %p73
      %p75 = scmp.ne.s32.totalorder %s66, %s67
      %p76 = scmp.eq.s32.totalorder %s14, 0
      %p77 = por %p75, %p76
      %p78 = scmp.ne.s32.totalorder %s66, %s67
      %p79 = scmp.eq.s32.totalorder %s15, 1
      %p80 = por %p78, %p79
      %p82 = scmp.ne.s32.totalorder %s67, %s81
      %p83 = scmp.eq.s32.totalorder %s15, 0
      %p84 = por %p82, %p83
      %s85 = ssub.s32 %s9, %s16
      %p86 = scmp.eq.s32.totalorder %s85, 0
      %s88 = sadd.s32 %s87, 1
      %s89 = scalar_select %p86, %s87, %s88
      %p92 = pneg %p86
      %p93 = scmp.eq.s32.totalorder %s9, 1
      %p94 = por %p92, %p93
      %p95 = scmp.ne.s32.totalorder %s87, %s90
      %p96 = scmp.eq.s32.totalorder %s9, 0
      %p97 = por %p95, %p96
      %p98 = scmp.ne.s32.totalorder %s87, %s90
      %p99 = scmp.eq.s32.totalorder %s14, 1
      %p100 = por %p98, %p99
      %p101 = scmp.ne.s32.totalorder %s90, %s91
      %p102 = scmp.eq.s32.totalorder %s14, 0
      %p103 = por %p101, %p102
      %p104 = scmp.ne.s32.totalorder %s90, %s91
      %p105 = scmp.eq.s32.totalorder %s15, 1
      %p106 = por %p104, %p105
      %p108 = scmp.ne.s32.totalorder %s91, %s107
      %p109 = scmp.eq.s32.totalorder %s15, 0
      %p110 = por %p108, %p109
      %p111 = scmp.le.s32.totalorder 1, %s9
      %p112 = scmp.lt.s32.totalorder %s9, 3
      %p113 = pnand %p111, %p112
      %p114 = pneg %p113
      // Predicated region
      $region9: #{decoder_forward.8} parent=5 // pred_check
        _
      $region10: #{decoder_forward.8} parent=5 // pred_check_branch
        %116 = sbr.rel (%p113) target = $region12
      $region11: #{decoder_forward.8} parent=5 // pred_region
        %s117 = ssub.s32 %s9, 1
        // Predicated region
        $region13: #{decoder_forward.8} parent=11 // pred_check
          %p118 = pneg %p30
        $region14: #{decoder_forward.8} parent=11 // pred_check_branch
          %120 = sbr.rel (%p118) target = $region16
        $region15: #{decoder_forward.8} parent=11 // pred_region
          _
        $region16: #{decoder_forward.8} parent=11 // pred_fallthru
          _
        // Predicated region
        $region17: #{decoder_forward.8} parent=11 // pred_check
          %p121 = pneg %p77
        $region18: #{decoder_forward.8} parent=11 // pred_check_branch
          %123 = sbr.rel (%p121) target = $region20
        $region19: #{decoder_forward.8} parent=11 // pred_region
          _
        $region20: #{decoder_forward.8} parent=11 // pred_fallthru
          _
      $region12: #{decoder_forward.8} parent=5 // pred_fallthru
        _
      %p124 = scmp.lt.s32.totalorder %s9, 2
      // Predicated region
      $region21: #{decoder_forward.8} parent=5 // pred_check
        %p125 = pneg %p124
      $region22: #{decoder_forward.8} parent=5 // pred_check_branch
        %127 = sbr.rel (%p125) target = $region24
      $region23: #{decoder_forward.8} parent=5 // pred_region
        // Predicated region
        $region25: #{decoder_forward.8} parent=23 // pred_check
          %p128 = pneg %p50
        $region26: #{decoder_forward.8} parent=23 // pred_check_branch
          %130 = sbr.rel (%p128) target = $region28
        $region27: #{decoder_forward.8} parent=23 // pred_region
          %s131 = sand.u32 %s40, 1
          %s132 = sand.u32 %s40, 1
          %s133 = smul.addr %s132, 144
          %s134 = scalar_lea.vmem [#allocation2], %s133
          %s135 = smul.u32 2, %s9
          %s136 = smul.addr %s135, 4
          %s137 = scalar_lea.vmem %s1, %s136
          // Predicated region
          $region29: #{decoder_forward.8} parent=27 // pred_check
            _
          $region30: #{decoder_forward.8} parent=27 // pred_check_branch
            %139 = sbr.rel (0) target = $region32
          $region31: #{decoder_forward.8} parent=27 // pred_region
            // Predicated region
            $region33: #{decoder_forward.8} parent=31 // pred_check
              _
            $region34: #{decoder_forward.8} parent=31 // pred_check_branch
              %141 = sbr.rel (0) target = $region36
            $region35: #{decoder_forward.8} parent=31 // pred_region
              // Predicated region
              $region48: #{decoder_forward.8} parent=35 // pred_check
                _
              $region49: #{decoder_forward.8} parent=35 // pred_check_branch
                %191 = sbr.rel (0) target = $region51
              $region50: #{decoder_forward.8} parent=35 // pred_region
                loop: start=0, step=1, limit=1
                $region52: #{decoder_forward.8} parent=50 // loop_pre_header
                  _
                $region53: #{decoder_forward.8} parent=50 // loop_header
                  %s193 = sphi 0, %s197
                  %p194 = scmp.ge.s32.totalorder %s193, 1
                  %s198 = sphi %s137, %s137
                  %s199 = sphi %s134, %s134
                $region54: #{decoder_forward.8} parent=50 // loop_header_branch
                  %196 = sbr.rel (%p194) target = $region58
                $region55: #{decoder_forward.8} parent=50 // loop_body
                  %v200 = vld [vmem:[%s198] sm:$0xff]
                  %201 = vst [vmem:[%s199] sm:$0xff] %v200
                  %v202 = vld [vmem:[%s198 + $0x10] sm:$0xff]
                  %203 = vst [vmem:[%s199 + $0x8] sm:$0xff] %v202
                  %v204 = vld [vmem:[%s198 + $0x20] sm:$0xff]
                  %205 = vst [vmem:[%s199 + $0x10] sm:$0xff] %v204
                  %v206 = vld [vmem:[%s198 + $0x30] sm:$0xff]
                  %207 = vst [vmem:[%s199 + $0x18] sm:$0xff] %v206
                  %v208 = vld [vmem:[%s198 + $0x40] sm:$0xff]
                  %209 = vst [vmem:[%s199 + $0x20] sm:$0xff] %v208
                  %v210 = vld [vmem:[%s198 + $0x50] sm:$0xff]
                  %211 = vst [vmem:[%s199 + $0x28] sm:$0xff] %v210
                  %v212 = vld [vmem:[%s198 + $0x60] sm:$0xff]
                  %213 = vst [vmem:[%s199 + $0x30] sm:$0xff] %v212
                  %v214 = vld [vmem:[%s198 + $0x70] sm:$0xff]
                  %215 = vst [vmem:[%s199 + $0x38] sm:$0xff] %v214
                  %v216 = vld [vmem:[%s198 + $0x80] sm:$0xff]
                  %217 = vst [vmem:[%s199 + $0x40] sm:$0xff] %v216
                  %v218 = vld [vmem:[%s198 + $0x90] sm:$0xff]
                  %219 = vst [vmem:[%s199 + $0x48] sm:$0xff] %v218
                  %v220 = vld [vmem:[%s198 + $0xa0] sm:$0xff]
                  %221 = vst [vmem:[%s199 + $0x50] sm:$0xff] %v220
                  %v222 = vld [vmem:[%s198 + $0xb0] sm:$0xff]
                  %223 = vst [vmem:[%s199 + $0x58] sm:$0xff] %v222
                  %v224 = vld [vmem:[%s198 + $0xc0] sm:$0xff]
                  %225 = vst [vmem:[%s199 + $0x60] sm:$0xff] %v224
                  %v226 = vld [vmem:[%s198 + $0xd0] sm:$0xff]
                  %227 = vst [vmem:[%s199 + $0x68] sm:$0xff] %v226
                  %v228 = vld [vmem:[%s198 + $0xe0] sm:$0xff]
                  %229 = vst [vmem:[%s199 + $0x70] sm:$0xff] %v228
                  %v230 = vld [vmem:[%s198 + $0xf0] sm:$0xff]
                  %231 = vst [vmem:[%s199 + $0x78] sm:$0xff] %v230
                  %v232 = vld [vmem:[%s198 + $0x100] sm:$0xff]
                  %233 = vst [vmem:[%s199 + $0x80] sm:$0xff] %v232
                  %v234 = vld [vmem:[%s198 + $0x110] sm:$0xff]
                  %235 = vst [vmem:[%s199 + $0x88] sm:$0xff] %v234
                $region56: #{decoder_forward.8} parent=50 // loop_footer
                  %s197 = sadd.s32 1, %s193
                $region57: #{decoder_forward.8} parent=50 // loop_footer_branch
                  %192 = sbr.rel target = $region53
                $region58: #{decoder_forward.8} parent=50 // loop_exit
                  _
              $region51: #{decoder_forward.8} parent=35 // pred_fallthru
                _
              // Predicated region
              $region59: #{decoder_forward.8} parent=35 // pred_check
                _
              $region60: #{decoder_forward.8} parent=35 // pred_check_branch
                %237 = sbr.rel target = $region62
              $region61: #{decoder_forward.8} parent=35 // pred_region
                _
              $region62: #{decoder_forward.8} parent=35 // pred_fallthru
                _
            $region36: #{decoder_forward.8} parent=31 // pred_fallthru
              _
            // Predicated region
            $region37: #{decoder_forward.8} parent=31 // pred_check
              _
            $region38: #{decoder_forward.8} parent=31 // pred_check_branch
              %143 = sbr.rel target = $region40
            $region39: #{decoder_forward.8} parent=31 // pred_region
              %s145 = ssub.s32 256, 1
              loop: start=0, step=1, limit=1
              $region41: #{decoder_forward.8} parent=39 // loop_pre_header
                _
              $region42: #{decoder_forward.8} parent=39 // loop_header
                %s147 = sphi 0, %s151
                %p148 = scmp.ge.s32.totalorder %s147, 1
                %s152 = sphi %s137, %s137
                %s153 = sphi %s134, %s134
              $region43: #{decoder_forward.8} parent=39 // loop_header_branch
                %150 = sbr.rel (%p148) target = $region47
              $region44: #{decoder_forward.8} parent=39 // loop_body
                %v154 = vld [vmem:[%s152] sm:%s145]
                %155 = vst [vmem:[%s153] sm:%s145] %v154
                %v156 = vld [vmem:[%s152 + $0x10] sm:%s145]
                %157 = vst [vmem:[%s153 + $0x8] sm:%s145] %v156
                %v158 = vld [vmem:[%s152 + $0x20] sm:%s145]
                %159 = vst [vmem:[%s153 + $0x10] sm:%s145] %v158
                %v160 = vld [vmem:[%s152 + $0x30] sm:%s145]
                %161 = vst [vmem:[%s153 + $0x18] sm:%s145] %v160
                %v162 = vld [vmem:[%s152 + $0x40] sm:%s145]
                %163 = vst [vmem:[%s153 + $0x20] sm:%s145] %v162
                %v164 = vld [vmem:[%s152 + $0x50] sm:%s145]
                %165 = vst [vmem:[%s153 + $0x28] sm:%s145] %v164
                %v166 = vld [vmem:[%s152 + $0x60] sm:%s145]
                %167 = vst [vmem:[%s153 + $0x30] sm:%s145] %v166
                %v168 = vld [vmem:[%s152 + $0x70] sm:%s145]
                %169 = vst [vmem:[%s153 + $0x38] sm:%s145] %v168
                %v170 = vld [vmem:[%s152 + $0x80] sm:%s145]
                %171 = vst [vmem:[%s153 + $0x40] sm:%s145] %v170
                %v172 = vld [vmem:[%s152 + $0x90] sm:%s145]
                %173 = vst [vmem:[%s153 + $0x48] sm:%s145] %v172
                %v174 = vld [vmem:[%s152 + $0xa0] sm:%s145]
                %175 = vst [vmem:[%s153 + $0x50] sm:%s145] %v174
                %v176 = vld [vmem:[%s152 + $0xb0] sm:%s145]
                %177 = vst [vmem:[%s153 + $0x58] sm:%s145] %v176
                %v178 = vld [vmem:[%s152 + $0xc0] sm:%s145]
                %179 = vst [vmem:[%s153 + $0x60] sm:%s145] %v178
                %v180 = vld [vmem:[%s152 + $0xd0] sm:%s145]
                %181 = vst [vmem:[%s153 + $0x68] sm:%s145] %v180
                %v182 = vld [vmem:[%s152 + $0xe0] sm:%s145]
                %183 = vst [vmem:[%s153 + $0x70] sm:%s145] %v182
                %v184 = vld [vmem:[%s152 + $0xf0] sm:%s145]
                %185 = vst [vmem:[%s153 + $0x78] sm:%s145] %v184
                %v186 = vld [vmem:[%s152 + $0x100] sm:%s145]
                %187 = vst [vmem:[%s153 + $0x80] sm:%s145] %v186
                %v188 = vld [vmem:[%s152 + $0x110] sm:%s145]
                %189 = vst [vmem:[%s153 + $0x88] sm:%s145] %v188
              $region45: #{decoder_forward.8} parent=39 // loop_footer
                %s151 = sadd.s32 1, %s147
              $region46: #{decoder_forward.8} parent=39 // loop_footer_branch
                %146 = sbr.rel target = $region42
              $region47: #{decoder_forward.8} parent=39 // loop_exit
                _
            $region40: #{decoder_forward.8} parent=31 // pred_fallthru
              _
          $region32: #{decoder_forward.8} parent=27 // pred_fallthru
            _
          %238 = vnop
        $region28: #{decoder_forward.8} parent=23 // pred_fallthru
          _
      $region24: #{decoder_forward.8} parent=5 // pred_fallthru
        _
      %p239 = scmp.le.s32.totalorder 1, %s9
      %p240 = scmp.lt.s32.totalorder %s9, 3
      %p241 = pnand %p239, %p240
      %p242 = pneg %p241
      // Predicated region
      $region63: #{decoder_forward.8} parent=5 // pred_check
        _
      $region64: #{decoder_forward.8} parent=5 // pred_check_branch
        %244 = sbr.rel (%p241) target = $region66
      $region65: #{decoder_forward.8} parent=5 // pred_region
        %s245 = ssub.s32 %s9, 1
        %s246 = sand.u32 %s43, 1
        %s247 = sand.u32 %s43, 1
        %s248 = smul.addr %s247, 144
        %s249 = scalar_lea.vmem [#allocation2], %s248
        // Predicated region
        $region67: #{decoder_forward.8} parent=65 // pred_check
          %p250 = pneg %p56
        $region68: #{decoder_forward.8} parent=65 // pred_check_branch
          %252 = sbr.rel (%p250) target = $region70
        $region69: #{decoder_forward.8} parent=65 // pred_region
          _
        $region70: #{decoder_forward.8} parent=65 // pred_fallthru
          _
        %p253 = pneg %p30
        %p254 = pneg %p27
        %s255 = sand.u32 %s43, 1
        %s256 = sand.u32 %s43, 1
        %s257 = smul.addr %s256, 144
        %s258 = scalar_lea.vmem [#allocation2], %s257
        %p259 = pneg %p56
        %p260 = pneg %p53
        %p261 = pneg %p77
        %p262 = pneg %p74
        %p263 = pneg %p103
        %p264 = pneg %p100
        %s265 = sand.u32 %s90, 1
        %s266 = sand.u32 %s90, 1
        %s267 = smul.addr %s266, 32
        %s268 = scalar_lea.vmem [#allocation3], %s267
        %s269 = smul.u32 2, %s14
        %s270 = smul.u32 2, %s14
        %v272 = vld [vmem:[%s0] sm:$0xff]
        %v273 = vld [vmem:[%s0 + $0x8] sm:$0xff]
        %v274 = vld [vmem:[%s249] sm:$0xff]
        %v275 = vld [vmem:[%s249 + $0x8] sm:$0xff]
        %v276 = vld [vmem:[%s249 + $0x10] sm:$0xff]
        %v277 = vld [vmem:[%s249 + $0x18] sm:$0xff]
        %v278 = vld [vmem:[%s249 + $0x20] sm:$0xff]
        %v279 = vld [vmem:[%s249 + $0x28] sm:$0xff]
        %v280 = vld [vmem:[%s249 + $0x30] sm:$0xff]
        %v281 = vld [vmem:[%s249 + $0x38] sm:$0xff]
        %v282 = vld [vmem:[%s249 + $0x40] sm:$0xff]
        %v283 = vld [vmem:[%s249 + $0x48] sm:$0xff]
        %v284 = vld [vmem:[%s249 + $0x50] sm:$0xff]
        %v285 = vld [vmem:[%s249 + $0x58] sm:$0xff]
        %v286 = vld [vmem:[%s249 + $0x60] sm:$0xff]
        %v287 = vld [vmem:[%s249 + $0x68] sm:$0xff]
        %v288 = vld [vmem:[%s249 + $0x70] sm:$0xff]
        %v289 = vld [vmem:[%s249 + $0x78] sm:$0xff]
        %v290 = vld [vmem:[%s249 + $0x80] sm:$0xff]
        %v291 = vld [vmem:[%s249 + $0x88] sm:$0xff]
        %v292 = vld [vmem:[%s2] sm:$0xff]
        %v293 = vld [vmem:[%s2 + $0x8] sm:$0xff]
        %295 = vset.pattern.permute.xlu0 0
        %296 = vperm.xlu0 %295, %v292
        %v297 = vpop.permute.xlu0 %296
        %300 = vset.pattern.permute.xlu0 0
        %301 = vperm.xlu0 %300, %v293
        %v302 = vpop.permute.xlu0 %301
        %v306 = vunpack.c.l.b16 %v272
        %v307 = vunpack.c.h.b16 %v272
        %v308 = vunpack.c.l.b16 %v273
        %v309 = vunpack.c.h.b16 %v273
        %v310 = vpack.c.b16 %v308, %v306
        %v311 = vpack.c.b16 %v309, %v307
        %v331 = vunpack.c.l.b16 %v274
        %v332 = vunpack.c.h.b16 %v274
        %v333 = vunpack.c.l.b16 %v275
        %v334 = vunpack.c.h.b16 %v275
        %v335 = vunpack.c.l.b16 %v276
        %v336 = vunpack.c.h.b16 %v276
        %v337 = vunpack.c.l.b16 %v277
        %v338 = vunpack.c.h.b16 %v277
        %v339 = vunpack.c.l.b16 %v278
        %v340 = vunpack.c.h.b16 %v278
        %v341 = vunpack.c.l.b16 %v279
        %v342 = vunpack.c.h.b16 %v279
        %v343 = vunpack.c.l.b16 %v280
        %v344 = vunpack.c.h.b16 %v280
        %v345 = vunpack.c.l.b16 %v281
        %v346 = vunpack.c.h.b16 %v281
        %v347 = vunpack.c.l.b16 %v282
        %v348 = vunpack.c.h.b16 %v282
        %v349 = vunpack.c.l.b16 %v283
        %v350 = vunpack.c.h.b16 %v283
        %v351 = vunpack.c.l.b16 %v284
        %v352 = vunpack.c.h.b16 %v284
        %v353 = vunpack.c.l.b16 %v285
        %v354 = vunpack.c.h.b16 %v285
        %v355 = vunpack.c.l.b16 %v286
        %v356 = vunpack.c.h.b16 %v286
        %v357 = vunpack.c.l.b16 %v287
        %v358 = vunpack.c.h.b16 %v287
        %v359 = vunpack.c.l.b16 %v288
        %v360 = vunpack.c.h.b16 %v288
        %v361 = vunpack.c.l.b16 %v289
        %v362 = vunpack.c.h.b16 %v289
        %v363 = vunpack.c.l.b16 %v290
        %v364 = vunpack.c.h.b16 %v290
        %v365 = vunpack.c.l.b16 %v291
        %v366 = vunpack.c.h.b16 %v291
        %v367 = vpack.c.b16 %v333, %v331
        %v368 = vpack.c.b16 %v334, %v332
        %v369 = vpack.c.b16 %v337, %v335
        %v370 = vpack.c.b16 %v338, %v336
        %v371 = vpack.c.b16 %v341, %v339
        %v372 = vpack.c.b16 %v342, %v340
        %v373 = vpack.c.b16 %v345, %v343
        %v374 = vpack.c.b16 %v346, %v344
        %v375 = vpack.c.b16 %v349, %v347
        %v376 = vpack.c.b16 %v350, %v348
        %v377 = vpack.c.b16 %v353, %v351
        %v378 = vpack.c.b16 %v354, %v352
        %v379 = vpack.c.b16 %v357, %v355
        %v380 = vpack.c.b16 %v358, %v356
        %v381 = vpack.c.b16 %v361, %v359
        %v382 = vpack.c.b16 %v362, %v360
        %v383 = vpack.c.b16 %v365, %v363
        %v384 = vpack.c.b16 %v366, %v364
        %vm403 = vcmask 130048
        %v405 = vsel %vm403, %v311, 0
        %407 = vmatprep.subr.bf16.mxu0 %v382
        %408 = vmatpush1.bf16.msra.mxu0 %v381
        %409 = vmatprep.subr.bf16.mxu0 %v380
        %410 = vmatpush1.bf16.msra.mxu0 %v379
        %411 = vmatprep.subr.bf16.mxu0 %v378
        %412 = vmatpush1.bf16.msra.mxu0 %v377
        %413 = vmatprep.subr.bf16.mxu0 %v376
        %414 = vmatpush1.bf16.msra.mxu0 %v375
        %415 = vmatprep.subr.bf16.mxu0 %v374
        %416 = vmatpush1.bf16.msra.mxu0 %v373
        %417 = vmatprep.subr.bf16.mxu0 %v372
        %418 = vmatpush1.bf16.msra.mxu0 %v371
        %419 = vmatprep.subr.bf16.mxu0 %v370
        %420 = vmatpush1.bf16.msra.mxu0 %v369
        %421 = vmatprep.subr.bf16.mxu0 %v368
        %422 = vmatpush1.bf16.msra.mxu0 %v367
        %423 = vmatprep.subr.bf16.mxu0 0
        %424 = vmatpush2.bf16.msra.mxu0 0
        %425 = vmatprep.subr.bf16.mxu0 0
        %426 = vmatpush2.bf16.msra.mxu0 0
        %427 = vmatprep.subr.bf16.mxu0 0
        %428 = vmatpush2.bf16.msra.mxu0 0
        %429 = vmatprep.subr.bf16.mxu0 0
        %430 = vmatpush2.bf16.msra.mxu0 0
        %431 = vmatprep.subr.bf16.mxu0 0
        %432 = vmatpush2.bf16.msra.mxu0 0
        %433 = vmatprep.subr.bf16.mxu0 0
        %434 = vmatpush2.bf16.msra.mxu0 0
        %435 = vmatprep.subr.bf16.mxu0 0
        %436 = vmatpush2.bf16.msra.mxu0 0
        %437 = vmatprep.subr.bf16.mxu0 %v384
        %438 = vmatpush2.bf16.msra.mxu0 %v383
        %439 = vmatprep.mubr.bf16.mxu0 %v405
        %440 = vmatmul.mubr.bf16.gmra.mxu0 %v310
        %v441 = vpop.f32.mrf.mxu0
        %v442 = vadd.f32 %v297, %v441
        %v443 = vpop.f32.mrf.mxu0
        %v444 = vadd.f32 %v297, %v443
        %v445 = vpop.f32.mrf.mxu0
        %v446 = vadd.f32 %v302, %v445
        %v447 = vpop.f32.mrf.mxu0
        %v448 = vadd.f32 %v302, %v447
        %449 = vdwg.mxu0
        %v450 = vmul.f32 %v442, %v442
        %v451 = vmul.f32 %v444, %v444
        %v452 = vmul.f32 %v446, %v446
        %v453 = vmul.f32 %v448, %v448
        %v454 = vmul.f32 %v442, %v450
        %v455 = vmul.f32 %v444, %v451
        %v456 = vmul.f32 %v446, %v452
        %v457 = vmul.f32 %v448, %v453
        %v458 = vmul.f32 %v454, 0.044715
        %v459 = vmul.f32 %v455, 0.044715
        %v460 = vmul.f32 %v456, 0.044715
        %v461 = vmul.f32 %v457, 0.044715
        %v462 = vadd.f32 %v442, %v458
        %v463 = vadd.f32 %v444, %v459
        %v464 = vadd.f32 %v446, %v460
        %v465 = vadd.f32 %v448, %v461
        %v466 = vmul.f32 %v462, 0.7978846
        %v467 = vmul.f32 %v463, 0.7978846
        %v468 = vmul.f32 %v464, 0.7978846
        %v469 = vmul.f32 %v465, 0.7978846
        %v470 = vtanh.pop %v466
        %v471 = vtanh.pop %v467
        %v472 = vtanh.pop %v468
        %v473 = vtanh.pop %v469
        %v474 = vadd.f32 %v470, 1.0
        %v475 = vadd.f32 %v471, 1.0
        %v476 = vadd.f32 %v472, 1.0
        %v477 = vadd.f32 %v473, 1.0
        %v478 = vmul.f32 %v474, 0.5
        %v479 = vmul.f32 %v475, 0.5
        %v480 = vmul.f32 %v476, 0.5
        %v481 = vmul.f32 %v477, 0.5
        %v482 = vmul.f32 %v442, %v478
        %v483 = vmul.f32 %v444, %v479
        %v484 = vmul.f32 %v446, %v480
        %v485 = vmul.f32 %v448, %v481
        %486 = vst [vmem:[%s268] sm:$0xff] %v482
        %487 = vst [vmem:[%s268 + $0x8] sm:$0xff] %v483
        %488 = vst [vmem:[%s268 + $0x10] sm:$0xff] %v484
        %489 = vst [vmem:[%s268 + $0x18] sm:$0xff] %v485
        %s490 = sand.u32 %s90, 1
        %s491 = sand.u32 %s90, 1
        %s492 = smul.addr %s491, 32
        %s493 = scalar_lea.vmem [#allocation3], %s492
        // Predicated region
        $region71: #{decoder_forward.8} parent=65 // pred_check
          %p494 = pneg %p100
        $region72: #{decoder_forward.8} parent=65 // pred_check_branch
          %496 = sbr.rel (%p494) target = $region74
        $region73: #{decoder_forward.8} parent=65 // pred_region
          %s497 = smul.u32 2, %s14
          %s498 = smul.addr %s497, 8
          %s499 = scalar_lea.vmem %s3, %s498
          // Predicated region
          $region75: #{decoder_forward.8} parent=73 // pred_check
            _
          $region76: #{decoder_forward.8} parent=73 // pred_check_branch
            %501 = sbr.rel (0) target = $region78
          $region77: #{decoder_forward.8} parent=73 // pred_region
            // Predicated region
            $region79: #{decoder_forward.8} parent=77 // pred_check
              _
            $region80: #{decoder_forward.8} parent=77 // pred_check_branch
              %503 = sbr.rel (0) target = $region82
            $region81: #{decoder_forward.8} parent=77 // pred_region
              loop: start=0, step=1, limit=1
              $region83: #{decoder_forward.8} parent=81 // loop_pre_header
                _
              $region84: #{decoder_forward.8} parent=81 // loop_header
                %s505 = sphi 0, %s509
                %p506 = scmp.ge.s32.totalorder %s505, 1
                %s510 = sphi %s493, %s493
                %s511 = sphi %s499, %s499
              $region85: #{decoder_forward.8} parent=81 // loop_header_branch
                %508 = sbr.rel (%p506) target = $region89
              $region86: #{decoder_forward.8} parent=81 // loop_body
                %v512 = vld [vmem:[%s510] sm:$0xff]
                %513 = vst [vmem:[%s511] sm:$0xff] %v512
                %v514 = vld [vmem:[%s510 + $0x8] sm:$0xff]
                %515 = vst [vmem:[%s511 + $0x8] sm:$0xff] %v514
                %v516 = vld [vmem:[%s510 + $0x10] sm:$0xff]
                %517 = vst [vmem:[%s511 + $0x20] sm:$0xff] %v516
                %v518 = vld [vmem:[%s510 + $0x18] sm:$0xff]
                %519 = vst [vmem:[%s511 + $0x28] sm:$0xff] %v518
              $region87: #{decoder_forward.8} parent=81 // loop_footer
                %s509 = sadd.s32 1, %s505
              $region88: #{decoder_forward.8} parent=81 // loop_footer_branch
                %504 = sbr.rel target = $region84
              $region89: #{decoder_forward.8} parent=81 // loop_exit
                _
            $region82: #{decoder_forward.8} parent=77 // pred_fallthru
              _
            // Predicated region
            $region90: #{decoder_forward.8} parent=77 // pred_check
              _
            $region91: #{decoder_forward.8} parent=77 // pred_check_branch
              %521 = sbr.rel target = $region93
            $region92: #{decoder_forward.8} parent=77 // pred_region
              _
            $region93: #{decoder_forward.8} parent=77 // pred_fallthru
              _
          $region78: #{decoder_forward.8} parent=73 // pred_fallthru
            _
          %522 = vnop
        $region74: #{decoder_forward.8} parent=65 // pred_fallthru
          _
      $region66: #{decoder_forward.8} parent=5 // pred_fallthru
        _
      %p523 = scmp.le.s32.totalorder 2, %s9
      // Predicated region
      $region94: #{decoder_forward.8} parent=5 // pred_check
        %p524 = pneg %p523
      $region95: #{decoder_forward.8} parent=5 // pred_check_branch
        %526 = sbr.rel (%p524) target = $region97
      $region96: #{decoder_forward.8} parent=5 // pred_region
        %s527 = ssub.s32 %s9, 2
        // Predicated region
        $region98: #{decoder_forward.8} parent=96 // pred_check
          %p528 = pneg %p106
        $region99: #{decoder_forward.8} parent=96 // pred_check_branch
          %530 = sbr.rel (%p528) target = $region101
        $region100: #{decoder_forward.8} parent=96 // pred_region
          %s531 = sand.u32 %s91, 1
          %s532 = sand.u32 %s91, 1
          %s533 = smul.addr %s532, 32
          %s534 = scalar_lea.vmem [#allocation3], %s533
        $region101: #{decoder_forward.8} parent=96 // pred_fallthru
          _
      $region97: #{decoder_forward.8} parent=5 // pred_fallthru
        _
    $region6: #{decoder_forward.8} parent=1 // loop_footer
      %s13 = sadd.s32 1, %s9
    $region7: #{decoder_forward.8} parent=1 // loop_footer_branch
      %8 = sbr.rel target = $region3
    $region8: #{decoder_forward.8} parent=1 // loop_exit
      _

// kernel: decoder_forward.9
$region0: #{decoder_forward.9}
  #allocation0 [shape = 'u32[]', space=smem, size = 0x4, offset = 0x4, fixed_abs, tag = 'smem constant byte address 0x4 - core index']
  #allocation1 [shape = 'u32[144,128]{1,0:T(1,128)}', space=vmem, size = 0x12000, scoped, tag = 'internal scratch']
  %s0 = inlined_call_operand.vmem [shape: bf16[32,64], index: 0, kind: input, shape index: {}]
  %s1 = inlined_call_operand.vmem [shape: bf16[64,512], index: 1, kind: input, shape index: {}]
  %s2 = inlined_call_operand.vmem [shape: f32[32,1], index: 2, kind: input, shape index: {}]
  %s3 = inlined_call_operand.vmem [shape: f32[32,512], index: 3, kind: output, shape index: {}]
  %s4 = sld [smem:[#allocation0]]
  $region102: #{decoder_forward.9} parent=0
    _
  %s6 = ssub.s32 1, %s4
  %s7 = scalar_select 0, %s6, %s4
  $region1: #{decoder_forward.9} parent=0
    #allocation2 [shape = 'u8[65536]{0}', space=vmem, size = 0x10000, scoped, tag = 'input window, operand 1']
    #allocation3 [shape = 'u8[65536]{0}', space=vmem, size = 0x10000, scoped, tag = 'output window, operand 0']
    loop: start=0, step=1, limit=4
    $region2: #{decoder_forward.9} parent=1 // loop_pre_header
      _
    $region3: #{decoder_forward.9} parent=1 // loop_header
      %s9 = sphi 0, %s13
      %p10 = scmp.ge.s32.totalorder %s9, 4
      %s17 = sphi 0, %s17
      %s19 = sphi 0, %s17
      %s20 = sphi 0, %s19
      %s34 = sphi 0, %s20
      %s40 = sphi 0, %s42
      %s43 = sphi 0, %s40
      %s44 = sphi 0, %s43
      %s60 = sphi 0, %s44
      %s64 = sphi 0, %s64
      %s66 = sphi 0, %s64
      %s67 = sphi 0, %s66
      %s81 = sphi 0, %s67
      %s87 = sphi 0, %s89
      %s90 = sphi 0, %s87
      %s91 = sphi 0, %s90
      %s107 = sphi 0, %s91
    $region4: #{decoder_forward.9} parent=1 // loop_header_branch
      %12 = sbr.rel (%p10) target = $region8
    $region5: #{decoder_forward.9} parent=1 // loop_body
      %s14 = ssub.s32 %s9, 1
      %s15 = ssub.s32 %s9, 2
      %s16 = sadd.s32 %s9, 1
      %s18 = sadd.s32 %s17, 1
      %p21 = scmp.eq.s32.totalorder %s9, 1
      %p22 = scmp.ne.s32.totalorder %s17, %s19
      %p23 = scmp.eq.s32.totalorder %s9, 0
      %p24 = por %p22, %p23
      %p25 = scmp.ne.s32.totalorder %s17, %s19
      %p26 = scmp.eq.s32.totalorder %s14, 1
      %p27 = por %p25, %p26
      %p28 = scmp.ne.s32.totalorder %s19, %s20
      %p29 = scmp.eq.s32.totalorder %s14, 0
      %p30 = por %p28, %p29
      %p31 = scmp.ne.s32.totalorder %s19, %s20
      %p32 = scmp.eq.s32.totalorder %s15, 1
      %p33 = por %p31, %p32
      %p35 = scmp.ne.s32.totalorder %s20, %s34
      %p36 = scmp.eq.s32.totalorder %s15, 0
      %p37 = por %p35, %p36
      %s38 = ssub.s32 %s9, %s16
      %p39 = scmp.eq.s32.totalorder %s38, 0
      %s41 = sadd.s32 %s40, 1
      %s42 = scalar_select %p39, %s40, %s41
      %p45 = pneg %p39
      %p46 = scmp.eq.s32.totalorder %s9, 1
      %p47 = por %p45, %p46
      %p48 = scmp.ne.s32.totalorder %s40, %s43
      %p49 = scmp.eq.s32.totalorder %s9, 0
      %p50 = por %p48, %p49
      %p51 = scmp.ne.s32.totalorder %s40, %s43
      %p52 = scmp.eq.s32.totalorder %s14, 1
      %p53 = por %p51, %p52
      %p54 = scmp.ne.s32.totalorder %s43, %s44
      %p55 = scmp.eq.s32.totalorder %s14, 0
      %p56 = por %p54, %p55
      %p57 = scmp.ne.s32.totalorder %s43, %s44
      %p58 = scmp.eq.s32.totalorder %s15, 1
      %p59 = por %p57, %p58
      %p61 = scmp.ne.s32.totalorder %s44, %s60
      %p62 = scmp.eq.s32.totalorder %s15, 0
      %p63 = por %p61, %p62
      %s65 = sadd.s32 %s64, 1
      %p68 = scmp.eq.s32.totalorder %s9, 1
      %p69 = scmp.ne.s32.totalorder %s64, %s66
      %p70 = scmp.eq.s32.totalorder %s9, 0
      %p71 = por %p69, %p70
      %p72 = scmp.ne.s32.totalorder %s64, %s66
      %p73 = scmp.eq.s32.totalorder %s14, 1
      %p74 = por %p72, %p73
      %p75 = scmp.ne.s32.totalorder %s66, %s67
      %p76 = scmp.eq.s32.totalorder %s14, 0
      %p77 = por %p75, %p76
      %p78 = scmp.ne.s32.totalorder %s66, %s67
      %p79 = scmp.eq.s32.totalorder %s15, 1
      %p80 = por %p78, %p79
      %p82 = scmp.ne.s32.totalorder %s67, %s81
      %p83 = scmp.eq.s32.totalorder %s15, 0
      %p84 = por %p82, %p83
      %s85 = ssub.s32 %s9, %s16
      %p86 = scmp.eq.s32.totalorder %s85, 0
      %s88 = sadd.s32 %s87, 1
      %s89 = scalar_select %p86, %s87, %s88
      %p92 = pneg %p86
      %p93 = scmp.eq.s32.totalorder %s9, 1
      %p94 = por %p92, %p93
      %p95 = scmp.ne.s32.totalorder %s87, %s90
      %p96 = scmp.eq.s32.totalorder %s9, 0
      %p97 = por %p95, %p96
      %p98 = scmp.ne.s32.totalorder %s87, %s90
      %p99 = scmp.eq.s32.totalorder %s14, 1
      %p100 = por %p98, %p99
      %p101 = scmp.ne.s32.totalorder %s90, %s91
      %p102 = scmp.eq.s32.totalorder %s14, 0
      %p103 = por %p101, %p102
      %p104 = scmp.ne.s32.totalorder %s90, %s91
      %p105 = scmp.eq.s32.totalorder %s15, 1
      %p106 = por %p104, %p105
      %p108 = scmp.ne.s32.totalorder %s91, %s107
      %p109 = scmp.eq.s32.totalorder %s15, 0
      %p110 = por %p108, %p109
      %p111 = scmp.le.s32.totalorder 1, %s9
      %p112 = scmp.lt.s32.totalorder %s9, 3
      %p113 = pnand %p111, %p112
      %p114 = pneg %p113
      // Predicated region
      $region9: #{decoder_forward.9} parent=5 // pred_check
        _
      $region10: #{decoder_forward.9} parent=5 // pred_check_branch
        %116 = sbr.rel (%p113) target = $region12
      $region11: #{decoder_forward.9} parent=5 // pred_region
        %s117 = ssub.s32 %s9, 1
        // Predicated region
        $region13: #{decoder_forward.9} parent=11 // pred_check
          %p118 = pneg %p30
        $region14: #{decoder_forward.9} parent=11 // pred_check_branch
          %120 = sbr.rel (%p118) target = $region16
        $region15: #{decoder_forward.9} parent=11 // pred_region
          _
        $region16: #{decoder_forward.9} parent=11 // pred_fallthru
          _
        // Predicated region
        $region17: #{decoder_forward.9} parent=11 // pred_check
          %p121 = pneg %p77
        $region18: #{decoder_forward.9} parent=11 // pred_check_branch
          %123 = sbr.rel (%p121) target = $region20
        $region19: #{decoder_forward.9} parent=11 // pred_region
          _
        $region20: #{decoder_forward.9} parent=11 // pred_fallthru
          _
      $region12: #{decoder_forward.9} parent=5 // pred_fallthru
        _
      %p124 = scmp.lt.s32.totalorder %s9, 2
      // Predicated region
      $region21: #{decoder_forward.9} parent=5 // pred_check
        %p125 = pneg %p124
      $region22: #{decoder_forward.9} parent=5 // pred_check_branch
        %127 = sbr.rel (%p125) target = $region24
      $region23: #{decoder_forward.9} parent=5 // pred_region
        // Predicated region
        $region25: #{decoder_forward.9} parent=23 // pred_check
          %p128 = pneg %p50
        $region26: #{decoder_forward.9} parent=23 // pred_check_branch
          %130 = sbr.rel (%p128) target = $region28
        $region27: #{decoder_forward.9} parent=23 // pred_region
          %s131 = sand.u32 %s40, 1
          %s132 = sand.u32 %s40, 1
          %s133 = smul.addr %s132, 64
          %s134 = scalar_lea.vmem [#allocation2], %s133
          %s135 = smul.u32 2, %s9
          %s136 = smul.addr %s135, 4
          %s137 = scalar_lea.vmem %s1, %s136
          // Predicated region
          $region29: #{decoder_forward.9} parent=27 // pred_check
            _
          $region30: #{decoder_forward.9} parent=27 // pred_check_branch
            %139 = sbr.rel (0) target = $region32
          $region31: #{decoder_forward.9} parent=27 // pred_region
            // Predicated region
            $region33: #{decoder_forward.9} parent=31 // pred_check
              _
            $region34: #{decoder_forward.9} parent=31 // pred_check_branch
              %141 = sbr.rel (0) target = $region36
            $region35: #{decoder_forward.9} parent=31 // pred_region
              // Predicated region
              $region48: #{decoder_forward.9} parent=35 // pred_check
                _
              $region49: #{decoder_forward.9} parent=35 // pred_check_branch
                %171 = sbr.rel (0) target = $region51
              $region50: #{decoder_forward.9} parent=35 // pred_region
                loop: start=0, step=1, limit=1
                $region52: #{decoder_forward.9} parent=50 // loop_pre_header
                  _
                $region53: #{decoder_forward.9} parent=50 // loop_header
                  %s173 = sphi 0, %s177
                  %p174 = scmp.ge.s32.totalorder %s173, 1
                  %s178 = sphi %s137, %s137
                  %s179 = sphi %s134, %s134
                $region54: #{decoder_forward.9} parent=50 // loop_header_branch
                  %176 = sbr.rel (%p174) target = $region58
                $region55: #{decoder_forward.9} parent=50 // loop_body
                  %v180 = vld [vmem:[%s178] sm:$0xff]
                  %181 = vst [vmem:[%s179] sm:$0xff] %v180
                  %v182 = vld [vmem:[%s178 + $0x10] sm:$0xff]
                  %183 = vst [vmem:[%s179 + $0x8] sm:$0xff] %v182
                  %v184 = vld [vmem:[%s178 + $0x20] sm:$0xff]
                  %185 = vst [vmem:[%s179 + $0x10] sm:$0xff] %v184
                  %v186 = vld [vmem:[%s178 + $0x30] sm:$0xff]
                  %187 = vst [vmem:[%s179 + $0x18] sm:$0xff] %v186
                  %v188 = vld [vmem:[%s178 + $0x40] sm:$0xff]
                  %189 = vst [vmem:[%s179 + $0x20] sm:$0xff] %v188
                  %v190 = vld [vmem:[%s178 + $0x50] sm:$0xff]
                  %191 = vst [vmem:[%s179 + $0x28] sm:$0xff] %v190
                  %v192 = vld [vmem:[%s178 + $0x60] sm:$0xff]
                  %193 = vst [vmem:[%s179 + $0x30] sm:$0xff] %v192
                  %v194 = vld [vmem:[%s178 + $0x70] sm:$0xff]
                  %195 = vst [vmem:[%s179 + $0x38] sm:$0xff] %v194
                $region56: #{decoder_forward.9} parent=50 // loop_footer
                  %s177 = sadd.s32 1, %s173
                $region57: #{decoder_forward.9} parent=50 // loop_footer_branch
                  %172 = sbr.rel target = $region53
                $region58: #{decoder_forward.9} parent=50 // loop_exit
                  _
              $region51: #{decoder_forward.9} parent=35 // pred_fallthru
                _
              // Predicated region
              $region59: #{decoder_forward.9} parent=35 // pred_check
                _
              $region60: #{decoder_forward.9} parent=35 // pred_check_branch
                %197 = sbr.rel target = $region62
              $region61: #{decoder_forward.9} parent=35 // pred_region
                _
              $region62: #{decoder_forward.9} parent=35 // pred_fallthru
                _
            $region36: #{decoder_forward.9} parent=31 // pred_fallthru
              _
            // Predicated region
            $region37: #{decoder_forward.9} parent=31 // pred_check
              _
            $region38: #{decoder_forward.9} parent=31 // pred_check_branch
              %143 = sbr.rel target = $region40
            $region39: #{decoder_forward.9} parent=31 // pred_region
              %s145 = ssub.s32 256, 1
              loop: start=0, step=1, limit=1
              $region41: #{decoder_forward.9} parent=39 // loop_pre_header
                _
              $region42: #{decoder_forward.9} parent=39 // loop_header
                %s147 = sphi 0, %s151
                %p148 = scmp.ge.s32.totalorder %s147, 1
                %s152 = sphi %s137, %s137
                %s153 = sphi %s134, %s134
              $region43: #{decoder_forward.9} parent=39 // loop_header_branch
                %150 = sbr.rel (%p148) target = $region47
              $region44: #{decoder_forward.9} parent=39 // loop_body
                %v154 = vld [vmem:[%s152] sm:%s145]
                %155 = vst [vmem:[%s153] sm:%s145] %v154
                %v156 = vld [vmem:[%s152 + $0x10] sm:%s145]
                %157 = vst [vmem:[%s153 + $0x8] sm:%s145] %v156
                %v158 = vld [vmem:[%s152 + $0x20] sm:%s145]
                %159 = vst [vmem:[%s153 + $0x10] sm:%s145] %v158
                %v160 = vld [vmem:[%s152 + $0x30] sm:%s145]
                %161 = vst [vmem:[%s153 + $0x18] sm:%s145] %v160
                %v162 = vld [vmem:[%s152 + $0x40] sm:%s145]
                %163 = vst [vmem:[%s153 + $0x20] sm:%s145] %v162
                %v164 = vld [vmem:[%s152 + $0x50] sm:%s145]
                %165 = vst [vmem:[%s153 + $0x28] sm:%s145] %v164
                %v166 = vld [vmem:[%s152 + $0x60] sm:%s145]
                %167 = vst [vmem:[%s153 + $0x30] sm:%s145] %v166
                %v168 = vld [vmem:[%s152 + $0x70] sm:%s145]
                %169 = vst [vmem:[%s153 + $0x38] sm:%s145] %v168
              $region45: #{decoder_forward.9} parent=39 // loop_footer
                %s151 = sadd.s32 1, %s147
              $region46: #{decoder_forward.9} parent=39 // loop_footer_branch
                %146 = sbr.rel target = $region42
              $region47: #{decoder_forward.9} parent=39 // loop_exit
                _
            $region40: #{decoder_forward.9} parent=31 // pred_fallthru
              _
          $region32: #{decoder_forward.9} parent=27 // pred_fallthru
            _
          %198 = vnop
        $region28: #{decoder_forward.9} parent=23 // pred_fallthru
          _
      $region24: #{decoder_forward.9} parent=5 // pred_fallthru
        _
      %p199 = scmp.le.s32.totalorder 1, %s9
      %p200 = scmp.lt.s32.totalorder %s9, 3
      %p201 = pnand %p199, %p200
      %p202 = pneg %p201
      // Predicated region
      $region63: #{decoder_forward.9} parent=5 // pred_check
        _
      $region64: #{decoder_forward.9} parent=5 // pred_check_branch
        %204 = sbr.rel (%p201) target = $region66
      $region65: #{decoder_forward.9} parent=5 // pred_region
        %s205 = ssub.s32 %s9, 1
        %s206 = sand.u32 %s43, 1
        %s207 = sand.u32 %s43, 1
        %s208 = smul.addr %s207, 64
        %s209 = scalar_lea.vmem [#allocation2], %s208
        // Predicated region
        $region67: #{decoder_forward.9} parent=65 // pred_check
          %p210 = pneg %p56
        $region68: #{decoder_forward.9} parent=65 // pred_check_branch
          %212 = sbr.rel (%p210) target = $region70
        $region69: #{decoder_forward.9} parent=65 // pred_region
          _
        $region70: #{decoder_forward.9} parent=65 // pred_fallthru
          _
        %p213 = pneg %p30
        %p214 = pneg %p27
        %s215 = sand.u32 %s43, 1
        %s216 = sand.u32 %s43, 1
        %s217 = smul.addr %s216, 64
        %s218 = scalar_lea.vmem [#allocation2], %s217
        %p219 = pneg %p56
        %p220 = pneg %p53
        %p221 = pneg %p77
        %p222 = pneg %p74
        %p223 = pneg %p103
        %p224 = pneg %p100
        %s225 = sand.u32 %s90, 1
        %s226 = sand.u32 %s90, 1
        %s227 = smul.addr %s226, 64
        %s228 = scalar_lea.vmem [#allocation3], %s227
        %s229 = smul.u32 2, %s14
        %s230 = smul.u32 2, %s14
        %v232 = vld [vmem:[%s0] sm:$0xf]
        %v233 = vld [vmem:[%s0 + $0x4] sm:$0xf]
        %v234 = vld [vmem:[%s0 + $0x8] sm:$0xf]
        %v235 = vld [vmem:[%s0 + $0xc] sm:$0xf]
        %v236 = vld [vmem:[%s209] sm:$0xff]
        %v237 = vld [vmem:[%s209 + $0x8] sm:$0xff]
        %v238 = vld [vmem:[%s209 + $0x10] sm:$0xff]
        %v239 = vld [vmem:[%s209 + $0x18] sm:$0xff]
        %v240 = vld [vmem:[%s209 + $0x20] sm:$0xff]
        %v241 = vld [vmem:[%s209 + $0x28] sm:$0xff]
        %v242 = vld [vmem:[%s209 + $0x30] sm:$0xff]
        %v243 = vld [vmem:[%s209 + $0x38] sm:$0xff]
        %v244 = vld [vmem:[%s2] sm:$0xff]
        %v245 = vld [vmem:[%s2 + $0x8] sm:$0xff]
        %v246 = vld [vmem:[%s2 + $0x10] sm:$0xff]
        %v247 = vld [vmem:[%s2 + $0x18] sm:$0xff]
        %249 = vset.pattern.permute.xlu0 0
        %250 = vperm.xlu0 %249, %v244
        %v251 = vpop.permute.xlu0 %250
        %254 = vset.pattern.permute.xlu0 0
        %255 = vperm.xlu0 %254, %v245
        %v256 = vpop.permute.xlu0 %255
        %259 = vset.pattern.permute.xlu0 0
        %260 = vperm.xlu0 %259, %v246
        %v261 = vpop.permute.xlu0 %260
        %264 = vset.pattern.permute.xlu0 0
        %265 = vperm.xlu0 %264, %v247
        %v266 = vpop.permute.xlu0 %265
        %v272 = vunpack.c.l.b16 %v232
        %v273 = vunpack.c.l.b16 %v233
        %v274 = vunpack.c.l.b16 %v234
        %v275 = vunpack.c.l.b16 %v235
        %v276 = vpack.c.b16 %v273, %v272
        %v277 = vpack.c.b16 %v275, %v274
        %v286 = vunpack.c.l.b16 %v236
        %v287 = vunpack.c.h.b16 %v236
        %v288 = vunpack.c.l.b16 %v237
        %v289 = vunpack.c.h.b16 %v237
        %v290 = vunpack.c.l.b16 %v238
        %v291 = vunpack.c.h.b16 %v238
        %v292 = vunpack.c.l.b16 %v239
        %v293 = vunpack.c.h.b16 %v239
        %v294 = vunpack.c.l.b16 %v240
        %v295 = vunpack.c.h.b16 %v240
        %v296 = vunpack.c.l.b16 %v241
        %v297 = vunpack.c.h.b16 %v241
        %v298 = vunpack.c.l.b16 %v242
        %v299 = vunpack.c.h.b16 %v242
        %v300 = vunpack.c.l.b16 %v243
        %v301 = vunpack.c.h.b16 %v243
        %v302 = vpack.c.b16 %v288, %v286
        %v303 = vpack.c.b16 %v289, %v287
        %v304 = vpack.c.b16 %v292, %v290
        %v305 = vpack.c.b16 %v293, %v291
        %v306 = vpack.c.b16 %v296, %v294
        %v307 = vpack.c.b16 %v297, %v295
        %v308 = vpack.c.b16 %v300, %v298
        %v309 = vpack.c.b16 %v301, %v299
        %vm318 = vcmask 523264
        %v320 = vsel %vm318, %v276, 0
        %v323 = vsel %vm318, %v277, 0
        %325 = vmatprep.subr.bf16.mxu0 0
        %326 = vmatpush1.bf16.msra.mxu0 0
        %327 = vmatprep.subr.bf16.mxu0 0
        %328 = vmatpush1.bf16.msra.mxu0 0
        %329 = vmatprep.subr.bf16.mxu0 0
        %330 = vmatpush1.bf16.msra.mxu0 0
        %331 = vmatprep.subr.bf16.mxu0 0
        %332 = vmatpush1.bf16.msra.mxu0 0
        %333 = vmatprep.subr.bf16.mxu0 %v309
        %334 = vmatpush1.bf16.msra.mxu0 %v308
        %335 = vmatprep.subr.bf16.mxu0 %v307
        %336 = vmatpush1.bf16.msra.mxu0 %v306
        %337 = vmatprep.subr.bf16.mxu0 %v305
        %338 = vmatpush1.bf16.msra.mxu0 %v304
        %339 = vmatprep.subr.bf16.mxu0 %v303
        %340 = vmatpush1.bf16.msra.mxu0 %v302
        %341 = vmatprep.subr.bf16.mxu0 0
        %342 = vmatpush2.bf16.msra.mxu0 0
        %343 = vmatprep.subr.bf16.mxu0 0
        %344 = vmatpush2.bf16.msra.mxu0 0
        %345 = vmatprep.subr.bf16.mxu0 0
        %346 = vmatpush2.bf16.msra.mxu0 0
        %347 = vmatprep.subr.bf16.mxu0 0
        %348 = vmatpush2.bf16.msra.mxu0 0
        %349 = vmatprep.subr.bf16.mxu0 0
        %350 = vmatpush2.bf16.msra.mxu0 0
        %351 = vmatprep.subr.bf16.mxu0 0
        %352 = vmatpush2.bf16.msra.mxu0 0
        %353 = vmatprep.subr.bf16.mxu0 0
        %354 = vmatpush2.bf16.msra.mxu0 0
        %355 = vmatprep.subr.bf16.mxu0 0
        %356 = vmatpush2.bf16.msra.mxu0 0
        %357 = vmatprep.mubr.bf16.mxu0 0
        %358 = vmatmul.mubr.bf16.gmra.mxu0 %v320
        %v359 = vpop.f32.mrf.mxu0
        %v360 = vadd.f32 %v251, %v359
        %v361 = vpop.f32.mrf.mxu0
        %v362 = vadd.f32 %v251, %v361
        %v363 = vpop.f32.mrf.mxu0
        %v364 = vadd.f32 %v256, %v363
        %v365 = vpop.f32.mrf.mxu0
        %v366 = vadd.f32 %v256, %v365
        %367 = vmatprep.mubr.bf16.mxu0 0
        %368 = vmatmul.mubr.bf16.gmra.mxu0 %v323
        %v369 = vpop.f32.mrf.mxu0
        %v370 = vadd.f32 %v261, %v369
        %v371 = vpop.f32.mrf.mxu0
        %v372 = vadd.f32 %v261, %v371
        %v373 = vpop.f32.mrf.mxu0
        %v374 = vadd.f32 %v266, %v373
        %v375 = vpop.f32.mrf.mxu0
        %v376 = vadd.f32 %v266, %v375
        %377 = vdwg.mxu0
        %v378 = vmul.f32 %v360, %v360
        %v379 = vmul.f32 %v362, %v362
        %v380 = vmul.f32 %v364, %v364
        %v381 = vmul.f32 %v366, %v366
        %v382 = vmul.f32 %v370, %v370
        %v383 = vmul.f32 %v372, %v372
        %v384 = vmul.f32 %v374, %v374
        %v385 = vmul.f32 %v376, %v376
        %v386 = vmul.f32 %v360, %v378
        %v387 = vmul.f32 %v362, %v379
        %v388 = vmul.f32 %v364, %v380
        %v389 = vmul.f32 %v366, %v381
        %v390 = vmul.f32 %v370, %v382
        %v391 = vmul.f32 %v372, %v383
        %v392 = vmul.f32 %v374, %v384
        %v393 = vmul.f32 %v376, %v385
        %v394 = vmul.f32 %v386, 0.044715
        %v395 = vmul.f32 %v387, 0.044715
        %v396 = vmul.f32 %v388, 0.044715
        %v397 = vmul.f32 %v389, 0.044715
        %v398 = vmul.f32 %v390, 0.044715
        %v399 = vmul.f32 %v391, 0.044715
        %v400 = vmul.f32 %v392, 0.044715
        %v401 = vmul.f32 %v393, 0.044715
        %v402 = vadd.f32 %v360, %v394
        %v403 = vadd.f32 %v362, %v395
        %v404 = vadd.f32 %v364, %v396
        %v405 = vadd.f32 %v366, %v397
        %v406 = vadd.f32 %v370, %v398
        %v407 = vadd.f32 %v372, %v399
        %v408 = vadd.f32 %v374, %v400
        %v409 = vadd.f32 %v376, %v401
        %v410 = vmul.f32 %v402, 0.7978846
        %v411 = vmul.f32 %v403, 0.7978846
        %v412 = vmul.f32 %v404, 0.7978846
        %v413 = vmul.f32 %v405, 0.7978846
        %v414 = vmul.f32 %v406, 0.7978846
        %v415 = vmul.f32 %v407, 0.7978846
        %v416 = vmul.f32 %v408, 0.7978846
        %v417 = vmul.f32 %v409, 0.7978846
        %v418 = vtanh.pop %v410
        %v419 = vtanh.pop %v411
        %v420 = vtanh.pop %v412
        %v421 = vtanh.pop %v413
        %v422 = vtanh.pop %v414
        %v423 = vtanh.pop %v415
        %v424 = vtanh.pop %v416
        %v425 = vtanh.pop %v417
        %v426 = vadd.f32 %v418, 1.0
        %v427 = vadd.f32 %v419, 1.0
        %v428 = vadd.f32 %v420, 1.0
        %v429 = vadd.f32 %v421, 1.0
        %v430 = vadd.f32 %v422, 1.0
        %v431 = vadd.f32 %v423, 1.0
        %v432 = vadd.f32 %v424, 1.0
        %v433 = vadd.f32 %v425, 1.0
        %v434 = vmul.f32 %v426, 0.5
        %v435 = vmul.f32 %v427, 0.5
        %v436 = vmul.f32 %v428, 0.5
        %v437 = vmul.f32 %v429, 0.5
        %v438 = vmul.f32 %v430, 0.5
        %v439 = vmul.f32 %v431, 0.5
        %v440 = vmul.f32 %v432, 0.5
        %v441 = vmul.f32 %v433, 0.5
        %v442 = vmul.f32 %v360, %v434
        %v443 = vmul.f32 %v362, %v435
        %v444 = vmul.f32 %v364, %v436
        %v445 = vmul.f32 %v366, %v437
        %v446 = vmul.f32 %v370, %v438
        %v447 = vmul.f32 %v372, %v439
        %v448 = vmul.f32 %v374, %v440
        %v449 = vmul.f32 %v376, %v441
        %450 = vst [vmem:[%s228] sm:$0xff] %v442
        %451 = vst [vmem:[%s228 + $0x8] sm:$0xff] %v443
        %452 = vst [vmem:[%s228 + $0x10] sm:$0xff] %v444
        %453 = vst [vmem:[%s228 + $0x18] sm:$0xff] %v445
        %454 = vst [vmem:[%s228 + $0x20] sm:$0xff] %v446
        %455 = vst [vmem:[%s228 + $0x28] sm:$0xff] %v447
        %456 = vst [vmem:[%s228 + $0x30] sm:$0xff] %v448
        %457 = vst [vmem:[%s228 + $0x38] sm:$0xff] %v449
        %s458 = sand.u32 %s90, 1
        %s459 = sand.u32 %s90, 1
        %s460 = smul.addr %s459, 64
        %s461 = scalar_lea.vmem [#allocation3], %s460
        // Predicated region
        $region71: #{decoder_forward.9} parent=65 // pred_check
          %p462 = pneg %p100
        $region72: #{decoder_forward.9} parent=65 // pred_check_branch
          %464 = sbr.rel (%p462) target = $region74
        $region73: #{decoder_forward.9} parent=65 // pred_region
          %s465 = smul.u32 2, %s14
          %s466 = smul.addr %s465, 8
          %s467 = scalar_lea.vmem %s3, %s466
          // Predicated region
          $region75: #{decoder_forward.9} parent=73 // pred_check
            _
          $region76: #{decoder_forward.9} parent=73 // pred_check_branch
            %469 = sbr.rel (0) target = $region78
          $region77: #{decoder_forward.9} parent=73 // pred_region
            // Predicated region
            $region79: #{decoder_forward.9} parent=77 // pred_check
              _
            $region80: #{decoder_forward.9} parent=77 // pred_check_branch
              %471 = sbr.rel (0) target = $region82
            $region81: #{decoder_forward.9} parent=77 // pred_region
              loop: start=0, step=1, limit=1
              $region83: #{decoder_forward.9} parent=81 // loop_pre_header
                _
              $region84: #{decoder_forward.9} parent=81 // loop_header
                %s473 = sphi 0, %s477
                %p474 = scmp.ge.s32.totalorder %s473, 1
                %s478 = sphi %s461, %s461
                %s479 = sphi %s467, %s467
              $region85: #{decoder_forward.9} parent=81 // loop_header_branch
                %476 = sbr.rel (%p474) target = $region89
              $region86: #{decoder_forward.9} parent=81 // loop_body
                %v480 = vld [vmem:[%s478] sm:$0xff]
                %481 = vst [vmem:[%s479] sm:$0xff] %v480
                %v482 = vld [vmem:[%s478 + $0x8] sm:$0xff]
                %483 = vst [vmem:[%s479 + $0x8] sm:$0xff] %v482
                %v484 = vld [vmem:[%s478 + $0x10] sm:$0xff]
                %485 = vst [vmem:[%s479 + $0x20] sm:$0xff] %v484
                %v486 = vld [vmem:[%s478 + $0x18] sm:$0xff]
                %487 = vst [vmem:[%s479 + $0x28] sm:$0xff] %v486
                %v488 = vld [vmem:[%s478 + $0x20] sm:$0xff]
                %489 = vst [vmem:[%s479 + $0x40] sm:$0xff] %v488
                %v490 = vld [vmem:[%s478 + $0x28] sm:$0xff]
                %491 = vst [vmem:[%s479 + $0x48] sm:$0xff] %v490
                %v492 = vld [vmem:[%s478 + $0x30] sm:$0xff]
                %493 = vst [vmem:[%s479 + $0x60] sm:$0xff] %v492
                %v494 = vld [vmem:[%s478 + $0x38] sm:$0xff]
                %495 = vst [vmem:[%s479 + $0x68] sm:$0xff] %v494
              $region87: #{decoder_forward.9} parent=81 // loop_footer
                %s477 = sadd.s32 1, %s473
              $region88: #{decoder_forward.9} parent=81 // loop_footer_branch
                %472 = sbr.rel target = $region84
              $region89: #{decoder_forward.9} parent=81 // loop_exit
                _
            $region82: #{decoder_forward.9} parent=77 // pred_fallthru
              _
            // Predicated region
            $region90: #{decoder_forward.9} parent=77 // pred_check
              _
            $region91: #{decoder_forward.9} parent=77 // pred_check_branch
              %497 = sbr.rel target = $region93
            $region92: #{decoder_forward.9} parent=77 // pred_region
              _
            $region93: #{decoder_forward.9} parent=77 // pred_fallthru
              _
          $region78: #{decoder_forward.9} parent=73 // pred_fallthru
            _
          %498 = vnop
        $region74: #{decoder_forward.9} parent=65 // pred_fallthru
          _
      $region66: #{decoder_forward.9} parent=5 // pred_fallthru
        _
      %p499 = scmp.le.s32.totalorder 2, %s9
      // Predicated region
      $region94: #{decoder_forward.9} parent=5 // pred_check
        %p500 = pneg %p499
      $region95: #{decoder_forward.9} parent=5 // pred_check_branch
        %502 = sbr.rel (%p500) target = $region97
      $region96: #{decoder_forward.9} parent=5 // pred_region
        %s503 = ssub.s32 %s9, 2
        // Predicated region
        $region98: #{decoder_forward.9} parent=96 // pred_check
          %p504 = pneg %p106
        $region99: #{decoder_forward.9} parent=96 // pred_check_branch
          %506 = sbr.rel (%p504) target = $region101
        $region100: #{decoder_forward.9} parent=96 // pred_region
          %s507 = sand.u32 %s91, 1
          %s508 = sand.u32 %s91, 1
          %s509 = smul.addr %s508, 64
          %s510 = scalar_lea.vmem [#allocation3], %s509
        $region101: #{decoder_forward.9} parent=96 // pred_fallthru
          _
      $region97: #{decoder_forward.9} parent=5 // pred_fallthru
        _
    $region6: #{decoder_forward.9} parent=1 // loop_footer
      %s13 = sadd.s32 1, %s9
    $region7: #{decoder_forward.9} parent=1 // loop_footer_branch
      %8 = sbr.rel target = $region3
    $region8: #{decoder_forward.9} parent=1 // loop_exit
      _

// kernel: decoder_forward.10
$region0: #{decoder_forward.10}
  #allocation0 [shape = 'u32[]', space=smem, size = 0x4, offset = 0x4, fixed_abs, tag = 'smem constant byte address 0x4 - core index']
  #allocation1 [shape = 'u32[144,128]{1,0:T(1,128)}', space=vmem, size = 0x12000, scoped, tag = 'internal scratch']
  %s0 = inlined_call_operand.vmem [shape: bf16[8,72], index: 0, kind: input, shape index: {}]
  %s1 = inlined_call_operand.vmem [shape: bf16[72,2048], index: 1, kind: input, shape index: {}]
  %s2 = inlined_call_operand.vmem [shape: f32[8,1], index: 2, kind: input, shape index: {}]
  %s3 = inlined_call_operand.vmem [shape: f32[8,2048], index: 3, kind: output, shape index: {}]
  %s4 = sld [smem:[#allocation0]]
  $region68: #{decoder_forward.10} parent=0
    _
  %s6 = ssub.s32 1, %s4
  %s7 = scalar_select 0, %s6, %s4
  $region1: #{decoder_forward.10} parent=0
    #allocation2 [shape = 'u8[147456]{0}', space=vmem, size = 0x24000, scoped, tag = 'input window, operand 1']
    loop: start=0, step=1, limit=6
    $region2: #{decoder_forward.10} parent=1 // loop_pre_header
      _
    $region3: #{decoder_forward.10} parent=1 // loop_header
      %s9 = sphi 0, %s13
      %p10 = scmp.ge.s32.totalorder %s9, 6
      %s17 = sphi 0, %s17
      %s19 = sphi 0, %s17
      %s20 = sphi 0, %s19
      %s34 = sphi 0, %s20
      %s40 = sphi 0, %s42
      %s43 = sphi 0, %s40
      %s44 = sphi 0, %s43
      %s60 = sphi 0, %s44
      %s64 = sphi 0, %s64
      %s66 = sphi 0, %s64
      %s67 = sphi 0, %s66
      %s81 = sphi 0, %s67
      %s87 = sphi 0, %s89
      %s90 = sphi 0, %s87
      %s91 = sphi 0, %s90
      %s107 = sphi 0, %s91
    $region4: #{decoder_forward.10} parent=1 // loop_header_branch
      %12 = sbr.rel (%p10) target = $region8
    $region5: #{decoder_forward.10} parent=1 // loop_body
      %s14 = ssub.s32 %s9, 1
      %s15 = ssub.s32 %s9, 2
      %s16 = sadd.s32 %s9, 1
      %s18 = sadd.s32 %s17, 1
      %p21 = scmp.eq.s32.totalorder %s9, 3
      %p22 = scmp.ne.s32.totalorder %s17, %s19
      %p23 = scmp.eq.s32.totalorder %s9, 0
      %p24 = por %p22, %p23
      %p25 = scmp.ne.s32.totalorder %s17, %s19
      %p26 = scmp.eq.s32.totalorder %s14, 3
      %p27 = por %p25, %p26
      %p28 = scmp.ne.s32.totalorder %s19, %s20
      %p29 = scmp.eq.s32.totalorder %s14, 0
      %p30 = por %p28, %p29
      %p31 = scmp.ne.s32.totalorder %s19, %s20
      %p32 = scmp.eq.s32.totalorder %s15, 3
      %p33 = por %p31, %p32
      %p35 = scmp.ne.s32.totalorder %s20, %s34
      %p36 = scmp.eq.s32.totalorder %s15, 0
      %p37 = por %p35, %p36
      %s38 = ssub.s32 %s9, %s16
      %p39 = scmp.eq.s32.totalorder %s38, 0
      %s41 = sadd.s32 %s40, 1
      %s42 = scalar_select %p39, %s40, %s41
      %p45 = pneg %p39
      %p46 = scmp.eq.s32.totalorder %s9, 3
      %p47 = por %p45, %p46
      %p48 = scmp.ne.s32.totalorder %s40, %s43
      %p49 = scmp.eq.s32.totalorder %s9, 0
      %p50 = por %p48, %p49
      %p51 = scmp.ne.s32.totalorder %s40, %s43
      %p52 = scmp.eq.s32.totalorder %s14, 3
      %p53 = por %p51, %p52
      %p54 = scmp.ne.s32.totalorder %s43, %s44
      %p55 = scmp.eq.s32.totalorder %s14, 0
      %p56 = por %p54, %p55
      %p57 = scmp.ne.s32.totalorder %s43, %s44
      %p58 = scmp.eq.s32.totalorder %s15, 3
      %p59 = por %p57, %p58
      %p61 = scmp.ne.s32.totalorder %s44, %s60
      %p62 = scmp.eq.s32.totalorder %s15, 0
      %p63 = por %p61, %p62
      %s65 = sadd.s32 %s64, 1
      %p68 = scmp.eq.s32.totalorder %s9, 3
      %p69 = scmp.ne.s32.totalorder %s64, %s66
      %p70 = scmp.eq.s32.totalorder %s9, 0
      %p71 = por %p69, %p70
      %p72 = scmp.ne.s32.totalorder %s64, %s66
      %p73 = scmp.eq.s32.totalorder %s14, 3
      %p74 = por %p72, %p73
      %p75 = scmp.ne.s32.totalorder %s66, %s67
      %p76 = scmp.eq.s32.totalorder %s14, 0
      %p77 = por %p75, %p76
      %p78 = scmp.ne.s32.totalorder %s66, %s67
      %p79 = scmp.eq.s32.totalorder %s15, 3
      %p80 = por %p78, %p79
      %p82 = scmp.ne.s32.totalorder %s67, %s81
      %p83 = scmp.eq.s32.totalorder %s15, 0
      %p84 = por %p82, %p83
      %s85 = ssub.s32 %s9, %s16
      %p86 = scmp.eq.s32.totalorder %s85, 0
      %s88 = sadd.s32 %s87, 1
      %s89 = scalar_select %p86, %s87, %s88
      %p92 = pneg %p86
      %p93 = scmp.eq.s32.totalorder %s9, 3
      %p94 = por %p92, %p93
      %p95 = scmp.ne.s32.totalorder %s87, %s90
      %p96 = scmp.eq.s32.totalorder %s9, 0
      %p97 = por %p95, %p96
      %p98 = scmp.ne.s32.totalorder %s87, %s90
      %p99 = scmp.eq.s32.totalorder %s14, 3
      %p100 = por %p98, %p99
      %p101 = scmp.ne.s32.totalorder %s90, %s91
      %p102 = scmp.eq.s32.totalorder %s14, 0
      %p103 = por %p101, %p102
      %p104 = scmp.ne.s32.totalorder %s90, %s91
      %p105 = scmp.eq.s32.totalorder %s15, 3
      %p106 = por %p104, %p105
      %p108 = scmp.ne.s32.totalorder %s91, %s107
      %p109 = scmp.eq.s32.totalorder %s15, 0
      %p110 = por %p108, %p109
      %p111 = scmp.le.s32.totalorder 1, %s9
      %p112 = scmp.lt.s32.totalorder %s9, 5
      %p113 = pnand %p111, %p112
      %p114 = pneg %p113
      // Predicated region
      $region9: #{decoder_forward.10} parent=5 // pred_check
        _
      $region10: #{decoder_forward.10} parent=5 // pred_check_branch
        %116 = sbr.rel (%p113) target = $region12
      $region11: #{decoder_forward.10} parent=5 // pred_region
        %s117 = ssub.s32 %s9, 1
        // Predicated region
        $region13: #{decoder_forward.10} parent=11 // pred_check
          %p118 = pneg %p30
        $region14: #{decoder_forward.10} parent=11 // pred_check_branch
          %120 = sbr.rel (%p118) target = $region16
        $region15: #{decoder_forward.10} parent=11 // pred_region
          _
        $region16: #{decoder_forward.10} parent=11 // pred_fallthru
          _
        // Predicated region
        $region17: #{decoder_forward.10} parent=11 // pred_check
          %p121 = pneg %p77
        $region18: #{decoder_forward.10} parent=11 // pred_check_branch
          %123 = sbr.rel (%p121) target = $region20
        $region19: #{decoder_forward.10} parent=11 // pred_region
          _
        $region20: #{decoder_forward.10} parent=11 // pred_fallthru
          _
      $region12: #{decoder_forward.10} parent=5 // pred_fallthru
        _
      %p124 = scmp.lt.s32.totalorder %s9, 4
      // Predicated region
      $region21: #{decoder_forward.10} parent=5 // pred_check
        %p125 = pneg %p124
      $region22: #{decoder_forward.10} parent=5 // pred_check_branch
        %127 = sbr.rel (%p125) target = $region24
      $region23: #{decoder_forward.10} parent=5 // pred_region
        // Predicated region
        $region25: #{decoder_forward.10} parent=23 // pred_check
          %p128 = pneg %p50
        $region26: #{decoder_forward.10} parent=23 // pred_check_branch
          %130 = sbr.rel (%p128) target = $region28
        $region27: #{decoder_forward.10} parent=23 // pred_region
          %s131 = sand.u32 %s40, 1
          %s132 = sand.u32 %s40, 1
          %s133 = smul.addr %s132, 144
          %s134 = scalar_lea.vmem [#allocation2], %s133
          %s135 = smul.u32 4, %s9
          %s136 = smul.addr %s135, 4
          %s137 = scalar_lea.vmem %s1, %s136
          // Predicated region
          $region29: #{decoder_forward.10} parent=27 // pred_check
            _
          $region30: #{decoder_forward.10} parent=27 // pred_check_branch
            %139 = sbr.rel (0) target = $region32
          $region31: #{decoder_forward.10} parent=27 // pred_region
            // Predicated region
            $region33: #{decoder_forward.10} parent=31 // pred_check
              _
            $region34: #{decoder_forward.10} parent=31 // pred_check_branch
              %141 = sbr.rel (0) target = $region36
            $region35: #{decoder_forward.10} parent=31 // pred_region
              loop: start=0, step=1, limit=1
              $region37: #{decoder_forward.10} parent=35 // loop_pre_header
                _
              $region38: #{decoder_forward.10} parent=35 // loop_header
                %s143 = sphi 0, %s147
                %p144 = scmp.ge.s32.totalorder %s143, 1
                %s148 = sphi %s137, %s137
                %s149 = sphi %s134, %s134
              $region39: #{decoder_forward.10} parent=35 // loop_header_branch
                %146 = sbr.rel (%p144) target = $region43
              $region40: #{decoder_forward.10} parent=35 // loop_body
                %v150 = vld [vmem:[%s148] sm:$0xff]
                %151 = vst [vmem:[%s149] sm:$0xff] %v150
                %v152 = vld [vmem:[%s148 + $0x8] sm:$0xff]
                %153 = vst [vmem:[%s149 + $0x8] sm:$0xff] %v152
                %v154 = vld [vmem:[%s148 + $0x40] sm:$0xff]
                %155 = vst [vmem:[%s149 + $0x10] sm:$0xff] %v154
                %v156 = vld [vmem:[%s148 + $0x48] sm:$0xff]
                %157 = vst [vmem:[%s149 + $0x18] sm:$0xff] %v156
                %v158 = vld [vmem:[%s148 + $0x80] sm:$0xff]
                %159 = vst [vmem:[%s149 + $0x20] sm:$0xff] %v158
                %v160 = vld [vmem:[%s148 + $0x88] sm:$0xff]
                %161 = vst [vmem:[%s149 + $0x28] sm:$0xff] %v160
                %v162 = vld [vmem:[%s148 + $0xc0] sm:$0xff]
                %163 = vst [vmem:[%s149 + $0x30] sm:$0xff] %v162
                %v164 = vld [vmem:[%s148 + $0xc8] sm:$0xff]
                %165 = vst [vmem:[%s149 + $0x38] sm:$0xff] %v164
                %v166 = vld [vmem:[%s148 + $0x100] sm:$0xff]
                %167 = vst [vmem:[%s149 + $0x40] sm:$0xff] %v166
                %v168 = vld [vmem:[%s148 + $0x108] sm:$0xff]
                %169 = vst [vmem:[%s149 + $0x48] sm:$0xff] %v168
                %v170 = vld [vmem:[%s148 + $0x140] sm:$0xff]
                %171 = vst [vmem:[%s149 + $0x50] sm:$0xff] %v170
                %v172 = vld [vmem:[%s148 + $0x148] sm:$0xff]
                %173 = vst [vmem:[%s149 + $0x58] sm:$0xff] %v172
                %v174 = vld [vmem:[%s148 + $0x180] sm:$0xff]
                %175 = vst [vmem:[%s149 + $0x60] sm:$0xff] %v174
                %v176 = vld [vmem:[%s148 + $0x188] sm:$0xff]
                %177 = vst [vmem:[%s149 + $0x68] sm:$0xff] %v176
                %v178 = vld [vmem:[%s148 + $0x1c0] sm:$0xff]
                %179 = vst [vmem:[%s149 + $0x70] sm:$0xff] %v178
                %v180 = vld [vmem:[%s148 + $0x1c8] sm:$0xff]
                %181 = vst [vmem:[%s149 + $0x78] sm:$0xff] %v180
                %v182 = vld [vmem:[%s148 + $0x200] sm:$0xff]
                %183 = vst [vmem:[%s149 + $0x80] sm:$0xff] %v182
                %v184 = vld [vmem:[%s148 + $0x208] sm:$0xff]
                %185 = vst [vmem:[%s149 + $0x88] sm:$0xff] %v184
              $region41: #{decoder_forward.10} parent=35 // loop_footer
                %s147 = sadd.s32 1, %s143
              $region42: #{decoder_forward.10} parent=35 // loop_footer_branch
                %142 = sbr.rel target = $region38
              $region43: #{decoder_forward.10} parent=35 // loop_exit
                _
            $region36: #{decoder_forward.10} parent=31 // pred_fallthru
              _
            // Predicated region
            $region44: #{decoder_forward.10} parent=31 // pred_check
              _
            $region45: #{decoder_forward.10} parent=31 // pred_check_branch
              %187 = sbr.rel target = $region47
            $region46: #{decoder_forward.10} parent=31 // pred_region
              _
            $region47: #{decoder_forward.10} parent=31 // pred_fallthru
              _
          $region32: #{decoder_forward.10} parent=27 // pred_fallthru
            _
          %188 = vnop
        $region28: #{decoder_forward.10} parent=23 // pred_fallthru
          _
      $region24: #{decoder_forward.10} parent=5 // pred_fallthru
        _
      %p189 = scmp.le.s32.totalorder 1, %s9
      %p190 = scmp.lt.s32.totalorder %s9, 5
      %p191 = pnand %p189, %p190
      %p192 = pneg %p191
      // Predicated region
      $region48: #{decoder_forward.10} parent=5 // pred_check
        _
      $region49: #{decoder_forward.10} parent=5 // pred_check_branch
        %194 = sbr.rel (%p191) target = $region51
      $region50: #{decoder_forward.10} parent=5 // pred_region
        %s195 = ssub.s32 %s9, 1
        %s196 = sand.u32 %s43, 1
        %s197 = sand.u32 %s43, 1
        %s198 = smul.addr %s197, 144
        %s199 = scalar_lea.vmem [#allocation2], %s198
        // Predicated region
        $region52: #{decoder_forward.10} parent=50 // pred_check
          %p200 = pneg %p56
        $region53: #{decoder_forward.10} parent=50 // pred_check_branch
          %202 = sbr.rel (%p200) target = $region55
        $region54: #{decoder_forward.10} parent=50 // pred_region
          _
        $region55: #{decoder_forward.10} parent=50 // pred_fallthru
          _
        %p203 = pneg %p30
        %p204 = pneg %p27
        %s205 = sand.u32 %s43, 1
        %s206 = sand.u32 %s43, 1
        %s207 = smul.addr %s206, 144
        %s208 = scalar_lea.vmem [#allocation2], %s207
        %p209 = pneg %p56
        %p210 = pneg %p53
        %p211 = pneg %p77
        %p212 = pneg %p74
        %p213 = pneg %p103
        %p214 = pneg %p100
        %s215 = smul.u32 4, %s14
        %p216 = scmp.lt.s32.totalorder %s215, 15
        %s217 = scalar_select %p216, %s215, 15
        %s218 = smul.addr %s217, 8
        %s219 = scalar_lea.vmem %s3, %s218
        %s220 = smul.u32 4, %s14
        %s221 = smul.u32 4, %s14
        %p222 = scmp.lt.s32.totalorder %s221, 15
        %s223 = scalar_select %p222, %s221, 15
        %s224 = smul.addr %s223, 8
        %s225 = scalar_lea.vmem %s3, %s224
        %s226 = smul.u32 4, %s14
        %v228 = vld [vmem:[%s0] sm:$0xf]
        %v229 = vld [vmem:[%s199] sm:$0xff]
        %v230 = vld [vmem:[%s199 + $0x8] sm:$0xff]
        %v231 = vld [vmem:[%s199 + $0x10] sm:$0xff]
        %v232 = vld [vmem:[%s199 + $0x18] sm:$0xff]
        %v233 = vld [vmem:[%s199 + $0x20] sm:$0xff]
        %v234 = vld [vmem:[%s199 + $0x28] sm:$0xff]
        %v235 = vld [vmem:[%s199 + $0x30] sm:$0xff]
        %v236 = vld [vmem:[%s199 + $0x38] sm:$0xff]
        %v237 = vld [vmem:[%s199 + $0x40] sm:$0xff]
        %v238 = vld [vmem:[%s199 + $0x48] sm:$0xff]
        %v239 = vld [vmem:[%s199 + $0x50] sm:$0xff]
        %v240 = vld [vmem:[%s199 + $0x58] sm:$0xff]
        %v241 = vld [vmem:[%s199 + $0x60] sm:$0xff]
        %v242 = vld [vmem:[%s199 + $0x68] sm:$0xff]
        %v243 = vld [vmem:[%s199 + $0x70] sm:$0xff]
        %v244 = vld [vmem:[%s199 + $0x78] sm:$0xff]
        %v245 = vld [vmem:[%s199 + $0x80] sm:$0xff]
        %v246 = vld [vmem:[%s199 + $0x88] sm:$0xff]
        %v247 = vld [vmem:[%s2] sm:$0xff]
        %249 = vset.pattern.permute.xlu0 0
        %250 = vperm.xlu0 %249, %v247
        %v251 = vpop.permute.xlu0 %250
        %v271 = vunpack.c.l.b16 %v229
        %v272 = vunpack.c.h.b16 %v229
        %v273 = vunpack.c.l.b16 %v230
        %v274 = vunpack.c.h.b16 %v230
        %v275 = vunpack.c.l.b16 %v231
        %v276 = vunpack.c.h.b16 %v231
        %v277 = vunpack.c.l.b16 %v232
        %v278 = vunpack.c.h.b16 %v232
        %v279 = vunpack.c.l.b16 %v233
        %v280 = vunpack.c.h.b16 %v233
        %v281 = vunpack.c.l.b16 %v234
        %v282 = vunpack.c.h.b16 %v234
        %v283 = vunpack.c.l.b16 %v235
        %v284 = vunpack.c.h.b16 %v235
        %v285 = vunpack.c.l.b16 %v236
        %v286 = vunpack.c.h.b16 %v236
        %v287 = vunpack.c.l.b16 %v237
        %v288 = vunpack.c.h.b16 %v237
        %v289 = vunpack.c.l.b16 %v238
        %v290 = vunpack.c.h.b16 %v238
        %v291 = vunpack.c.l.b16 %v239
        %v292 = vunpack.c.h.b16 %v239
        %v293 = vunpack.c.l.b16 %v240
        %v294 = vunpack.c.h.b16 %v240
        %v295 = vunpack.c.l.b16 %v241
        %v296 = vunpack.c.h.b16 %v241
        %v297 = vunpack.c.l.b16 %v242
        %v298 = vunpack.c.h.b16 %v242
        %v299 = vunpack.c.l.b16 %v243
        %v300 = vunpack.c.h.b16 %v243
        %v301 = vunpack.c.l.b16 %v244
        %v302 = vunpack.c.h.b16 %v244
        %v303 = vunpack.c.l.b16 %v245
        %v304 = vunpack.c.h.b16 %v245
        %v305 = vunpack.c.l.b16 %v246
        %v306 = vunpack.c.h.b16 %v246
        %v307 = vpack.c.b16 %v275, %v271
        %v308 = vpack.c.b16 %v276, %v272
        %v309 = vpack.c.b16 %v277, %v273
        %v310 = vpack.c.b16 %v278, %v274
        %v311 = vpack.c.b16 %v283, %v279
        %v312 = vpack.c.b16 %v284, %v280
        %v313 = vpack.c.b16 %v285, %v281
        %v314 = vpack.c.b16 %v286, %v282
        %v315 = vpack.c.b16 %v291, %v287
        %v316 = vpack.c.b16 %v292, %v288
        %v317 = vpack.c.b16 %v293, %v289
        %v318 = vpack.c.b16 %v294, %v290
        %v319 = vpack.c.b16 %v299, %v295
        %v320 = vpack.c.b16 %v300, %v296
        %v321 = vpack.c.b16 %v301, %v297
        %v322 = vpack.c.b16 %v302, %v298
        %v323 = vpack.c.b16 %v303, %v303
        %v324 = vpack.c.b16 %v304, %v304
        %v325 = vpack.c.b16 %v305, %v305
        %v326 = vpack.c.b16 %v306, %v306
        %vm343 = vcmask 588800
        %v345 = vsel %vm343, %v228, 0
        %vm347 = vcmask 1043456
        %v349 = vsel %vm347, %v323, 0
        %v352 = vsel %vm347, %v324, 0
        %v355 = vsel %vm347, %v325, 0
        %v358 = vsel %vm347, %v326, 0
        %360 = vmatprep.subr.bf16.mxu0 0
        %361 = vmatpush1.bf16.msra.mxu0 0
        %362 = vmatprep.subr.bf16.mxu0 0
        %363 = vmatpush1.bf16.msra.mxu0 0
        %364 = vmatprep.subr.bf16.mxu0 0
        %365 = vmatpush1.bf16.msra.mxu0 0
        %366 = vmatprep.subr.bf16.mxu0 %v352
        %367 = vmatpush1.bf16.msra.mxu0 %v349
        %368 = vmatprep.subr.bf16.mxu0 %v320
        %369 = vmatpush1.bf16.msra.mxu0 %v319
        %370 = vmatprep.subr.bf16.mxu0 %v316
        %371 = vmatpush1.bf16.msra.mxu0 %v315
        %372 = vmatprep.subr.bf16.mxu0 %v312
        %373 = vmatpush1.bf16.msra.mxu0 %v311
        %374 = vmatprep.subr.bf16.mxu0 %v308
        %375 = vmatpush1.bf16.msra.mxu0 %v307
        %376 = vmatprep.subr.bf16.mxu0 0
        %377 = vmatpush2.bf16.msra.mxu0 0
        %378 = vmatprep.subr.bf16.mxu0 0
        %379 = vmatpush2.bf16.msra.mxu0 0
        %380 = vmatprep.subr.bf16.mxu0 0
        %381 = vmatpush2.bf16.msra.mxu0 0
        %382 = vmatprep.subr.bf16.mxu0 0
        %383 = vmatpush2.bf16.msra.mxu0 0
        %384 = vmatprep.subr.bf16.mxu0 0
        %385 = vmatpush2.bf16.msra.mxu0 0
        %386 = vmatprep.subr.bf16.mxu0 0
        %387 = vmatpush2.bf16.msra.mxu0 0
        %388 = vmatprep.subr.bf16.mxu0 0
        %389 = vmatpush2.bf16.msra.mxu0 0
        %390 = vmatprep.subr.bf16.mxu0 0
        %391 = vmatpush2.bf16.msra.mxu0 0
        %392 = vmatprep.mubr.bf16.mxu0 0
        %393 = vmatmul.mubr.bf16.gmra.mxu0 %v345
        %v394 = vpop.f32.mrf.mxu0
        %v395 = vadd.f32 %v251, %v394
        %v396 = vpop.f32.mrf.mxu0
        %v397 = vadd.f32 %v251, %v396
        %v398 = vpop.f32.mrf.mxu0
        %v399 = vpop.f32.mrf.mxu0
        %400 = vdwg.mxu0
        %401 = vmatprep.subr.bf16.mxu0 0
        %402 = vmatpush1.bf16.msra.mxu0 0
        %403 = vmatprep.subr.bf16.mxu0 0
        %404 = vmatpush1.bf16.msra.mxu0 0
        %405 = vmatprep.subr.bf16.mxu0 0
        %406 = vmatpush1.bf16.msra.mxu0 0
        %407 = vmatprep.subr.bf16.mxu0 %v358
        %408 = vmatpush1.bf16.msra.mxu0 %v355
        %409 = vmatprep.subr.bf16.mxu0 %v322
        %410 = vmatpush1.bf16.msra.mxu0 %v321
        %411 = vmatprep.subr.bf16.mxu0 %v318
        %412 = vmatpush1.bf16.msra.mxu0 %v317
        %413 = vmatprep.subr.bf16.mxu0 %v314
        %414 = vmatpush1.bf16.msra.mxu0 %v313
        %415 = vmatprep.subr.bf16.mxu0 %v310
        %416 = vmatpush1.bf16.msra.mxu0 %v309
        %417 = vmatprep.subr.bf16.mxu0 0
        %418 = vmatpush2.bf16.msra.mxu0 0
        %419 = vmatprep.subr.bf16.mxu0 0
        %420 = vmatpush2.bf16.msra.mxu0 0
        %421 = vmatprep.subr.bf16.mxu0 0
        %422 = vmatpush2.bf16.msra.mxu0 0
        %423 = vmatprep.subr.bf16.mxu0 0
        %424 = vmatpush2.bf16.msra.mxu0 0
        %425 = vmatprep.subr.bf16.mxu0 0
        %426 = vmatpush2.bf16.msra.mxu0 0
        %427 = vmatprep.subr.bf16.mxu0 0
        %428 = vmatpush2.bf16.msra.mxu0 0
        %429 = vmatprep.subr.bf16.mxu0 0
        %430 = vmatpush2.bf16.msra.mxu0 0
        %431 = vmatprep.subr.bf16.mxu0 0
        %432 = vmatpush2.bf16.msra.mxu0 0
        %433 = vmatprep.mubr.bf16.mxu0 0
        %434 = vmatmul.mubr.bf16.gmra.mxu0 %v345
        %v435 = vpop.f32.mrf.mxu0
        %v436 = vadd.f32 %v251, %v435
        %v437 = vpop.f32.mrf.mxu0
        %v438 = vadd.f32 %v251, %v437
        %v439 = vpop.f32.mrf.mxu0
        %v440 = vpop.f32.mrf.mxu0
        %441 = vdwg.mxu0
        %v442 = vmul.f32 %v395, %v395
        %v443 = vmul.f32 %v397, %v397
        %v444 = vmul.f32 %v436, %v436
        %v445 = vmul.f32 %v438, %v438
        %v446 = vmul.f32 %v395, %v442
        %v447 = vmul.f32 %v397, %v443
        %v448 = vmul.f32 %v436, %v444
        %v449 = vmul.f32 %v438, %v445
        %v450 = vmul.f32 %v446, 0.044715
        %v451 = vmul.f32 %v447, 0.044715
        %v452 = vmul.f32 %v448, 0.044715
        %v453 = vmul.f32 %v449, 0.044715
        %v454 = vadd.f32 %v395, %v450
        %v455 = vadd.f32 %v397, %v451
        %v456 = vadd.f32 %v436, %v452
        %v457 = vadd.f32 %v438, %v453
        %v458 = vmul.f32 %v454, 0.7978846
        %v459 = vmul.f32 %v455, 0.7978846
        %v460 = vmul.f32 %v456, 0.7978846
        %v461 = vmul.f32 %v457, 0.7978846
        %v462 = vtanh.pop %v458
        %v463 = vtanh.pop %v459
        %v464 = vtanh.pop %v460
        %v465 = vtanh.pop %v461
        %v466 = vadd.f32 %v462, 1.0
        %v467 = vadd.f32 %v463, 1.0
        %v468 = vadd.f32 %v464, 1.0
        %v469 = vadd.f32 %v465, 1.0
        %v470 = vmul.f32 %v466, 0.5
        %v471 = vmul.f32 %v467, 0.5
        %v472 = vmul.f32 %v468, 0.5
        %v473 = vmul.f32 %v469, 0.5
        %v474 = vmul.f32 %v395, %v470
        %v475 = vmul.f32 %v397, %v471
        %v476 = vmul.f32 %v436, %v472
        %v477 = vmul.f32 %v438, %v473
        %478 = vst [vmem:[%s225] sm:$0xff] %v474
        %479 = vst [vmem:[%s225 + $0x8] sm:$0xff] %v475
        %480 = vst [vmem:[%s225 + $0x10] sm:$0xff] %v476
        %481 = vst [vmem:[%s225 + $0x18] sm:$0xff] %v477
        %s482 = smul.u32 4, %s14
        %p483 = scmp.lt.s32.totalorder %s482, 15
        %s484 = scalar_select %p483, %s482, 15
        %s485 = smul.addr %s484, 8
        %s486 = scalar_lea.vmem %s3, %s485
        // Predicated region
        $region56: #{decoder_forward.10} parent=50 // pred_check
          %p487 = pneg %p100
        $region57: #{decoder_forward.10} parent=50 // pred_check_branch
          %489 = sbr.rel (%p487) target = $region59
        $region58: #{decoder_forward.10} parent=50 // pred_region
          %s490 = smul.u32 4, %s14
        $region59: #{decoder_forward.10} parent=50 // pred_fallthru
          _
      $region51: #{decoder_forward.10} parent=5 // pred_fallthru
        _
      %p491 = scmp.le.s32.totalorder 2, %s9
      // Predicated region
      $region60: #{decoder_forward.10} parent=5 // pred_check
        %p492 = pneg %p491
      $region61: #{decoder_forward.10} parent=5 // pred_check_branch
        %494 = sbr.rel (%p492) target = $region63
      $region62: #{decoder_forward.10} parent=5 // pred_region
        %s495 = ssub.s32 %s9, 2
        // Predicated region
        $region64: #{decoder_forward.10} parent=62 // pred_check
          %p496 = pneg %p106
        $region65: #{decoder_forward.10} parent=62 // pred_check_branch
          %498 = sbr.rel (%p496) target = $region67
        $region66: #{decoder_forward.10} parent=62 // pred_region
          %s499 = smul.u32 4, %s15
          %p500 = scmp.lt.s32.totalorder %s499, 15
          %s501 = scalar_select %p500, %s499, 15
          %s502 = smul.addr %s501, 8
          %s503 = scalar_lea.vmem %s3, %s502
        $region67: #{decoder_forward.10} parent=62 // pred_fallthru
          _
      $region63: #{decoder_forward.10} parent=5 // pred_fallthru
        _
    $region6: #{decoder_forward.10} parent=1 // loop_footer
      %s13 = sadd.s32 1, %s9
    $region7: #{decoder_forward.10} parent=1 // loop_footer_branch
      %8 = sbr.rel target = $region3
    $region8: #{decoder_forward.10} parent=1 // loop_exit
      _

// kernel: decoder_forward.11
$region0: #{decoder_forward.11}
  #allocation0 [shape = 'u32[]', space=smem, size = 0x4, offset = 0x4, fixed_abs, tag = 'smem constant byte address 0x4 - core index']
  #allocation1 [shape = 'u32[144,128]{1,0:T(1,128)}', space=vmem, size = 0x12000, scoped, tag = 'internal scratch']
  %s0 = inlined_call_operand.vmem [shape: bf16[12,32], index: 0, kind: input, shape index: {}]
  %s1 = inlined_call_operand.vmem [shape: bf16[32,2048], index: 1, kind: input, shape index: {}]
  %s2 = inlined_call_operand.vmem [shape: f32[12,1], index: 2, kind: input, shape index: {}]
  %s3 = inlined_call_operand.vmem [shape: f32[12,2048], index: 3, kind: output, shape index: {}]
  %s4 = sld [smem:[#allocation0]]
  $region87: #{decoder_forward.11} parent=0
    _
  %s6 = ssub.s32 1, %s4
  %s7 = scalar_select 0, %s6, %s4
  $region1: #{decoder_forward.11} parent=0
    #allocation2 [shape = 'u8[65536]{0}', space=vmem, size = 0x10000, scoped, tag = 'input window, operand 1']
    #allocation3 [shape = 'u8[65536]{0}', space=vmem, size = 0x10000, scoped, tag = 'output window, operand 0']
    loop: start=0, step=1, limit=6
    $region2: #{decoder_forward.11} parent=1 // loop_pre_header
      _
    $region3: #{decoder_forward.11} parent=1 // loop_header
      %s9 = sphi 0, %s13
      %p10 = scmp.ge.s32.totalorder %s9, 6
      %s17 = sphi 0, %s17
      %s19 = sphi 0, %s17
      %s20 = sphi 0, %s19
      %s34 = sphi 0, %s20
      %s40 = sphi 0, %s42
      %s43 = sphi 0, %s40
      %s44 = sphi 0, %s43
      %s60 = sphi 0, %s44
      %s64 = sphi 0, %s64
      %s66 = sphi 0, %s64
      %s67 = sphi 0, %s66
      %s81 = sphi 0, %s67
      %s87 = sphi 0, %s89
      %s90 = sphi 0, %s87
      %s91 = sphi 0, %s90
      %s107 = sphi 0, %s91
    $region4: #{decoder_forward.11} parent=1 // loop_header_branch
      %12 = sbr.rel (%p10) target = $region8
    $region5: #{decoder_forward.11} parent=1 // loop_body
      %s14 = ssub.s32 %s9, 1
      %s15 = ssub.s32 %s9, 2
      %s16 = sadd.s32 %s9, 1
      %s18 = sadd.s32 %s17, 1
      %p21 = scmp.eq.s32.totalorder %s9, 3
      %p22 = scmp.ne.s32.totalorder %s17, %s19
      %p23 = scmp.eq.s32.totalorder %s9, 0
      %p24 = por %p22, %p23
      %p25 = scmp.ne.s32.totalorder %s17, %s19
      %p26 = scmp.eq.s32.totalorder %s14, 3
      %p27 = por %p25, %p26
      %p28 = scmp.ne.s32.totalorder %s19, %s20
      %p29 = scmp.eq.s32.totalorder %s14, 0
      %p30 = por %p28, %p29
      %p31 = scmp.ne.s32.totalorder %s19, %s20
      %p32 = scmp.eq.s32.totalorder %s15, 3
      %p33 = por %p31, %p32
      %p35 = scmp.ne.s32.totalorder %s20, %s34
      %p36 = scmp.eq.s32.totalorder %s15, 0
      %p37 = por %p35, %p36
      %s38 = ssub.s32 %s9, %s16
      %p39 = scmp.eq.s32.totalorder %s38, 0
      %s41 = sadd.s32 %s40, 1
      %s42 = scalar_select %p39, %s40, %s41
      %p45 = pneg %p39
      %p46 = scmp.eq.s32.totalorder %s9, 3
      %p47 = por %p45, %p46
      %p48 = scmp.ne.s32.totalorder %s40, %s43
      %p49 = scmp.eq.s32.totalorder %s9, 0
      %p50 = por %p48, %p49
      %p51 = scmp.ne.s32.totalorder %s40, %s43
      %p52 = scmp.eq.s32.totalorder %s14, 3
      %p53 = por %p51, %p52
      %p54 = scmp.ne.s32.totalorder %s43, %s44
      %p55 = scmp.eq.s32.totalorder %s14, 0
      %p56 = por %p54, %p55
      %p57 = scmp.ne.s32.totalorder %s43, %s44
      %p58 = scmp.eq.s32.totalorder %s15, 3
      %p59 = por %p57, %p58
      %p61 = scmp.ne.s32.totalorder %s44, %s60
      %p62 = scmp.eq.s32.totalorder %s15, 0
      %p63 = por %p61, %p62
      %s65 = sadd.s32 %s64, 1
      %p68 = scmp.eq.s32.totalorder %s9, 3
      %p69 = scmp.ne.s32.totalorder %s64, %s66
      %p70 = scmp.eq.s32.totalorder %s9, 0
      %p71 = por %p69, %p70
      %p72 = scmp.ne.s32.totalorder %s64, %s66
      %p73 = scmp.eq.s32.totalorder %s14, 3
      %p74 = por %p72, %p73
      %p75 = scmp.ne.s32.totalorder %s66, %s67
      %p76 = scmp.eq.s32.totalorder %s14, 0
      %p77 = por %p75, %p76
      %p78 = scmp.ne.s32.totalorder %s66, %s67
      %p79 = scmp.eq.s32.totalorder %s15, 3
      %p80 = por %p78, %p79
      %p82 = scmp.ne.s32.totalorder %s67, %s81
      %p83 = scmp.eq.s32.totalorder %s15, 0
      %p84 = por %p82, %p83
      %s85 = ssub.s32 %s9, %s16
      %p86 = scmp.eq.s32.totalorder %s85, 0
      %s88 = sadd.s32 %s87, 1
      %s89 = scalar_select %p86, %s87, %s88
      %p92 = pneg %p86
      %p93 = scmp.eq.s32.totalorder %s9, 3
      %p94 = por %p92, %p93
      %p95 = scmp.ne.s32.totalorder %s87, %s90
      %p96 = scmp.eq.s32.totalorder %s9, 0
      %p97 = por %p95, %p96
      %p98 = scmp.ne.s32.totalorder %s87, %s90
      %p99 = scmp.eq.s32.totalorder %s14, 3
      %p100 = por %p98, %p99
      %p101 = scmp.ne.s32.totalorder %s90, %s91
      %p102 = scmp.eq.s32.totalorder %s14, 0
      %p103 = por %p101, %p102
      %p104 = scmp.ne.s32.totalorder %s90, %s91
      %p105 = scmp.eq.s32.totalorder %s15, 3
      %p106 = por %p104, %p105
      %p108 = scmp.ne.s32.totalorder %s91, %s107
      %p109 = scmp.eq.s32.totalorder %s15, 0
      %p110 = por %p108, %p109
      %p111 = scmp.le.s32.totalorder 1, %s9
      %p112 = scmp.lt.s32.totalorder %s9, 5
      %p113 = pnand %p111, %p112
      %p114 = pneg %p113
      // Predicated region
      $region9: #{decoder_forward.11} parent=5 // pred_check
        _
      $region10: #{decoder_forward.11} parent=5 // pred_check_branch
        %116 = sbr.rel (%p113) target = $region12
      $region11: #{decoder_forward.11} parent=5 // pred_region
        %s117 = ssub.s32 %s9, 1
        // Predicated region
        $region13: #{decoder_forward.11} parent=11 // pred_check
          %p118 = pneg %p30
        $region14: #{decoder_forward.11} parent=11 // pred_check_branch
          %120 = sbr.rel (%p118) target = $region16
        $region15: #{decoder_forward.11} parent=11 // pred_region
          _
        $region16: #{decoder_forward.11} parent=11 // pred_fallthru
          _
        // Predicated region
        $region17: #{decoder_forward.11} parent=11 // pred_check
          %p121 = pneg %p77
        $region18: #{decoder_forward.11} parent=11 // pred_check_branch
          %123 = sbr.rel (%p121) target = $region20
        $region19: #{decoder_forward.11} parent=11 // pred_region
          _
        $region20: #{decoder_forward.11} parent=11 // pred_fallthru
          _
      $region12: #{decoder_forward.11} parent=5 // pred_fallthru
        _
      %p124 = scmp.lt.s32.totalorder %s9, 4
      // Predicated region
      $region21: #{decoder_forward.11} parent=5 // pred_check
        %p125 = pneg %p124
      $region22: #{decoder_forward.11} parent=5 // pred_check_branch
        %127 = sbr.rel (%p125) target = $region24
      $region23: #{decoder_forward.11} parent=5 // pred_region
        // Predicated region
        $region25: #{decoder_forward.11} parent=23 // pred_check
          %p128 = pneg %p50
        $region26: #{decoder_forward.11} parent=23 // pred_check_branch
          %130 = sbr.rel (%p128) target = $region28
        $region27: #{decoder_forward.11} parent=23 // pred_region
          %s131 = sand.u32 %s40, 1
          %s132 = sand.u32 %s40, 1
          %s133 = smul.addr %s132, 64
          %s134 = scalar_lea.vmem [#allocation2], %s133
          %s135 = smul.u32 4, %s9
          %s136 = smul.addr %s135, 4
          %s137 = scalar_lea.vmem %s1, %s136
          // Predicated region
          $region29: #{decoder_forward.11} parent=27 // pred_check
            _
          $region30: #{decoder_forward.11} parent=27 // pred_check_branch
            %139 = sbr.rel (0) target = $region32
          $region31: #{decoder_forward.11} parent=27 // pred_region
            // Predicated region
            $region33: #{decoder_forward.11} parent=31 // pred_check
              _
            $region34: #{decoder_forward.11} parent=31 // pred_check_branch
              %141 = sbr.rel (0) target = $region36
            $region35: #{decoder_forward.11} parent=31 // pred_region
              loop: start=0, step=1, limit=1
              $region37: #{decoder_forward.11} parent=35 // loop_pre_header
                _
              $region38: #{decoder_forward.11} parent=35 // loop_header
                %s143 = sphi 0, %s147
                %p144 = scmp.ge.s32.totalorder %s143, 1
                %s148 = sphi %s137, %s137
                %s149 = sphi %s134, %s134
              $region39: #{decoder_forward.11} parent=35 // loop_header_branch
                %146 = sbr.rel (%p144) target = $region43
              $region40: #{decoder_forward.11} parent=35 // loop_body
                %v150 = vld [vmem:[%s148] sm:$0xff]
                %151 = vst [vmem:[%s149] sm:$0xff] %v150
                %v152 = vld [vmem:[%s148 + $0x8] sm:$0xff]
                %153 = vst [vmem:[%s149 + $0x8] sm:$0xff] %v152
                %v154 = vld [vmem:[%s148 + $0x40] sm:$0xff]
                %155 = vst [vmem:[%s149 + $0x10] sm:$0xff] %v154
                %v156 = vld [vmem:[%s148 + $0x48] sm:$0xff]
                %157 = vst [vmem:[%s149 + $0x18] sm:$0xff] %v156
                %v158 = vld [vmem:[%s148 + $0x80] sm:$0xff]
                %159 = vst [vmem:[%s149 + $0x20] sm:$0xff] %v158
                %v160 = vld [vmem:[%s148 + $0x88] sm:$0xff]
                %161 = vst [vmem:[%s149 + $0x28] sm:$0xff] %v160
                %v162 = vld [vmem:[%s148 + $0xc0] sm:$0xff]
                %163 = vst [vmem:[%s149 + $0x30] sm:$0xff] %v162
                %v164 = vld [vmem:[%s148 + $0xc8] sm:$0xff]
                %165 = vst [vmem:[%s149 + $0x38] sm:$0xff] %v164
              $region41: #{decoder_forward.11} parent=35 // loop_footer
                %s147 = sadd.s32 1, %s143
              $region42: #{decoder_forward.11} parent=35 // loop_footer_branch
                %142 = sbr.rel target = $region38
              $region43: #{decoder_forward.11} parent=35 // loop_exit
                _
            $region36: #{decoder_forward.11} parent=31 // pred_fallthru
              _
            // Predicated region
            $region44: #{decoder_forward.11} parent=31 // pred_check
              _
            $region45: #{decoder_forward.11} parent=31 // pred_check_branch
              %167 = sbr.rel target = $region47
            $region46: #{decoder_forward.11} parent=31 // pred_region
              _
            $region47: #{decoder_forward.11} parent=31 // pred_fallthru
              _
          $region32: #{decoder_forward.11} parent=27 // pred_fallthru
            _
          %168 = vnop
        $region28: #{decoder_forward.11} parent=23 // pred_fallthru
          _
      $region24: #{decoder_forward.11} parent=5 // pred_fallthru
        _
      %p169 = scmp.le.s32.totalorder 1, %s9
      %p170 = scmp.lt.s32.totalorder %s9, 5
      %p171 = pnand %p169, %p170
      %p172 = pneg %p171
      // Predicated region
      $region48: #{decoder_forward.11} parent=5 // pred_check
        _
      $region49: #{decoder_forward.11} parent=5 // pred_check_branch
        %174 = sbr.rel (%p171) target = $region51
      $region50: #{decoder_forward.11} parent=5 // pred_region
        %s175 = ssub.s32 %s9, 1
        %s176 = sand.u32 %s43, 1
        %s177 = sand.u32 %s43, 1
        %s178 = smul.addr %s177, 64
        %s179 = scalar_lea.vmem [#allocation2], %s178
        // Predicated region
        $region52: #{decoder_forward.11} parent=50 // pred_check
          %p180 = pneg %p56
        $region53: #{decoder_forward.11} parent=50 // pred_check_branch
          %182 = sbr.rel (%p180) target = $region55
        $region54: #{decoder_forward.11} parent=50 // pred_region
          _
        $region55: #{decoder_forward.11} parent=50 // pred_fallthru
          _
        %p183 = pneg %p30
        %p184 = pneg %p27
        %s185 = sand.u32 %s43, 1
        %s186 = sand.u32 %s43, 1
        %s187 = smul.addr %s186, 64
        %s188 = scalar_lea.vmem [#allocation2], %s187
        %p189 = pneg %p56
        %p190 = pneg %p53
        %p191 = pneg %p77
        %p192 = pneg %p74
        %p193 = pneg %p103
        %p194 = pneg %p100
        %s195 = sand.u32 %s90, 1
        %s196 = sand.u32 %s90, 1
        %s197 = smul.addr %s196, 64
        %s198 = scalar_lea.vmem [#allocation3], %s197
        %s199 = smul.u32 4, %s14
        %s200 = smul.u32 4, %s14
        %v202 = vld [vmem:[%s0] sm:$0xf]
        %v203 = vld [vmem:[%s0 + $0x4] sm:$0x3]
        %v204 = vld [vmem:[%s179] sm:$0xff]
        %v205 = vld [vmem:[%s179 + $0x8] sm:$0xff]
        %v206 = vld [vmem:[%s179 + $0x10] sm:$0xff]
        %v207 = vld [vmem:[%s179 + $0x18] sm:$0xff]
        %v208 = vld [vmem:[%s179 + $0x20] sm:$0xff]
        %v209 = vld [vmem:[%s179 + $0x28] sm:$0xff]
        %v210 = vld [vmem:[%s179 + $0x30] sm:$0xff]
        %v211 = vld [vmem:[%s179 + $0x38] sm:$0xff]
        %v212 = vld [vmem:[%s2] sm:$0xff]
        %v213 = vld [vmem:[%s2 + $0x8] sm:$0xf]
        %215 = vset.pattern.permute.xlu0 0
        %216 = vperm.xlu0 %215, %v212
        %v217 = vpop.permute.xlu0 %216
        %220 = vset.pattern.permute.xlu0 0
        %221 = vperm.xlu0 %220, %v213
        %v222 = vpop.permute.xlu0 %221
        %v226 = vunpack.c.l.b16 %v202
        %v227 = vunpack.c.l.b16 %v203
        %v228 = vpack.c.b16 %v227, %v226
        %v237 = vunpack.c.l.b16 %v204
        %v238 = vunpack.c.h.b16 %v204
        %v239 = vunpack.c.l.b16 %v205
        %v240 = vunpack.c.h.b16 %v205
        %v241 = vunpack.c.l.b16 %v206
        %v242 = vunpack.c.h.b16 %v206
        %v243 = vunpack.c.l.b16 %v207
        %v244 = vunpack.c.h.b16 %v207
        %v245 = vunpack.c.l.b16 %v208
        %v246 = vunpack.c.h.b16 %v208
        %v247 = vunpack.c.l.b16 %v209
        %v248 = vunpack.c.h.b16 %v209
        %v249 = vunpack.c.l.b16 %v210
        %v250 = vunpack.c.h.b16 %v210
        %v251 = vunpack.c.l.b16 %v211
        %v252 = vunpack.c.h.b16 %v211
        %v253 = vpack.c.b16 %v241, %v237
        %v254 = vpack.c.b16 %v242, %v238
        %v255 = vpack.c.b16 %v243, %v239
        %v256 = vpack.c.b16 %v244, %v240
        %v257 = vpack.c.b16 %v249, %v245
        %v258 = vpack.c.b16 %v250, %v246
        %v259 = vpack.c.b16 %v251, %v247
        %v260 = vpack.c.b16 %v252, %v248
        %vm269 = vcmask 261120
        %v271 = vsel %vm269, %v228, 0
        %273 = vmatprep.subr.bf16.mxu0 0
        %274 = vmatpush1.bf16.msra.mxu0 0
        %275 = vmatprep.subr.bf16.mxu0 0
        %276 = vmatpush1.bf16.msra.mxu0 0
        %277 = vmatprep.subr.bf16.mxu0 0
        %278 = vmatpush1.bf16.msra.mxu0 0
        %279 = vmatprep.subr.bf16.mxu0 0
        %280 = vmatpush1.bf16.msra.mxu0 0
        %281 = vmatprep.subr.bf16.mxu0 0
        %282 = vmatpush1.bf16.msra.mxu0 0
        %283 = vmatprep.subr.bf16.mxu0 0
        %284 = vmatpush1.bf16.msra.mxu0 0
        %285 = vmatprep.subr.bf16.mxu0 %v258
        %286 = vmatpush1.bf16.msra.mxu0 %v257
        %287 = vmatprep.subr.bf16.mxu0 %v254
        %288 = vmatpush1.bf16.msra.mxu0 %v253
        %289 = vmatprep.subr.bf16.mxu0 0
        %290 = vmatpush2.bf16.msra.mxu0 0
        %291 = vmatprep.subr.bf16.mxu0 0
        %292 = vmatpush2.bf16.msra.mxu0 0
        %293 = vmatprep.subr.bf16.mxu0 0
        %294 = vmatpush2.bf16.msra.mxu0 0
        %295 = vmatprep.subr.bf16.mxu0 0
        %296 = vmatpush2.bf16.msra.mxu0 0
        %297 = vmatprep.subr.bf16.mxu0 0
        %298 = vmatpush2.bf16.msra.mxu0 0
        %299 = vmatprep.subr.bf16.mxu0 0
        %300 = vmatpush2.bf16.msra.mxu0 0
        %301 = vmatprep.subr.bf16.mxu0 0
        %302 = vmatpush2.bf16.msra.mxu0 0
        %303 = vmatprep.subr.bf16.mxu0 0
        %304 = vmatpush2.bf16.msra.mxu0 0
        %305 = vmatprep.mubr.bf16.mxu0 0
        %306 = vmatmul.mubr.bf16.gmra.mxu0 %v271
        %v307 = vpop.f32.mrf.mxu0
        %v308 = vadd.f32 %v217, %v307
        %v309 = vpop.f32.mrf.mxu0
        %v310 = vadd.f32 %v217, %v309
        %v311 = vpop.f32.mrf.mxu0
        %v312 = vadd.f32 %v222, %v311
        %v313 = vpop.f32.mrf.mxu0
        %v314 = vadd.f32 %v222, %v313
        %315 = vdwg.mxu0
        %316 = vmatprep.subr.bf16.mxu0 0
        %317 = vmatpush1.bf16.msra.mxu0 0
        %318 = vmatprep.subr.bf16.mxu0 0
        %319 = vmatpush1.bf16.msra.mxu0 0
        %320 = vmatprep.subr.bf16.mxu0 0
        %321 = vmatpush1.bf16.msra.mxu0 0
        %322 = vmatprep.subr.bf16.mxu0 0
        %323 = vmatpush1.bf16.msra.mxu0 0
        %324 = vmatprep.subr.bf16.mxu0 0
        %325 = vmatpush1.bf16.msra.mxu0 0
        %326 = vmatprep.subr.bf16.mxu0 0
        %327 = vmatpush1.bf16.msra.mxu0 0
        %328 = vmatprep.subr.bf16.mxu0 %v260
        %329 = vmatpush1.bf16.msra.mxu0 %v259
        %330 = vmatprep.subr.bf16.mxu0 %v256
        %331 = vmatpush1.bf16.msra.mxu0 %v255
        %332 = vmatprep.subr.bf16.mxu0 0
        %333 = vmatpush2.bf16.msra.mxu0 0
        %334 = vmatprep.subr.bf16.mxu0 0
        %335 = vmatpush2.bf16.msra.mxu0 0
        %336 = vmatprep.subr.bf16.mxu0 0
        %337 = vmatpush2.bf16.msra.mxu0 0
        %338 = vmatprep.subr.bf16.mxu0 0
        %339 = vmatpush2.bf16.msra.mxu0 0
        %340 = vmatprep.subr.bf16.mxu0 0
        %341 = vmatpush2.bf16.msra.mxu0 0
        %342 = vmatprep.subr.bf16.mxu0 0
        %343 = vmatpush2.bf16.msra.mxu0 0
        %344 = vmatprep.subr.bf16.mxu0 0
        %345 = vmatpush2.bf16.msra.mxu0 0
        %346 = vmatprep.subr.bf16.mxu0 0
        %347 = vmatpush2.bf16.msra.mxu0 0
        %348 = vmatprep.mubr.bf16.mxu0 0
        %349 = vmatmul.mubr.bf16.gmra.mxu0 %v271
        %v350 = vpop.f32.mrf.mxu0
        %v351 = vadd.f32 %v217, %v350
        %v352 = vpop.f32.mrf.mxu0
        %v353 = vadd.f32 %v217, %v352
        %v354 = vpop.f32.mrf.mxu0
        %v355 = vadd.f32 %v222, %v354
        %v356 = vpop.f32.mrf.mxu0
        %v357 = vadd.f32 %v222, %v356
        %358 = vdwg.mxu0
        %359 = vst [vmem:[%s198] sm:$0xff] %v308
        %360 = vst [vmem:[%s198 + $0x8] sm:$0xff] %v310
        %361 = vst [vmem:[%s198 + $0x10] sm:$0xff] %v351
        %362 = vst [vmem:[%s198 + $0x18] sm:$0xff] %v353
        %363 = vst [vmem:[%s198 + $0x20] sm:$0xf] %v312
        %364 = vst [vmem:[%s198 + $0x28] sm:$0xf] %v314
        %365 = vst [vmem:[%s198 + $0x30] sm:$0xf] %v355
        %366 = vst [vmem:[%s198 + $0x38] sm:$0xf] %v357
        %s367 = sand.u32 %s90, 1
        %s368 = sand.u32 %s90, 1
        %s369 = smul.addr %s368, 64
        %s370 = scalar_lea.vmem [#allocation3], %s369
        // Predicated region
        $region56: #{decoder_forward.11} parent=50 // pred_check
          %p371 = pneg %p100
        $region57: #{decoder_forward.11} parent=50 // pred_check_branch
          %373 = sbr.rel (%p371) target = $region59
        $region58: #{decoder_forward.11} parent=50 // pred_region
          %s374 = smul.u32 4, %s14
          %s375 = smul.addr %s374, 8
          %s376 = scalar_lea.vmem %s3, %s375
          // Predicated region
          $region60: #{decoder_forward.11} parent=58 // pred_check
            _
          $region61: #{decoder_forward.11} parent=58 // pred_check_branch
            %378 = sbr.rel (0) target = $region63
          $region62: #{decoder_forward.11} parent=58 // pred_region
            // Predicated region
            $region64: #{decoder_forward.11} parent=62 // pred_check
              _
            $region65: #{decoder_forward.11} parent=62 // pred_check_branch
              %380 = sbr.rel (0) target = $region67
            $region66: #{decoder_forward.11} parent=62 // pred_region
              loop: start=0, step=1, limit=1
              $region68: #{decoder_forward.11} parent=66 // loop_pre_header
                _
              $region69: #{decoder_forward.11} parent=66 // loop_header
                %s382 = sphi 0, %s386
                %p383 = scmp.ge.s32.totalorder %s382, 1
                %s387 = sphi %s370, %s370
                %s388 = sphi %s376, %s376
              $region70: #{decoder_forward.11} parent=66 // loop_header_branch
                %385 = sbr.rel (%p383) target = $region74
              $region71: #{decoder_forward.11} parent=66 // loop_body
                %v389 = vld [vmem:[%s387] sm:$0xff]
                %390 = vst [vmem:[%s388] sm:$0xff] %v389
                %v391 = vld [vmem:[%s387 + $0x8] sm:$0xff]
                %392 = vst [vmem:[%s388 + $0x8] sm:$0xff] %v391
                %v393 = vld [vmem:[%s387 + $0x10] sm:$0xff]
                %394 = vst [vmem:[%s388 + $0x10] sm:$0xff] %v393
                %v395 = vld [vmem:[%s387 + $0x18] sm:$0xff]
                %396 = vst [vmem:[%s388 + $0x18] sm:$0xff] %v395
                %v397 = vld [vmem:[%s387 + $0x20] sm:$0xff]
                %398 = vst [vmem:[%s388 + $0x80] sm:$0xff] %v397
                %v399 = vld [vmem:[%s387 + $0x28] sm:$0xff]
                %400 = vst [vmem:[%s388 + $0x88] sm:$0xff] %v399
                %v401 = vld [vmem:[%s387 + $0x30] sm:$0xff]
                %402 = vst [vmem:[%s388 + $0x90] sm:$0xff] %v401
                %v403 = vld [vmem:[%s387 + $0x38] sm:$0xff]
                %404 = vst [vmem:[%s388 + $0x98] sm:$0xff] %v403
              $region72: #{decoder_forward.11} parent=66 // loop_footer
                %s386 = sadd.s32 1, %s382
              $region73: #{decoder_forward.11} parent=66 // loop_footer_branch
                %381 = sbr.rel target = $region69
              $region74: #{decoder_forward.11} parent=66 // loop_exit
                _
            $region67: #{decoder_forward.11} parent=62 // pred_fallthru
              _
            // Predicated region
            $region75: #{decoder_forward.11} parent=62 // pred_check
              _
            $region76: #{decoder_forward.11} parent=62 // pred_check_branch
              %406 = sbr.rel target = $region78
            $region77: #{decoder_forward.11} parent=62 // pred_region
              _
            $region78: #{decoder_forward.11} parent=62 // pred_fallthru
              _
          $region63: #{decoder_forward.11} parent=58 // pred_fallthru
            _
          %407 = vnop
        $region59: #{decoder_forward.11} parent=50 // pred_fallthru
          _
      $region51: #{decoder_forward.11} parent=5 // pred_fallthru
        _
      %p408 = scmp.le.s32.totalorder 2, %s9
      // Predicated region
      $region79: #{decoder_forward.11} parent=5 // pred_check
        %p409 = pneg %p408
      $region80: #{decoder_forward.11} parent=5 // pred_check_branch
        %411 = sbr.rel (%p409) target = $region82
      $region81: #{decoder_forward.11} parent=5 // pred_region
        %s412 = ssub.s32 %s9, 2
        // Predicated region
        $region83: #{decoder_forward.11} parent=81 // pred_check
          %p413 = pneg %p106
        $region84: #{decoder_forward.11} parent=81 // pred_check_branch
          %415 = sbr.rel (%p413) target = $region86
        $region85: #{decoder_forward.11} parent=81 // pred_region
          %s416 = sand.u32 %s91, 1
          %s417 = sand.u32 %s91, 1
          %s418 = smul.addr %s417, 64
          %s419 = scalar_lea.vmem [#allocation3], %s418
        $region86: #{decoder_forward.11} parent=81 // pred_fallthru
          _
      $region82: #{decoder_forward.11} parent=5 // pred_fallthru
        _
    $region6: #{decoder_forward.11} parent=1 // loop_footer
      %s13 = sadd.s32 1, %s9
    $region7: #{decoder_forward.11} parent=1 // loop_footer_branch
      %8 = sbr.rel target = $region3
    $region8: #{decoder_forward.11} parent=1 // loop_exit
      _

</llo_original>
